<compile_context>
chip_gen: v6e
topology: v6e:2x2x1
jax: 0.10.0
libtpu: 0.0.40
codegen_flags: <defaults>
</compile_context>

<pallas_src>
import functools

import jax
import jax.numpy as jnp
from jax import lax
from jax.experimental import pallas as pl
from jax.experimental.pallas import tpu as pltpu


def _layer_norm(v, eps=1e-5):
    """Plain LayerNorm over the last dim (affine params folded host-side)."""
    mu = jnp.mean(v, axis=-1, keepdims=True)
    c = v - mu
    var = jnp.mean(c * c, axis=-1, keepdims=True)
    return c * lax.rsqrt(var + eps)


def _gelu_exact(v):
    # torch.nn.GELU() default (erf-based, exact), computed in f32.
    return 0.5 * v * (1.0 + lax.erf(v * 0.7071067811865476))


def gencoder_stack_kernel(hl_ref, x_ref, vecs_ref, b1_ref,
                          wqkv_ref, wo_ref, w1_ref, w2_ref,
                          out_ref, hl_acc,
                          *, num_heads, dim_head, batch_block):
    l = pl.program_id(1)
    H, dh, bb = num_heads, dim_head, batch_block
    T = hl_ref.shape[1]
    D = hl_ref.shape[2]
    R = bb * T
    bf16 = jnp.bfloat16
    f32 = jnp.float32

    # First layer of each batch block: load the residual stream into VMEM scratch.
    @pl.when(l == 0)
    def _():
        hl_acc[...] = hl_ref[...].reshape(R, D)

    hl = hl_acc[...]                       # (R, D) f32, resident across layers
    x2 = x_ref[...].reshape(R, D)          # (R, D) f32

    vecs = vecs_ref[0]                     # (6, D) f32 packed per-layer vectors
    sc1, sh1 = vecs[0:1], vecs[1:2]        # SLN1 folded scale / shift
    sc2, sh2 = vecs[2:3], vecs[3:4]        # SLN2 folded scale / shift
    bo, b2 = vecs[4:5], vecs[5:6]          # attention out bias, MLP out bias
    b1 = b1_ref[0]                         # (1, hid) f32

    # --- SLN #1:  gamma*x*LN(hl) + beta*x  ==  x*(LN(hl)*sc1 + sh1) -----------
    y1 = x2 * (_layer_norm(hl) * sc1 + sh1)
    y1b = y1.astype(bf16)

    # --- Dense QKV projection (kind on a leading axis, full-N GEMMs) ----------
    wqkv = wqkv_ref[0]                     # (3, D, H*dh) bf16, scale folded in Q
    q2 = jnp.dot(y1b, wqkv[0], preferred_element_type=f32)   # (R, H*dh)
    k2 = jnp.dot(y1b, wqkv[1], preferred_element_type=f32)
    v2 = jnp.dot(y1b, wqkv[2], preferred_element_type=f32)
    q2 = q2.astype(bf16)
    k2 = k2.astype(bf16)
    v2 = v2.astype(bf16)

    # --- Per-head attention core (static unroll over H; batched over bb) ------
    head_out = []
    for h in range(H):
        cols = slice(h * dh, (h + 1) * dh)
        qh = q2[:, cols].reshape(bb, T, dh)
        kh = k2[:, cols].reshape(bb, T, dh)
        vh = v2[:, cols].reshape(bb, T, dh)
        s = lax.dot_general(qh, kh, (((2,), (2,)), ((0,), (0,))),
                            preferred_element_type=f32)      # (bb, T, T) f32
        m = jnp.max(s, axis=-1, keepdims=True)
        e = jnp.exp(s - m)
        p = e / jnp.sum(e, axis=-1, keepdims=True)            # exact softmax
        oh = lax.dot_general(p.astype(bf16), vh, (((2,), (1,)), ((0,), (0,))),
                             preferred_element_type=f32)      # (bb, T, dh)
        head_out.append(oh.reshape(R, dh))
    o_cat = jnp.concatenate(head_out, axis=-1).astype(bf16)   # (R, H*dh)

    # --- Fused output projection + head merge (reduction inside the MXU) ------
    attn = jnp.dot(o_cat, wo_ref[0], preferred_element_type=f32) + bo  # (R, D)
    hl_t = attn + hl                                           # residual #1

    # --- SLN #2 + MLP ----------------------------------------------------------
    y2 = x2 * (_layer_norm(hl_t) * sc2 + sh2)
    pre = jnp.dot(y2.astype(bf16), w1_ref[0], preferred_element_type=f32) + b1
    h1 = _gelu_exact(pre)                                      # f32
    mlp = jnp.dot(h1.astype(bf16), w2_ref[0], preferred_element_type=f32) + b2

    hl_new = mlp + hl_t                                        # residual #2
    hl_acc[...] = hl_new

    @pl.when(l == pl.num_programs(1) - 1)
    def _():
        out_ref[...] = hl_new.reshape(bb, T, D).astype(out_ref.dtype)


def gtransformer_encoder(hl, x, params, *, batch_block=None):
    """GTransformerEncoder.forward: all blocks fused into a single pallas_call.

    Returns (x, hl_final) like the PyTorch module (x passes through unchanged).
    """
    B, T, D = hl.shape
    L = params["wqkv"].shape[0]
    HD = params["wqkv"].shape[-1]
    H = params["num_heads"]
    dh = HD // H
    hid = params["w1_t"].shape[-1]

    # Pick the largest batch block whose rows (bb*T) stay MXU-friendly.
    if batch_block is None:
        bb = 1
        for cand in range(1, B + 1):
            if B % cand == 0 and cand * T <= 256:
                bb = cand
    else:
        bb = batch_block
    assert B % bb == 0, "batch block must divide the batch size"

    kernel = functools.partial(gencoder_stack_kernel, num_heads=H,
                               dim_head=dh, batch_block=bb)

    seq_spec = pl.BlockSpec((bb, T, D), lambda b, l: (b, 0, 0))

    def layer_spec(*shape):
        n = len(shape)
        return pl.BlockSpec((1,) + shape, lambda b, l, n=n: (l,) + (0,) * n)

    # Explicit VMEM budget: double-buffered bf16 weights + activation blocks +
    # the resident accumulator (defaults are only 16/32 MiB).
    wbytes = 2 * 2 * (3 * D * HD + HD * D + D * hid + hid * D)
    abytes = 2 * (2 * bb * T * D * 4) + 2 * (6 * D + hid) * 4 + bb * T * D * 4
    vmem_limit = int(min(max(2 * (wbytes + abytes), 32 * 1024 * 1024),
                         100 * 1024 * 1024))

    hl_new = pl.pallas_call(
        kernel,
        out_shape=jax.ShapeDtypeStruct((B, T, D), hl.dtype),
        grid=(B // bb, L),
        in_specs=[
            seq_spec, seq_spec,                      # hl, x
            layer_spec(6, D),                        # packed per-layer vectors
            layer_spec(1, hid),                      # MLP hidden bias
            layer_spec(3, D, HD),                    # fused QKV weight (bf16)
            layer_spec(HD, D),                       # fused out-proj weight (bf16)
            layer_spec(D, hid),                      # MLP W1^T (bf16)
            layer_spec(hid, D),                      # MLP W2^T (bf16)
        ],
        out_specs=seq_spec,
        scratch_shapes=[pltpu.VMEM((bb * T, D), jnp.float32)],  # resident hl
        compiler_params=pltpu.CompilerParams(
            dimension_semantics=("parallel", "arbitrary"),
            vmem_limit_bytes=vmem_limit),
    )(hl, x, params["vecs"], params["b1"], params["wqkv"], params["wo"],
      params["w1_t"], params["w2_t"])
    return x, hl_new


def init_params(key, dim, num_heads, n_blocks, mlp_ratio=4):
    """Deterministic synthetic parameters (stacked over layers, leading L axis).

    Reproduces the PyTorch layouts, then rearranges:
      * to_qkv.weight (3*H*dh, D), einops 'b t (d k h) -> k b h t d'  ->
        wqkv (3, D, H*dh) with columns ordered h*dh + d; softmax scale folded
        into the Q slab.
      * w_out.weight (D, H*dh)  ->  wo (H*dh, D)  (rows ordered h*dh + d).
      * SLN scalars + LN affine folded into scale/shift vectors.
    Matmul weights are stored in bf16 (MXU operands); vectors stay f32.
    """
    assert dim % num_heads == 0
    dh = dim // num_heads
    HD = num_heads * dh
    hid = dim * mlp_ratio
    scale = dim ** (-0.5)     # Attention.scale_factor = dim ** -0.5

    def one_layer(k):
        ks = jax.random.split(k, 9)

        def nrm(kk, shape, s=0.05):
            return s * jax.random.normal(kk, shape, jnp.float32)

        w_qkv = nrm(ks[0], (3 * HD, dim))     # nn.Linear(dim, 3*HD, bias=False)
        w_out = nrm(ks[1], (dim, HD))         # nn.Linear(HD, dim).weight
        b_out = nrm(ks[2], (dim,))
        w1 = nrm(ks[3], (hid, dim))
        b1 = nrm(ks[4], (hid,))
        w2 = nrm(ks[5], (dim, hid))
        b2 = nrm(ks[6], (dim,))
        g1, be1 = jax.random.normal(ks[7], (2,), jnp.float32)   # SLN1 gamma/beta
        g2, be2 = jax.random.normal(ks[8], (2,), jnp.float32)   # SLN2 gamma/beta
        ln1w = jnp.ones((dim,), jnp.float32)
        ln1b = jnp.zeros((dim,), jnp.float32)
        ln2w = jnp.ones((dim,), jnp.float32)
        ln2b = jnp.zeros((dim,), jnp.float32)

        # qkv feature index f = d*(3*H) + kind*H + h   (einops 'b t (d k h) -> ...')
        w_r = w_qkv.reshape(dh, 3, num_heads, dim)                 # (d, kind, h, in)
        wqkv = jnp.transpose(w_r, (1, 3, 2, 0)).reshape(3, dim, HD)  # col = h*dh + d
        wqkv = wqkv.at[0].multiply(scale)                          # fold scale into Q
        wo = w_out.T                                               # (HD, dim)

        # Fold SLN(hl, x) = x*(LN_plain(hl)*(gamma*w) + (gamma*b + beta)).
        sc1 = g1 * ln1w
        sh1 = g1 * ln1b + be1
        sc2 = g2 * ln2w
        sh2 = g2 * ln2b + be2
        vecs = jnp.stack([sc1, sh1, sc2, sh2, b_out, b2], axis=0)  # (6, dim)

        return dict(
            vecs=vecs.astype(jnp.float32),
            b1=b1.reshape(1, hid).astype(jnp.float32),
            wqkv=wqkv.astype(jnp.bfloat16),
            wo=wo.astype(jnp.bfloat16),
            w1_t=w1.T.astype(jnp.bfloat16),
            w2_t=w2.T.astype(jnp.bfloat16),
        )

    layers = [one_layer(k) for k in jax.random.split(key, n_blocks)]
    stacked = {name: jnp.stack([ly[name] for ly in layers], axis=0)
               for name in layers[0]}
    stacked["num_heads"] = num_heads
    return stacked


def reference_forward(hl, x, params):
    """Pure-JAX reference of the fused module (f32 math, bf16-rounded weights)."""
    H = params["num_heads"]
    L = params["wqkv"].shape[0]
    HD = params["wqkv"].shape[-1]
    dh = HD // H
    B, T, D = hl.shape
    f32 = jnp.float32
    for l in range(L):
        vecs = params["vecs"][l]
        sc1, sh1, sc2, sh2, bo, b2 = (vecs[i] for i in range(6))
        wqkv = params["wqkv"][l].astype(f32)
        wo = params["wo"][l].astype(f32)
        w1 = params["w1_t"][l].astype(f32)
        w2 = params["w2_t"][l].astype(f32)
        b1 = params["b1"][l][0]

        y1 = x * (_layer_norm(hl) * sc1 + sh1)
        q = (y1 @ wqkv[0]).reshape(B, T, H, dh)
        k = (y1 @ wqkv[1]).reshape(B, T, H, dh)
        v = (y1 @ wqkv[2]).reshape(B, T, H, dh)
        s = jnp.einsum("bihd,bjhd->bhij", q, k)
        p = jax.nn.softmax(s, axis=-1)
        o = jnp.einsum("bhij,bjhd->bihd", p, v).reshape(B, T, HD)
        hl = (o @ wo + bo) + hl
        y2 = x * (_layer_norm(hl) * sc2 + sh2)
        h1 = _gelu_exact(y2 @ w1 + b1)
        hl = (h1 @ w2 + b2) + hl
    return x, hl


if __name__ == "__main__":
    # Small shapes consistent with the module (dim divisible by num_heads=8).
    B, T, dim = 2, 8, 32
    num_heads, n_blocks = 8, 2

    key = jax.random.PRNGKey(0)
    k_hl, k_x, k_p = jax.random.split(key, 3)
    hl = jax.random.normal(k_hl, (B, T, dim), jnp.float32)
    x = jax.random.normal(k_x, (B, T, dim), jnp.float32)

    params = init_params(k_p, dim, num_heads, n_blocks)

    out_x, out_hl = gtransformer_encoder(hl, x, params)
    jax.block_until_ready((out_x, out_hl))

    ref_x, ref_hl = reference_forward(hl, x, params)
    err = float(jnp.max(jnp.abs(out_hl - ref_hl)))

    assert out_x.shape == (B, T, dim) and out_hl.shape == (B, T, dim)
    assert err < 5e-2, f"kernel/reference mismatch: max abs err {err}"
    print("KERNEL_OK")
</pallas_src>

<mosaic_0001>
module attributes {stable_mosaic.version = 11 : i64} {
  func.func @gencoder_stack_kernel(%arg0: i32, %arg1: i32, %arg2: memref<2x8x32xf32, #tpu.memory_space<vmem>>, %arg3: memref<2x8x32xf32, #tpu.memory_space<vmem>>, %arg4: memref<1x6x32xf32, #tpu.memory_space<vmem>>, %arg5: memref<1x1x128xf32, #tpu.memory_space<vmem>>, %arg6: memref<1x3x32x32xbf16, #tpu.memory_space<vmem>>, %arg7: memref<1x32x32xbf16, #tpu.memory_space<vmem>>, %arg8: memref<1x32x128xbf16, #tpu.memory_space<vmem>>, %arg9: memref<1x128x32xbf16, #tpu.memory_space<vmem>>, %arg10: memref<2x8x32xf32, #tpu.memory_space<vmem>>, %arg11: memref<16x32xf32, #tpu.memory_space<vmem>>) attributes {dimension_semantics = [#tpu.dimension_semantics<parallel>, #tpu.dimension_semantics<arbitrary>], iteration_bounds = array<i64: 1, 2>, scalar_prefetch = 0 : i64, scratch_operands = 1 : i64, tpu.core_type = #tpu.core_type<tc>, window_params = [{transform_indices = @transform_0, window_bounds = array<i64: 2, 8, 32>}, {transform_indices = @transform_1, window_bounds = array<i64: 2, 8, 32>}, {transform_indices = @transform_2, window_bounds = array<i64: 1, 6, 32>}, {transform_indices = @transform_3, window_bounds = array<i64: 1, 1, 128>}, {transform_indices = @transform_4, window_bounds = array<i64: 1, 3, 32, 32>}, {transform_indices = @transform_5, window_bounds = array<i64: 1, 32, 32>}, {transform_indices = @transform_6, window_bounds = array<i64: 1, 32, 128>}, {transform_indices = @transform_7, window_bounds = array<i64: 1, 128, 32>}, {transform_indices = @transform_8, window_bounds = array<i64: 2, 8, 32>}]} {
    %c0_i32 = arith.constant 0 : i32
    %0 = arith.cmpi eq, %arg1, %c0_i32 : i32
    %1 = arith.extui %0 : i1 to i32
    %c0_i32_0 = arith.constant 0 : i32
    %2 = arith.cmpi ne, %1, %c0_i32_0 : i32
    scf.if %2 {
      %c0_77 = arith.constant 0 : index
      %c0_78 = arith.constant 0 : index
      %c0_79 = arith.constant 0 : index
      %258 = vector.load %arg2[%c0_77, %c0_78, %c0_79] : memref<2x8x32xf32, #tpu.memory_space<vmem>>, vector<2x8x32xf32>
      %259 = vector.shape_cast %258 : vector<2x8x32xf32> to vector<16x32xf32>
      %c0_80 = arith.constant 0 : index
      %c0_81 = arith.constant 0 : index
      %260 = vector.load %arg11[%c0_80, %c0_81] : memref<16x32xf32, #tpu.memory_space<vmem>>, vector<16x32xf32>
      tpu.vector_store %arg11[%c0_80, %c0_81], %259 {strides = array<i32>} : memref<16x32xf32, #tpu.memory_space<vmem>>, vector<16x32xf32>,
    } else {
    }
    %c0 = arith.constant 0 : index
    %c0_1 = arith.constant 0 : index
    %3 = vector.load %arg11[%c0, %c0_1] : memref<16x32xf32, #tpu.memory_space<vmem>>, vector<16x32xf32>
    %c0_2 = arith.constant 0 : index
    %c0_3 = arith.constant 0 : index
    %c0_4 = arith.constant 0 : index
    %4 = vector.load %arg3[%c0_2, %c0_3, %c0_4] : memref<2x8x32xf32, #tpu.memory_space<vmem>>, vector<2x8x32xf32>
    %5 = vector.shape_cast %4 : vector<2x8x32xf32> to vector<16x32xf32>
    %c0_5 = arith.constant 0 : index
    %c0_6 = arith.constant 0 : index
    %c0_7 = arith.constant 0 : index
    %6 = vector.load %arg4[%c0_5, %c0_6, %c0_7] : memref<1x6x32xf32, #tpu.memory_space<vmem>>, vector<1x6x32xf32>
    %7 = vector.shape_cast %6 : vector<1x6x32xf32> to vector<6x32xf32>
    %8 = vector.extract_strided_slice %7 {offsets = [0, 0], sizes = [1, 32], strides = [1, 1]} : vector<6x32xf32> to vector<1x32xf32>
    %9 = vector.extract_strided_slice %7 {offsets = [1, 0], sizes = [1, 32], strides = [1, 1]} : vector<6x32xf32> to vector<1x32xf32>
    %10 = vector.extract_strided_slice %7 {offsets = [2, 0], sizes = [1, 32], strides = [1, 1]} : vector<6x32xf32> to vector<1x32xf32>
    %11 = vector.extract_strided_slice %7 {offsets = [3, 0], sizes = [1, 32], strides = [1, 1]} : vector<6x32xf32> to vector<1x32xf32>
    %12 = vector.extract_strided_slice %7 {offsets = [4, 0], sizes = [1, 32], strides = [1, 1]} : vector<6x32xf32> to vector<1x32xf32>
    %13 = vector.extract_strided_slice %7 {offsets = [5, 0], sizes = [1, 32], strides = [1, 1]} : vector<6x32xf32> to vector<1x32xf32>
    %c0_8 = arith.constant 0 : index
    %c0_9 = arith.constant 0 : index
    %c0_10 = arith.constant 0 : index
    %14 = vector.load %arg5[%c0_8, %c0_9, %c0_10] : memref<1x1x128xf32, #tpu.memory_space<vmem>>, vector<1x1x128xf32>
    %15 = vector.shape_cast %14 : vector<1x1x128xf32> to vector<1x128xf32>
    %cst = arith.constant dense<0.000000e+00> : vector<16xf32>
    %16 = vector.multi_reduction <add>, %3, %cst [1] : vector<16x32xf32> to vector<16xf32>
    %17 = vector.shape_cast %16 : vector<16xf32> to vector<16x1xf32>
    %cst_11 = arith.constant 3.200000e+01 : f32
    %18 = vector.broadcast %cst_11 : f32 to vector<16x1xf32>
    %19 = arith.divf %17, %18 : vector<16x1xf32>
    %20 = vector.broadcast %19 : vector<16x1xf32> to vector<16x32xf32>
    %21 = arith.subf %3, %20 : vector<16x32xf32>
    %22 = arith.mulf %21, %21 : vector<16x32xf32>
    %cst_12 = arith.constant dense<0.000000e+00> : vector<16xf32>
    %23 = vector.multi_reduction <add>, %22, %cst_12 [1] : vector<16x32xf32> to vector<16xf32>
    %24 = vector.shape_cast %23 : vector<16xf32> to vector<16x1xf32>
    %cst_13 = arith.constant 3.200000e+01 : f32
    %25 = vector.broadcast %cst_13 : f32 to vector<16x1xf32>
    %26 = arith.divf %24, %25 : vector<16x1xf32>
    %cst_14 = arith.constant 9.99999974E-6 : f32
    %27 = vector.broadcast %cst_14 : f32 to vector<16x1xf32>
    %28 = arith.addf %26, %27 : vector<16x1xf32>
    %29 = math.rsqrt %28 : vector<16x1xf32>
    %30 = vector.broadcast %29 : vector<16x1xf32> to vector<16x32xf32>
    %31 = arith.mulf %21, %30 : vector<16x32xf32>
    %32 = vector.broadcast %8 : vector<1x32xf32> to vector<16x32xf32>
    %33 = arith.mulf %31, %32 : vector<16x32xf32>
    %34 = vector.broadcast %9 : vector<1x32xf32> to vector<16x32xf32>
    %35 = arith.addf %33, %34 : vector<16x32xf32>
    %36 = arith.mulf %5, %35 : vector<16x32xf32>
    %37 = arith.truncf %36 : vector<16x32xf32> to vector<16x32xbf16>
    %c0_15 = arith.constant 0 : index
    %c0_16 = arith.constant 0 : index
    %c0_17 = arith.constant 0 : index
    %c0_18 = arith.constant 0 : index
    %38 = vector.load %arg6[%c0_15, %c0_16, %c0_17, %c0_18] : memref<1x3x32x32xbf16, #tpu.memory_space<vmem>>, vector<1x3x32x32xbf16>
    %39 = vector.shape_cast %38 : vector<1x3x32x32xbf16> to vector<3x32x32xbf16>
    %40 = vector.extract_strided_slice %39 {offsets = [0, 0, 0], sizes = [1, 32, 32], strides = [1, 1, 1]} : vector<3x32x32xbf16> to vector<1x32x32xbf16>
    %41 = vector.shape_cast %40 : vector<1x32x32xbf16> to vector<32x32xbf16>
    %cst_19 = arith.constant dense<0.000000e+00> : vector<16x32xf32>
    %42 = tpu.matmul %37, %41, %cst_19 {dimension_numbers = #tpu.dot_dimension_numbers<[1], [0], [0], [1], [0, 0, 1, 1], [], []>} : vector<16x32xbf16>, vector<32x32xbf16>, vector<16x32xf32> -> vector<16x32xf32>
    %43 = vector.extract_strided_slice %39 {offsets = [1, 0, 0], sizes = [1, 32, 32], strides = [1, 1, 1]} : vector<3x32x32xbf16> to vector<1x32x32xbf16>
    %44 = vector.shape_cast %43 : vector<1x32x32xbf16> to vector<32x32xbf16>
    %cst_20 = arith.constant dense<0.000000e+00> : vector<16x32xf32>
    %45 = tpu.matmul %37, %44, %cst_20 {dimension_numbers = #tpu.dot_dimension_numbers<[1], [0], [0], [1], [0, 0, 1, 1], [], []>} : vector<16x32xbf16>, vector<32x32xbf16>, vector<16x32xf32> -> vector<16x32xf32>
    %46 = vector.extract_strided_slice %39 {offsets = [2, 0, 0], sizes = [1, 32, 32], strides = [1, 1, 1]} : vector<3x32x32xbf16> to vector<1x32x32xbf16>
    %47 = vector.shape_cast %46 : vector<1x32x32xbf16> to vector<32x32xbf16>
    %cst_21 = arith.constant dense<0.000000e+00> : vector<16x32xf32>
    %48 = tpu.matmul %37, %47, %cst_21 {dimension_numbers = #tpu.dot_dimension_numbers<[1], [0], [0], [1], [0, 0, 1, 1], [], []>} : vector<16x32xbf16>, vector<32x32xbf16>, vector<16x32xf32> -> vector<16x32xf32>
    %49 = arith.truncf %42 : vector<16x32xf32> to vector<16x32xbf16>
    %50 = arith.truncf %45 : vector<16x32xf32> to vector<16x32xbf16>
    %51 = arith.truncf %48 : vector<16x32xf32> to vector<16x32xbf16>
    %52 = vector.extract_strided_slice %49 {offsets = [0, 0], sizes = [16, 4], strides = [1, 1]} : vector<16x32xbf16> to vector<16x4xbf16>
    %53 = vector.shape_cast %52 : vector<16x4xbf16> to vector<2x8x4xbf16>
    %54 = vector.extract_strided_slice %50 {offsets = [0, 0], sizes = [16, 4], strides = [1, 1]} : vector<16x32xbf16> to vector<16x4xbf16>
    %55 = vector.shape_cast %54 : vector<16x4xbf16> to vector<2x8x4xbf16>
    %56 = vector.extract_strided_slice %51 {offsets = [0, 0], sizes = [16, 4], strides = [1, 1]} : vector<16x32xbf16> to vector<16x4xbf16>
    %57 = vector.shape_cast %56 : vector<16x4xbf16> to vector<2x8x4xbf16>
    %cst_22 = arith.constant dense<0.000000e+00> : vector<2x8x8xf32>
    %58 = tpu.matmul %53, %55, %cst_22 {dimension_numbers = #tpu.dot_dimension_numbers<[2], [2], [1], [1], [0, 0, 0, 1, 1, 1], [0], [0]>} : vector<2x8x4xbf16>, vector<2x8x4xbf16>, vector<2x8x8xf32> -> vector<2x8x8xf32>
    %cst_23 = arith.constant dense<0xFF800000> : vector<2x8xf32>
    %59 = vector.multi_reduction <maximumf>, %58, %cst_23 [2] : vector<2x8x8xf32> to vector<2x8xf32>
    %60 = vector.shape_cast %59 : vector<2x8xf32> to vector<2x8x1xf32>
    %61 = vector.broadcast %60 : vector<2x8x1xf32> to vector<2x8x8xf32>
    %62 = arith.subf %58, %61 : vector<2x8x8xf32>
    %63 = math.exp %62 : vector<2x8x8xf32>
    %cst_24 = arith.constant dense<0.000000e+00> : vector<2x8xf32>
    %64 = vector.multi_reduction <add>, %63, %cst_24 [2] : vector<2x8x8xf32> to vector<2x8xf32>
    %65 = vector.shape_cast %64 : vector<2x8xf32> to vector<2x8x1xf32>
    %66 = vector.broadcast %65 : vector<2x8x1xf32> to vector<2x8x8xf32>
    %67 = arith.divf %63, %66 : vector<2x8x8xf32>
    %68 = arith.truncf %67 : vector<2x8x8xf32> to vector<2x8x8xbf16>
    %cst_25 = arith.constant dense<0.000000e+00> : vector<2x8x4xf32>
    %69 = tpu.matmul %68, %57, %cst_25 {dimension_numbers = #tpu.dot_dimension_numbers<[2], [1], [1], [2], [0, 0, 0, 1, 1, 2], [0], [0]>} : vector<2x8x8xbf16>, vector<2x8x4xbf16>, vector<2x8x4xf32> -> vector<2x8x4xf32>
    %70 = vector.shape_cast %69 : vector<2x8x4xf32> to vector<16x4xf32>
    %71 = vector.extract_strided_slice %49 {offsets = [0, 4], sizes = [16, 4], strides = [1, 1]} : vector<16x32xbf16> to vector<16x4xbf16>
    %72 = vector.shape_cast %71 : vector<16x4xbf16> to vector<2x8x4xbf16>
    %73 = vector.extract_strided_slice %50 {offsets = [0, 4], sizes = [16, 4], strides = [1, 1]} : vector<16x32xbf16> to vector<16x4xbf16>
    %74 = vector.shape_cast %73 : vector<16x4xbf16> to vector<2x8x4xbf16>
    %75 = vector.extract_strided_slice %51 {offsets = [0, 4], sizes = [16, 4], strides = [1, 1]} : vector<16x32xbf16> to vector<16x4xbf16>
    %76 = vector.shape_cast %75 : vector<16x4xbf16> to vector<2x8x4xbf16>
    %cst_26 = arith.constant dense<0.000000e+00> : vector<2x8x8xf32>
    %77 = tpu.matmul %72, %74, %cst_26 {dimension_numbers = #tpu.dot_dimension_numbers<[2], [2], [1], [1], [0, 0, 0, 1, 1, 1], [0], [0]>} : vector<2x8x4xbf16>, vector<2x8x4xbf16>, vector<2x8x8xf32> -> vector<2x8x8xf32>
    %cst_27 = arith.constant dense<0xFF800000> : vector<2x8xf32>
    %78 = vector.multi_reduction <maximumf>, %77, %cst_27 [2] : vector<2x8x8xf32> to vector<2x8xf32>
    %79 = vector.shape_cast %78 : vector<2x8xf32> to vector<2x8x1xf32>
    %80 = vector.broadcast %79 : vector<2x8x1xf32> to vector<2x8x8xf32>
    %81 = arith.subf %77, %80 : vector<2x8x8xf32>
    %82 = math.exp %81 : vector<2x8x8xf32>
    %cst_28 = arith.constant dense<0.000000e+00> : vector<2x8xf32>
    %83 = vector.multi_reduction <add>, %82, %cst_28 [2] : vector<2x8x8xf32> to vector<2x8xf32>
    %84 = vector.shape_cast %83 : vector<2x8xf32> to vector<2x8x1xf32>
    %85 = vector.broadcast %84 : vector<2x8x1xf32> to vector<2x8x8xf32>
    %86 = arith.divf %82, %85 : vector<2x8x8xf32>
    %87 = arith.truncf %86 : vector<2x8x8xf32> to vector<2x8x8xbf16>
    %cst_29 = arith.constant dense<0.000000e+00> : vector<2x8x4xf32>
    %88 = tpu.matmul %87, %76, %cst_29 {dimension_numbers = #tpu.dot_dimension_numbers<[2], [1], [1], [2], [0, 0, 0, 1, 1, 2], [0], [0]>} : vector<2x8x8xbf16>, vector<2x8x4xbf16>, vector<2x8x4xf32> -> vector<2x8x4xf32>
    %89 = vector.shape_cast %88 : vector<2x8x4xf32> to vector<16x4xf32>
    %90 = vector.extract_strided_slice %49 {offsets = [0, 8], sizes = [16, 4], strides = [1, 1]} : vector<16x32xbf16> to vector<16x4xbf16>
    %91 = vector.shape_cast %90 : vector<16x4xbf16> to vector<2x8x4xbf16>
    %92 = vector.extract_strided_slice %50 {offsets = [0, 8], sizes = [16, 4], strides = [1, 1]} : vector<16x32xbf16> to vector<16x4xbf16>
    %93 = vector.shape_cast %92 : vector<16x4xbf16> to vector<2x8x4xbf16>
    %94 = vector.extract_strided_slice %51 {offsets = [0, 8], sizes = [16, 4], strides = [1, 1]} : vector<16x32xbf16> to vector<16x4xbf16>
    %95 = vector.shape_cast %94 : vector<16x4xbf16> to vector<2x8x4xbf16>
    %cst_30 = arith.constant dense<0.000000e+00> : vector<2x8x8xf32>
    %96 = tpu.matmul %91, %93, %cst_30 {dimension_numbers = #tpu.dot_dimension_numbers<[2], [2], [1], [1], [0, 0, 0, 1, 1, 1], [0], [0]>} : vector<2x8x4xbf16>, vector<2x8x4xbf16>, vector<2x8x8xf32> -> vector<2x8x8xf32>
    %cst_31 = arith.constant dense<0xFF800000> : vector<2x8xf32>
    %97 = vector.multi_reduction <maximumf>, %96, %cst_31 [2] : vector<2x8x8xf32> to vector<2x8xf32>
    %98 = vector.shape_cast %97 : vector<2x8xf32> to vector<2x8x1xf32>
    %99 = vector.broadcast %98 : vector<2x8x1xf32> to vector<2x8x8xf32>
    %100 = arith.subf %96, %99 : vector<2x8x8xf32>
    %101 = math.exp %100 : vector<2x8x8xf32>
    %cst_32 = arith.constant dense<0.000000e+00> : vector<2x8xf32>
    %102 = vector.multi_reduction <add>, %101, %cst_32 [2] : vector<2x8x8xf32> to vector<2x8xf32>
    %103 = vector.shape_cast %102 : vector<2x8xf32> to vector<2x8x1xf32>
    %104 = vector.broadcast %103 : vector<2x8x1xf32> to vector<2x8x8xf32>
    %105 = arith.divf %101, %104 : vector<2x8x8xf32>
    %106 = arith.truncf %105 : vector<2x8x8xf32> to vector<2x8x8xbf16>
    %cst_33 = arith.constant dense<0.000000e+00> : vector<2x8x4xf32>
    %107 = tpu.matmul %106, %95, %cst_33 {dimension_numbers = #tpu.dot_dimension_numbers<[2], [1], [1], [2], [0, 0, 0, 1, 1, 2], [0], [0]>} : vector<2x8x8xbf16>, vector<2x8x4xbf16>, vector<2x8x4xf32> -> vector<2x8x4xf32>
    %108 = vector.shape_cast %107 : vector<2x8x4xf32> to vector<16x4xf32>
    %109 = vector.extract_strided_slice %49 {offsets = [0, 12], sizes = [16, 4], strides = [1, 1]} : vector<16x32xbf16> to vector<16x4xbf16>
    %110 = vector.shape_cast %109 : vector<16x4xbf16> to vector<2x8x4xbf16>
    %111 = vector.extract_strided_slice %50 {offsets = [0, 12], sizes = [16, 4], strides = [1, 1]} : vector<16x32xbf16> to vector<16x4xbf16>
    %112 = vector.shape_cast %111 : vector<16x4xbf16> to vector<2x8x4xbf16>
    %113 = vector.extract_strided_slice %51 {offsets = [0, 12], sizes = [16, 4], strides = [1, 1]} : vector<16x32xbf16> to vector<16x4xbf16>
    %114 = vector.shape_cast %113 : vector<16x4xbf16> to vector<2x8x4xbf16>
    %cst_34 = arith.constant dense<0.000000e+00> : vector<2x8x8xf32>
    %115 = tpu.matmul %110, %112, %cst_34 {dimension_numbers = #tpu.dot_dimension_numbers<[2], [2], [1], [1], [0, 0, 0, 1, 1, 1], [0], [0]>} : vector<2x8x4xbf16>, vector<2x8x4xbf16>, vector<2x8x8xf32> -> vector<2x8x8xf32>
    %cst_35 = arith.constant dense<0xFF800000> : vector<2x8xf32>
    %116 = vector.multi_reduction <maximumf>, %115, %cst_35 [2] : vector<2x8x8xf32> to vector<2x8xf32>
    %117 = vector.shape_cast %116 : vector<2x8xf32> to vector<2x8x1xf32>
    %118 = vector.broadcast %117 : vector<2x8x1xf32> to vector<2x8x8xf32>
    %119 = arith.subf %115, %118 : vector<2x8x8xf32>
    %120 = math.exp %119 : vector<2x8x8xf32>
    %cst_36 = arith.constant dense<0.000000e+00> : vector<2x8xf32>
    %121 = vector.multi_reduction <add>, %120, %cst_36 [2] : vector<2x8x8xf32> to vector<2x8xf32>
    %122 = vector.shape_cast %121 : vector<2x8xf32> to vector<2x8x1xf32>
    %123 = vector.broadcast %122 : vector<2x8x1xf32> to vector<2x8x8xf32>
    %124 = arith.divf %120, %123 : vector<2x8x8xf32>
    %125 = arith.truncf %124 : vector<2x8x8xf32> to vector<2x8x8xbf16>
    %cst_37 = arith.constant dense<0.000000e+00> : vector<2x8x4xf32>
    %126 = tpu.matmul %125, %114, %cst_37 {dimension_numbers = #tpu.dot_dimension_numbers<[2], [1], [1], [2], [0, 0, 0, 1, 1, 2], [0], [0]>} : vector<2x8x8xbf16>, vector<2x8x4xbf16>, vector<2x8x4xf32> -> vector<2x8x4xf32>
    %127 = vector.shape_cast %126 : vector<2x8x4xf32> to vector<16x4xf32>
    %128 = vector.extract_strided_slice %49 {offsets = [0, 16], sizes = [16, 4], strides = [1, 1]} : vector<16x32xbf16> to vector<16x4xbf16>
    %129 = vector.shape_cast %128 : vector<16x4xbf16> to vector<2x8x4xbf16>
    %130 = vector.extract_strided_slice %50 {offsets = [0, 16], sizes = [16, 4], strides = [1, 1]} : vector<16x32xbf16> to vector<16x4xbf16>
    %131 = vector.shape_cast %130 : vector<16x4xbf16> to vector<2x8x4xbf16>
    %132 = vector.extract_strided_slice %51 {offsets = [0, 16], sizes = [16, 4], strides = [1, 1]} : vector<16x32xbf16> to vector<16x4xbf16>
    %133 = vector.shape_cast %132 : vector<16x4xbf16> to vector<2x8x4xbf16>
    %cst_38 = arith.constant dense<0.000000e+00> : vector<2x8x8xf32>
    %134 = tpu.matmul %129, %131, %cst_38 {dimension_numbers = #tpu.dot_dimension_numbers<[2], [2], [1], [1], [0, 0, 0, 1, 1, 1], [0], [0]>} : vector<2x8x4xbf16>, vector<2x8x4xbf16>, vector<2x8x8xf32> -> vector<2x8x8xf32>
    %cst_39 = arith.constant dense<0xFF800000> : vector<2x8xf32>
    %135 = vector.multi_reduction <maximumf>, %134, %cst_39 [2] : vector<2x8x8xf32> to vector<2x8xf32>
    %136 = vector.shape_cast %135 : vector<2x8xf32> to vector<2x8x1xf32>
    %137 = vector.broadcast %136 : vector<2x8x1xf32> to vector<2x8x8xf32>
    %138 = arith.subf %134, %137 : vector<2x8x8xf32>
    %139 = math.exp %138 : vector<2x8x8xf32>
    %cst_40 = arith.constant dense<0.000000e+00> : vector<2x8xf32>
    %140 = vector.multi_reduction <add>, %139, %cst_40 [2] : vector<2x8x8xf32> to vector<2x8xf32>
    %141 = vector.shape_cast %140 : vector<2x8xf32> to vector<2x8x1xf32>
    %142 = vector.broadcast %141 : vector<2x8x1xf32> to vector<2x8x8xf32>
    %143 = arith.divf %139, %142 : vector<2x8x8xf32>
    %144 = arith.truncf %143 : vector<2x8x8xf32> to vector<2x8x8xbf16>
    %cst_41 = arith.constant dense<0.000000e+00> : vector<2x8x4xf32>
    %145 = tpu.matmul %144, %133, %cst_41 {dimension_numbers = #tpu.dot_dimension_numbers<[2], [1], [1], [2], [0, 0, 0, 1, 1, 2], [0], [0]>} : vector<2x8x8xbf16>, vector<2x8x4xbf16>, vector<2x8x4xf32> -> vector<2x8x4xf32>
    %146 = vector.shape_cast %145 : vector<2x8x4xf32> to vector<16x4xf32>
    %147 = vector.extract_strided_slice %49 {offsets = [0, 20], sizes = [16, 4], strides = [1, 1]} : vector<16x32xbf16> to vector<16x4xbf16>
    %148 = vector.shape_cast %147 : vector<16x4xbf16> to vector<2x8x4xbf16>
    %149 = vector.extract_strided_slice %50 {offsets = [0, 20], sizes = [16, 4], strides = [1, 1]} : vector<16x32xbf16> to vector<16x4xbf16>
    %150 = vector.shape_cast %149 : vector<16x4xbf16> to vector<2x8x4xbf16>
    %151 = vector.extract_strided_slice %51 {offsets = [0, 20], sizes = [16, 4], strides = [1, 1]} : vector<16x32xbf16> to vector<16x4xbf16>
    %152 = vector.shape_cast %151 : vector<16x4xbf16> to vector<2x8x4xbf16>
    %cst_42 = arith.constant dense<0.000000e+00> : vector<2x8x8xf32>
    %153 = tpu.matmul %148, %150, %cst_42 {dimension_numbers = #tpu.dot_dimension_numbers<[2], [2], [1], [1], [0, 0, 0, 1, 1, 1], [0], [0]>} : vector<2x8x4xbf16>, vector<2x8x4xbf16>, vector<2x8x8xf32> -> vector<2x8x8xf32>
    %cst_43 = arith.constant dense<0xFF800000> : vector<2x8xf32>
    %154 = vector.multi_reduction <maximumf>, %153, %cst_43 [2] : vector<2x8x8xf32> to vector<2x8xf32>
    %155 = vector.shape_cast %154 : vector<2x8xf32> to vector<2x8x1xf32>
    %156 = vector.broadcast %155 : vector<2x8x1xf32> to vector<2x8x8xf32>
    %157 = arith.subf %153, %156 : vector<2x8x8xf32>
    %158 = math.exp %157 : vector<2x8x8xf32>
    %cst_44 = arith.constant dense<0.000000e+00> : vector<2x8xf32>
    %159 = vector.multi_reduction <add>, %158, %cst_44 [2] : vector<2x8x8xf32> to vector<2x8xf32>
    %160 = vector.shape_cast %159 : vector<2x8xf32> to vector<2x8x1xf32>
    %161 = vector.broadcast %160 : vector<2x8x1xf32> to vector<2x8x8xf32>
    %162 = arith.divf %158, %161 : vector<2x8x8xf32>
    %163 = arith.truncf %162 : vector<2x8x8xf32> to vector<2x8x8xbf16>
    %cst_45 = arith.constant dense<0.000000e+00> : vector<2x8x4xf32>
    %164 = tpu.matmul %163, %152, %cst_45 {dimension_numbers = #tpu.dot_dimension_numbers<[2], [1], [1], [2], [0, 0, 0, 1, 1, 2], [0], [0]>} : vector<2x8x8xbf16>, vector<2x8x4xbf16>, vector<2x8x4xf32> -> vector<2x8x4xf32>
    %165 = vector.shape_cast %164 : vector<2x8x4xf32> to vector<16x4xf32>
    %166 = vector.extract_strided_slice %49 {offsets = [0, 24], sizes = [16, 4], strides = [1, 1]} : vector<16x32xbf16> to vector<16x4xbf16>
    %167 = vector.shape_cast %166 : vector<16x4xbf16> to vector<2x8x4xbf16>
    %168 = vector.extract_strided_slice %50 {offsets = [0, 24], sizes = [16, 4], strides = [1, 1]} : vector<16x32xbf16> to vector<16x4xbf16>
    %169 = vector.shape_cast %168 : vector<16x4xbf16> to vector<2x8x4xbf16>
    %170 = vector.extract_strided_slice %51 {offsets = [0, 24], sizes = [16, 4], strides = [1, 1]} : vector<16x32xbf16> to vector<16x4xbf16>
    %171 = vector.shape_cast %170 : vector<16x4xbf16> to vector<2x8x4xbf16>
    %cst_46 = arith.constant dense<0.000000e+00> : vector<2x8x8xf32>
    %172 = tpu.matmul %167, %169, %cst_46 {dimension_numbers = #tpu.dot_dimension_numbers<[2], [2], [1], [1], [0, 0, 0, 1, 1, 1], [0], [0]>} : vector<2x8x4xbf16>, vector<2x8x4xbf16>, vector<2x8x8xf32> -> vector<2x8x8xf32>
    %cst_47 = arith.constant dense<0xFF800000> : vector<2x8xf32>
    %173 = vector.multi_reduction <maximumf>, %172, %cst_47 [2] : vector<2x8x8xf32> to vector<2x8xf32>
    %174 = vector.shape_cast %173 : vector<2x8xf32> to vector<2x8x1xf32>
    %175 = vector.broadcast %174 : vector<2x8x1xf32> to vector<2x8x8xf32>
    %176 = arith.subf %172, %175 : vector<2x8x8xf32>
    %177 = math.exp %176 : vector<2x8x8xf32>
    %cst_48 = arith.constant dense<0.000000e+00> : vector<2x8xf32>
    %178 = vector.multi_reduction <add>, %177, %cst_48 [2] : vector<2x8x8xf32> to vector<2x8xf32>
    %179 = vector.shape_cast %178 : vector<2x8xf32> to vector<2x8x1xf32>
    %180 = vector.broadcast %179 : vector<2x8x1xf32> to vector<2x8x8xf32>
    %181 = arith.divf %177, %180 : vector<2x8x8xf32>
    %182 = arith.truncf %181 : vector<2x8x8xf32> to vector<2x8x8xbf16>
    %cst_49 = arith.constant dense<0.000000e+00> : vector<2x8x4xf32>
    %183 = tpu.matmul %182, %171, %cst_49 {dimension_numbers = #tpu.dot_dimension_numbers<[2], [1], [1], [2], [0, 0, 0, 1, 1, 2], [0], [0]>} : vector<2x8x8xbf16>, vector<2x8x4xbf16>, vector<2x8x4xf32> -> vector<2x8x4xf32>
    %184 = vector.shape_cast %183 : vector<2x8x4xf32> to vector<16x4xf32>
    %185 = vector.extract_strided_slice %49 {offsets = [0, 28], sizes = [16, 4], strides = [1, 1]} : vector<16x32xbf16> to vector<16x4xbf16>
    %186 = vector.shape_cast %185 : vector<16x4xbf16> to vector<2x8x4xbf16>
    %187 = vector.extract_strided_slice %50 {offsets = [0, 28], sizes = [16, 4], strides = [1, 1]} : vector<16x32xbf16> to vector<16x4xbf16>
    %188 = vector.shape_cast %187 : vector<16x4xbf16> to vector<2x8x4xbf16>
    %189 = vector.extract_strided_slice %51 {offsets = [0, 28], sizes = [16, 4], strides = [1, 1]} : vector<16x32xbf16> to vector<16x4xbf16>
    %190 = vector.shape_cast %189 : vector<16x4xbf16> to vector<2x8x4xbf16>
    %cst_50 = arith.constant dense<0.000000e+00> : vector<2x8x8xf32>
    %191 = tpu.matmul %186, %188, %cst_50 {dimension_numbers = #tpu.dot_dimension_numbers<[2], [2], [1], [1], [0, 0, 0, 1, 1, 1], [0], [0]>} : vector<2x8x4xbf16>, vector<2x8x4xbf16>, vector<2x8x8xf32> -> vector<2x8x8xf32>
    %cst_51 = arith.constant dense<0xFF800000> : vector<2x8xf32>
    %192 = vector.multi_reduction <maximumf>, %191, %cst_51 [2] : vector<2x8x8xf32> to vector<2x8xf32>
    %193 = vector.shape_cast %192 : vector<2x8xf32> to vector<2x8x1xf32>
    %194 = vector.broadcast %193 : vector<2x8x1xf32> to vector<2x8x8xf32>
    %195 = arith.subf %191, %194 : vector<2x8x8xf32>
    %196 = math.exp %195 : vector<2x8x8xf32>
    %cst_52 = arith.constant dense<0.000000e+00> : vector<2x8xf32>
    %197 = vector.multi_reduction <add>, %196, %cst_52 [2] : vector<2x8x8xf32> to vector<2x8xf32>
    %198 = vector.shape_cast %197 : vector<2x8xf32> to vector<2x8x1xf32>
    %199 = vector.broadcast %198 : vector<2x8x1xf32> to vector<2x8x8xf32>
    %200 = arith.divf %196, %199 : vector<2x8x8xf32>
    %201 = arith.truncf %200 : vector<2x8x8xf32> to vector<2x8x8xbf16>
    %cst_53 = arith.constant dense<0.000000e+00> : vector<2x8x4xf32>
    %202 = tpu.matmul %201, %190, %cst_53 {dimension_numbers = #tpu.dot_dimension_numbers<[2], [1], [1], [2], [0, 0, 0, 1, 1, 2], [0], [0]>} : vector<2x8x8xbf16>, vector<2x8x4xbf16>, vector<2x8x4xf32> -> vector<2x8x4xf32>
    %203 = vector.shape_cast %202 : vector<2x8x4xf32> to vector<16x4xf32>
    %204 = tpu.concatenate %70, %89, %108, %127, %146, %165, %184, %203 in 1 : vector<16x4xf32>, vector<16x4xf32>, vector<16x4xf32>, vector<16x4xf32>, vector<16x4xf32>, vector<16x4xf32>, vector<16x4xf32>, vector<16x4xf32> -> vector<16x32xf32>
    %205 = arith.truncf %204 : vector<16x32xf32> to vector<16x32xbf16>
    %c0_54 = arith.constant 0 : index
    %c0_55 = arith.constant 0 : index
    %c0_56 = arith.constant 0 : index
    %206 = vector.load %arg7[%c0_54, %c0_55, %c0_56] : memref<1x32x32xbf16, #tpu.memory_space<vmem>>, vector<1x32x32xbf16>
    %207 = vector.shape_cast %206 : vector<1x32x32xbf16> to vector<32x32xbf16>
    %cst_57 = arith.constant dense<0.000000e+00> : vector<16x32xf32>
    %208 = tpu.matmul %205, %207, %cst_57 {dimension_numbers = #tpu.dot_dimension_numbers<[1], [0], [0], [1], [0, 0, 1, 1], [], []>} : vector<16x32xbf16>, vector<32x32xbf16>, vector<16x32xf32> -> vector<16x32xf32>
    %209 = vector.broadcast %12 : vector<1x32xf32> to vector<16x32xf32>
    %210 = arith.addf %208, %209 : vector<16x32xf32>
    %211 = arith.addf %210, %3 : vector<16x32xf32>
    %cst_58 = arith.constant dense<0.000000e+00> : vector<16xf32>
    %212 = vector.multi_reduction <add>, %211, %cst_58 [1] : vector<16x32xf32> to vector<16xf32>
    %213 = vector.shape_cast %212 : vector<16xf32> to vector<16x1xf32>
    %cst_59 = arith.constant 3.200000e+01 : f32
    %214 = vector.broadcast %cst_59 : f32 to vector<16x1xf32>
    %215 = arith.divf %213, %214 : vector<16x1xf32>
    %216 = vector.broadcast %215 : vector<16x1xf32> to vector<16x32xf32>
    %217 = arith.subf %211, %216 : vector<16x32xf32>
    %218 = arith.mulf %217, %217 : vector<16x32xf32>
    %cst_60 = arith.constant dense<0.000000e+00> : vector<16xf32>
    %219 = vector.multi_reduction <add>, %218, %cst_60 [1] : vector<16x32xf32> to vector<16xf32>
    %220 = vector.shape_cast %219 : vector<16xf32> to vector<16x1xf32>
    %cst_61 = arith.constant 3.200000e+01 : f32
    %221 = vector.broadcast %cst_61 : f32 to vector<16x1xf32>
    %222 = arith.divf %220, %221 : vector<16x1xf32>
    %cst_62 = arith.constant 9.99999974E-6 : f32
    %223 = vector.broadcast %cst_62 : f32 to vector<16x1xf32>
    %224 = arith.addf %222, %223 : vector<16x1xf32>
    %225 = math.rsqrt %224 : vector<16x1xf32>
    %226 = vector.broadcast %225 : vector<16x1xf32> to vector<16x32xf32>
    %227 = arith.mulf %217, %226 : vector<16x32xf32>
    %228 = vector.broadcast %10 : vector<1x32xf32> to vector<16x32xf32>
    %229 = arith.mulf %227, %228 : vector<16x32xf32>
    %230 = vector.broadcast %11 : vector<1x32xf32> to vector<16x32xf32>
    %231 = arith.addf %229, %230 : vector<16x32xf32>
    %232 = arith.mulf %5, %231 : vector<16x32xf32>
    %233 = arith.truncf %232 : vector<16x32xf32> to vector<16x32xbf16>
    %c0_63 = arith.constant 0 : index
    %c0_64 = arith.constant 0 : index
    %c0_65 = arith.constant 0 : index
    %234 = vector.load %arg8[%c0_63, %c0_64, %c0_65] : memref<1x32x128xbf16, #tpu.memory_space<vmem>>, vector<1x32x128xbf16>
    %235 = vector.shape_cast %234 : vector<1x32x128xbf16> to vector<32x128xbf16>
    %cst_66 = arith.constant dense<0.000000e+00> : vector<16x128xf32>
    %236 = tpu.matmul %233, %235, %cst_66 {dimension_numbers = #tpu.dot_dimension_numbers<[1], [0], [0], [1], [0, 0, 1, 1], [], []>} : vector<16x32xbf16>, vector<32x128xbf16>, vector<16x128xf32> -> vector<16x128xf32>
    %237 = vector.broadcast %15 : vector<1x128xf32> to vector<16x128xf32>
    %238 = arith.addf %236, %237 : vector<16x128xf32>
    %cst_67 = arith.constant 5.000000e-01 : f32
    %239 = vector.broadcast %cst_67 : f32 to vector<16x128xf32>
    %240 = arith.mulf %239, %238 : vector<16x128xf32>
    %cst_68 = arith.constant 0.707106769 : f32
    %241 = vector.broadcast %cst_68 : f32 to vector<16x128xf32>
    %242 = arith.mulf %238, %241 : vector<16x128xf32>
    %243 = math.erf %242 : vector<16x128xf32>
    %cst_69 = arith.constant 1.000000e+00 : f32
    %244 = vector.broadcast %cst_69 : f32 to vector<16x128xf32>
    %245 = arith.addf %244, %243 : vector<16x128xf32>
    %246 = arith.mulf %240, %245 : vector<16x128xf32>
    %247 = arith.truncf %246 : vector<16x128xf32> to vector<16x128xbf16>
    %c0_70 = arith.constant 0 : index
    %c0_71 = arith.constant 0 : index
    %c0_72 = arith.constant 0 : index
    %248 = vector.load %arg9[%c0_70, %c0_71, %c0_72] : memref<1x128x32xbf16, #tpu.memory_space<vmem>>, vector<1x128x32xbf16>
    %249 = vector.shape_cast %248 : vector<1x128x32xbf16> to vector<128x32xbf16>
    %cst_73 = arith.constant dense<0.000000e+00> : vector<16x32xf32>
    %250 = tpu.matmul %247, %249, %cst_73 {dimension_numbers = #tpu.dot_dimension_numbers<[1], [0], [0], [1], [0, 0, 1, 1], [], []>} : vector<16x128xbf16>, vector<128x32xbf16>, vector<16x32xf32> -> vector<16x32xf32>
    %251 = vector.broadcast %13 : vector<1x32xf32> to vector<16x32xf32>
    %252 = arith.addf %250, %251 : vector<16x32xf32>
    %253 = arith.addf %252, %211 : vector<16x32xf32>
    %c0_74 = arith.constant 0 : index
    %c0_75 = arith.constant 0 : index
    %254 = vector.load %arg11[%c0_74, %c0_75] : memref<16x32xf32, #tpu.memory_space<vmem>>, vector<16x32xf32>
    tpu.vector_store %arg11[%c0_74, %c0_75], %253 {strides = array<i32>} : memref<16x32xf32, #tpu.memory_space<vmem>>, vector<16x32xf32>,
    %c1_i32 = arith.constant 1 : i32
    %255 = arith.cmpi eq, %arg1, %c1_i32 : i32
    %256 = arith.extui %255 : i1 to i32
    %c0_i32_76 = arith.constant 0 : i32
    %257 = arith.cmpi ne, %256, %c0_i32_76 : i32
    scf.if %257 {
      %258 = vector.shape_cast %253 : vector<16x32xf32> to vector<2x8x32xf32>
      %c0_77 = arith.constant 0 : index
      %c0_78 = arith.constant 0 : index
      %c0_79 = arith.constant 0 : index
      %259 = vector.load %arg10[%c0_77, %c0_78, %c0_79] : memref<2x8x32xf32, #tpu.memory_space<vmem>>, vector<2x8x32xf32>
      tpu.vector_store %arg10[%c0_77, %c0_78, %c0_79], %258 {strides = array<i32>} : memref<2x8x32xf32, #tpu.memory_space<vmem>>, vector<2x8x32xf32>,
    } else {
    }
    return
  }
  func.func @transform_0(%arg0: i32, %arg1: i32) -> (i32, i32, i32) {
    %c0_i32 = arith.constant 0 : i32
    %c0_i32_0 = arith.constant 0 : i32
    %c0_i32_1 = arith.constant 0 : i32
    return %arg0, %c0_i32, %c0_i32_0 : i32, i32, i32
  }
  func.func @transform_1(%arg0: i32, %arg1: i32) -> (i32, i32, i32) {
    %c0_i32 = arith.constant 0 : i32
    %c0_i32_0 = arith.constant 0 : i32
    %c0_i32_1 = arith.constant 0 : i32
    return %arg0, %c0_i32, %c0_i32_0 : i32, i32, i32
  }
  func.func @transform_2(%arg0: i32, %arg1: i32) -> (i32, i32, i32) {
    %c0_i32 = arith.constant 0 : i32
    %c0_i32_0 = arith.constant 0 : i32
    %c0_i32_1 = arith.constant 0 : i32
    return %arg1, %c0_i32, %c0_i32_0 : i32, i32, i32
  }
  func.func @transform_3(%arg0: i32, %arg1: i32) -> (i32, i32, i32) {
    %c0_i32 = arith.constant 0 : i32
    %c0_i32_0 = arith.constant 0 : i32
    %c0_i32_1 = arith.constant 0 : i32
    return %arg1, %c0_i32, %c0_i32_0 : i32, i32, i32
  }
  func.func @transform_4(%arg0: i32, %arg1: i32) -> (i32, i32, i32, i32) {
    %c0_i32 = arith.constant 0 : i32
    %c0_i32_0 = arith.constant 0 : i32
    %c0_i32_1 = arith.constant 0 : i32
    %c0_i32_2 = arith.constant 0 : i32
    return %arg1, %c0_i32, %c0_i32_0, %c0_i32_1 : i32, i32, i32, i32
  }
  func.func @transform_5(%arg0: i32, %arg1: i32) -> (i32, i32, i32) {
    %c0_i32 = arith.constant 0 : i32
    %c0_i32_0 = arith.constant 0 : i32
    %c0_i32_1 = arith.constant 0 : i32
    return %arg1, %c0_i32, %c0_i32_0 : i32, i32, i32
  }
  func.func @transform_6(%arg0: i32, %arg1: i32) -> (i32, i32, i32) {
    %c0_i32 = arith.constant 0 : i32
    %c0_i32_0 = arith.constant 0 : i32
    %c0_i32_1 = arith.constant 0 : i32
    return %arg1, %c0_i32, %c0_i32_0 : i32, i32, i32
  }
  func.func @transform_7(%arg0: i32, %arg1: i32) -> (i32, i32, i32) {
    %c0_i32 = arith.constant 0 : i32
    %c0_i32_0 = arith.constant 0 : i32
    %c0_i32_1 = arith.constant 0 : i32
    return %arg1, %c0_i32, %c0_i32_0 : i32, i32, i32
  }
  func.func @transform_8(%arg0: i32, %arg1: i32) -> (i32, i32, i32) {
    %c0_i32 = arith.constant 0 : i32
    %c0_i32_0 = arith.constant 0 : i32
    %c0_i32_1 = arith.constant 0 : i32
    return %arg0, %c0_i32, %c0_i32_0 : i32, i32, i32
  }
}

</mosaic_0001>

<llo_original>
// kernel: tpu_custom_call.1
$region0: #{tpu_custom_call.1}
  #allocation0 [shape = 'u32[]', space=smem, size = 0x4, offset = 0x4, fixed_abs, tag = 'smem constant byte address 0x4 - core index']
  #allocation1 [shape = 'u32[144,128]{1,0:T(1,128)}', space=vmem, size = 0x12000, scoped, tag = 'internal scratch']
  #allocation2 [shape = 'f32[16,32]{1,0:T(8,128)}', space=vmem, size = 0x2000, scoped, tag = 'scratch operand']
  %s0 = inlined_call_operand.hbm [shape: f32[2,8,32], index: 0, kind: input, shape index: {}]
  %s1 = inlined_call_operand.hbm [shape: f32[2,8,32], index: 1, kind: input, shape index: {}]
  %s2 = inlined_call_operand.vmem [shape: f32[2,6,32], index: 2, kind: input, shape index: {}]
  %s3 = inlined_call_operand.vmem [shape: f32[2,1,128], index: 3, kind: input, shape index: {}]
  %s4 = inlined_call_operand.vmem [shape: bf16[2,3,32,32], index: 4, kind: input, shape index: {}]
  %s5 = inlined_call_operand.vmem [shape: bf16[2,32,32], index: 5, kind: input, shape index: {}]
  %s6 = inlined_call_operand.vmem [shape: bf16[2,32,128], index: 6, kind: input, shape index: {}]
  %s7 = inlined_call_operand.vmem [shape: bf16[2,128,32], index: 7, kind: input, shape index: {}]
  %s8 = inlined_call_operand.hbm [shape: f32[2,8,32], index: 8, kind: output, shape index: {}]
  %s9 = sld [smem:[#allocation0]]
  $region81: #{tpu_custom_call.1} parent=0
    _
  %s11 = ssub.s32 1, %s9
  %s12 = scalar_select 0, %s11, %s9
  $region1: #{tpu_custom_call.1} parent=0
    #allocation3 [shape = 'u8[8192]{0}', space=vmem, size = 0x2000, scoped, tag = 'input window, operand 0, single buffered']
    #allocation4 [shape = 's32[2]{0}', space=sflag, size = 0x8, scoped, tag = 'scoped memory for tpu_custom_call.1']
    #allocation5 [shape = 's32[2]{0}', space=sflag, size = 0x8, scoped, tag = 'scoped memory for tpu_custom_call.1']
    #allocation6 [shape = 'u8[8192]{0}', space=vmem, size = 0x2000, scoped, tag = 'input window, operand 1, single buffered']
    #allocation7 [shape = 's32[1]{0}', space=sflag, size = 0x4, scoped, tag = 'scoped memory for tpu_custom_call.1']
    #allocation8 [shape = 'u8[8192]{0}', space=vmem, size = 0x2000, scoped, tag = 'output window, operand 0, single buffered']
    %13 = vsyncpa [#allocation4], 0
    %14 = vsyncpa [#allocation7], 0
    %15 = vsyncpa [#allocation5], 0
    loop: start=0, step=1, limit=4
    $region2: #{tpu_custom_call.1} parent=1 // loop_pre_header
      _
    $region3: #{tpu_custom_call.1} parent=1 // loop_header
      %s17 = sphi 0, %s21
      %p18 = scmp.ge.s32.totalorder %s17, 4
      %s24 = sphi 0, %s36
      %s25 = sphi 0, %s32
      %s26 = sphi 0, %s24
      %s27 = sphi 0, %s25
      %s28 = sphi 0, %s26
      %s29 = sphi 0, %s27
      %s39 = sphi 0, %s41
      %s42 = sphi 0, %s39
      %s43 = sphi 0, %s42
      %s59 = sphi 0, %s43
      %s65 = sphi 0, %s67
      %s68 = sphi 0, %s65
      %s69 = sphi 0, %s68
      %s85 = sphi 0, %s69
      %s91 = sphi 0, %s93
      %s94 = sphi 0, %s91
      %s95 = sphi 0, %s94
      %s111 = sphi 0, %s95
      %s117 = sphi 0, %s119
      %s120 = sphi 0, %s117
      %s121 = sphi 0, %s120
      %s137 = sphi 0, %s121
      %s143 = sphi 0, %s145
      %s146 = sphi 0, %s143
      %s147 = sphi 0, %s146
      %s163 = sphi 0, %s147
      %s169 = sphi 0, %s171
      %s172 = sphi 0, %s169
      %s173 = sphi 0, %s172
      %s189 = sphi 0, %s173
      %s195 = sphi 0, %s197
      %s198 = sphi 0, %s195
      %s199 = sphi 0, %s198
      %s215 = sphi 0, %s199
      %s221 = sphi 0, %s223
      %s224 = sphi 0, %s221
      %s225 = sphi 0, %s224
      %s241 = sphi 0, %s225
      %s247 = sphi 0, %s249
      %s250 = sphi 0, %s247
      %s251 = sphi 0, %s250
      %s267 = sphi 0, %s251
    $region4: #{tpu_custom_call.1} parent=1 // loop_header_branch
      %20 = sbr.rel (%p18) target = $region8
    $region5: #{tpu_custom_call.1} parent=1 // loop_body
      %s22 = ssub.s32 %s17, 1
      %s23 = ssub.s32 %s17, 2
      %s30 = sadd.s32 1, %s25
      %p31 = scmp.ge.s32.totalorder %s30, 2
      %s32 = scalar_select %p31, 0, %s30
      %s33 = sadd.s32 1, %s24
      %s34 = scalar_select %p31, %s33, %s24
      %p35 = scmp.ge.s32.totalorder %s34, 1
      %s36 = scalar_select %p35, 0, %s34
      %s37 = ssub.s32 %s24, %s36
      %p38 = scmp.eq.s32.totalorder %s37, 0
      %s40 = sadd.s32 %s39, 1
      %s41 = scalar_select %p38, %s39, %s40
      %p44 = pneg %p38
      %p45 = scmp.eq.s32.totalorder %s17, 1
      %p46 = por %p44, %p45
      %p47 = scmp.ne.s32.totalorder %s39, %s42
      %p48 = scmp.eq.s32.totalorder %s17, 0
      %p49 = por %p47, %p48
      %p50 = scmp.ne.s32.totalorder %s39, %s42
      %p51 = scmp.eq.s32.totalorder %s22, 1
      %p52 = por %p50, %p51
      %p53 = scmp.ne.s32.totalorder %s42, %s43
      %p54 = scmp.eq.s32.totalorder %s22, 0
      %p55 = por %p53, %p54
      %p56 = scmp.ne.s32.totalorder %s42, %s43
      %p57 = scmp.eq.s32.totalorder %s23, 1
      %p58 = por %p56, %p57
      %p60 = scmp.ne.s32.totalorder %s43, %s59
      %p61 = scmp.eq.s32.totalorder %s23, 0
      %p62 = por %p60, %p61
      %s63 = ssub.s32 %s24, %s36
      %p64 = scmp.eq.s32.totalorder %s63, 0
      %s66 = sadd.s32 %s65, 1
      %s67 = scalar_select %p64, %s65, %s66
      %p70 = pneg %p64
      %p71 = scmp.eq.s32.totalorder %s17, 1
      %p72 = por %p70, %p71
      %p73 = scmp.ne.s32.totalorder %s65, %s68
      %p74 = scmp.eq.s32.totalorder %s17, 0
      %p75 = por %p73, %p74
      %p76 = scmp.ne.s32.totalorder %s65, %s68
      %p77 = scmp.eq.s32.totalorder %s22, 1
      %p78 = por %p76, %p77
      %p79 = scmp.ne.s32.totalorder %s68, %s69
      %p80 = scmp.eq.s32.totalorder %s22, 0
      %p81 = por %p79, %p80
      %p82 = scmp.ne.s32.totalorder %s68, %s69
      %p83 = scmp.eq.s32.totalorder %s23, 1
      %p84 = por %p82, %p83
      %p86 = scmp.ne.s32.totalorder %s69, %s85
      %p87 = scmp.eq.s32.totalorder %s23, 0
      %p88 = por %p86, %p87
      %s89 = ssub.s32 %s25, %s32
      %p90 = scmp.eq.s32.totalorder %s89, 0
      %s92 = sadd.s32 %s91, 1
      %s93 = scalar_select %p90, %s91, %s92
      %p96 = pneg %p90
      %p97 = scmp.eq.s32.totalorder %s17, 1
      %p98 = por %p96, %p97
      %p99 = scmp.ne.s32.totalorder %s91, %s94
      %p100 = scmp.eq.s32.totalorder %s17, 0
      %p101 = por %p99, %p100
      %p102 = scmp.ne.s32.totalorder %s91, %s94
      %p103 = scmp.eq.s32.totalorder %s22, 1
      %p104 = por %p102, %p103
      %p105 = scmp.ne.s32.totalorder %s94, %s95
      %p106 = scmp.eq.s32.totalorder %s22, 0
      %p107 = por %p105, %p106
      %p108 = scmp.ne.s32.totalorder %s94, %s95
      %p109 = scmp.eq.s32.totalorder %s23, 1
      %p110 = por %p108, %p109
      %p112 = scmp.ne.s32.totalorder %s95, %s111
      %p113 = scmp.eq.s32.totalorder %s23, 0
      %p114 = por %p112, %p113
      %s115 = ssub.s32 %s25, %s32
      %p116 = scmp.eq.s32.totalorder %s115, 0
      %s118 = sadd.s32 %s117, 1
      %s119 = scalar_select %p116, %s117, %s118
      %p122 = pneg %p116
      %p123 = scmp.eq.s32.totalorder %s17, 1
      %p124 = por %p122, %p123
      %p125 = scmp.ne.s32.totalorder %s117, %s120
      %p126 = scmp.eq.s32.totalorder %s17, 0
      %p127 = por %p125, %p126
      %p128 = scmp.ne.s32.totalorder %s117, %s120
      %p129 = scmp.eq.s32.totalorder %s22, 1
      %p130 = por %p128, %p129
      %p131 = scmp.ne.s32.totalorder %s120, %s121
      %p132 = scmp.eq.s32.totalorder %s22, 0
      %p133 = por %p131, %p132
      %p134 = scmp.ne.s32.totalorder %s120, %s121
      %p135 = scmp.eq.s32.totalorder %s23, 1
      %p136 = por %p134, %p135
      %p138 = scmp.ne.s32.totalorder %s121, %s137
      %p139 = scmp.eq.s32.totalorder %s23, 0
      %p140 = por %p138, %p139
      %s141 = ssub.s32 %s25, %s32
      %p142 = scmp.eq.s32.totalorder %s141, 0
      %s144 = sadd.s32 %s143, 1
      %s145 = scalar_select %p142, %s143, %s144
      %p148 = pneg %p142
      %p149 = scmp.eq.s32.totalorder %s17, 1
      %p150 = por %p148, %p149
      %p151 = scmp.ne.s32.totalorder %s143, %s146
      %p152 = scmp.eq.s32.totalorder %s17, 0
      %p153 = por %p151, %p152
      %p154 = scmp.ne.s32.totalorder %s143, %s146
      %p155 = scmp.eq.s32.totalorder %s22, 1
      %p156 = por %p154, %p155
      %p157 = scmp.ne.s32.totalorder %s146, %s147
      %p158 = scmp.eq.s32.totalorder %s22, 0
      %p159 = por %p157, %p158
      %p160 = scmp.ne.s32.totalorder %s146, %s147
      %p161 = scmp.eq.s32.totalorder %s23, 1
      %p162 = por %p160, %p161
      %p164 = scmp.ne.s32.totalorder %s147, %s163
      %p165 = scmp.eq.s32.totalorder %s23, 0
      %p166 = por %p164, %p165
      %s167 = ssub.s32 %s25, %s32
      %p168 = scmp.eq.s32.totalorder %s167, 0
      %s170 = sadd.s32 %s169, 1
      %s171 = scalar_select %p168, %s169, %s170
      %p174 = pneg %p168
      %p175 = scmp.eq.s32.totalorder %s17, 1
      %p176 = por %p174, %p175
      %p177 = scmp.ne.s32.totalorder %s169, %s172
      %p178 = scmp.eq.s32.totalorder %s17, 0
      %p179 = por %p177, %p178
      %p180 = scmp.ne.s32.totalorder %s169, %s172
      %p181 = scmp.eq.s32.totalorder %s22, 1
      %p182 = por %p180, %p181
      %p183 = scmp.ne.s32.totalorder %s172, %s173
      %p184 = scmp.eq.s32.totalorder %s22, 0
      %p185 = por %p183, %p184
      %p186 = scmp.ne.s32.totalorder %s172, %s173
      %p187 = scmp.eq.s32.totalorder %s23, 1
      %p188 = por %p186, %p187
      %p190 = scmp.ne.s32.totalorder %s173, %s189
      %p191 = scmp.eq.s32.totalorder %s23, 0
      %p192 = por %p190, %p191
      %s193 = ssub.s32 %s25, %s32
      %p194 = scmp.eq.s32.totalorder %s193, 0
      %s196 = sadd.s32 %s195, 1
      %s197 = scalar_select %p194, %s195, %s196
      %p200 = pneg %p194
      %p201 = scmp.eq.s32.totalorder %s17, 1
      %p202 = por %p200, %p201
      %p203 = scmp.ne.s32.totalorder %s195, %s198
      %p204 = scmp.eq.s32.totalorder %s17, 0
      %p205 = por %p203, %p204
      %p206 = scmp.ne.s32.totalorder %s195, %s198
      %p207 = scmp.eq.s32.totalorder %s22, 1
      %p208 = por %p206, %p207
      %p209 = scmp.ne.s32.totalorder %s198, %s199
      %p210 = scmp.eq.s32.totalorder %s22, 0
      %p211 = por %p209, %p210
      %p212 = scmp.ne.s32.totalorder %s198, %s199
      %p213 = scmp.eq.s32.totalorder %s23, 1
      %p214 = por %p212, %p213
      %p216 = scmp.ne.s32.totalorder %s199, %s215
      %p217 = scmp.eq.s32.totalorder %s23, 0
      %p218 = por %p216, %p217
      %s219 = ssub.s32 %s25, %s32
      %p220 = scmp.eq.s32.totalorder %s219, 0
      %s222 = sadd.s32 %s221, 1
      %s223 = scalar_select %p220, %s221, %s222
      %p226 = pneg %p220
      %p227 = scmp.eq.s32.totalorder %s17, 1
      %p228 = por %p226, %p227
      %p229 = scmp.ne.s32.totalorder %s221, %s224
      %p230 = scmp.eq.s32.totalorder %s17, 0
      %p231 = por %p229, %p230
      %p232 = scmp.ne.s32.totalorder %s221, %s224
      %p233 = scmp.eq.s32.totalorder %s22, 1
      %p234 = por %p232, %p233
      %p235 = scmp.ne.s32.totalorder %s224, %s225
      %p236 = scmp.eq.s32.totalorder %s22, 0
      %p237 = por %p235, %p236
      %p238 = scmp.ne.s32.totalorder %s224, %s225
      %p239 = scmp.eq.s32.totalorder %s23, 1
      %p240 = por %p238, %p239
      %p242 = scmp.ne.s32.totalorder %s225, %s241
      %p243 = scmp.eq.s32.totalorder %s23, 0
      %p244 = por %p242, %p243
      %s245 = ssub.s32 %s24, %s36
      %p246 = scmp.eq.s32.totalorder %s245, 0
      %s248 = sadd.s32 %s247, 1
      %s249 = scalar_select %p246, %s247, %s248
      %p252 = pneg %p246
      %p253 = scmp.eq.s32.totalorder %s17, 1
      %p254 = por %p252, %p253
      %p255 = scmp.ne.s32.totalorder %s247, %s250
      %p256 = scmp.eq.s32.totalorder %s17, 0
      %p257 = por %p255, %p256
      %p258 = scmp.ne.s32.totalorder %s247, %s250
      %p259 = scmp.eq.s32.totalorder %s22, 1
      %p260 = por %p258, %p259
      %p261 = scmp.ne.s32.totalorder %s250, %s251
      %p262 = scmp.eq.s32.totalorder %s22, 0
      %p263 = por %p261, %p262
      %p264 = scmp.ne.s32.totalorder %s250, %s251
      %p265 = scmp.eq.s32.totalorder %s23, 1
      %p266 = por %p264, %p265
      %p268 = scmp.ne.s32.totalorder %s251, %s267
      %p269 = scmp.eq.s32.totalorder %s23, 0
      %p270 = por %p268, %p269
      %p271 = scmp.le.s32.totalorder 1, %s17
      %p272 = scmp.lt.s32.totalorder %s17, 3
      %p273 = pnand %p271, %p272
      %p274 = pneg %p273
      // Predicated region
      $region9: #{tpu_custom_call.1} parent=5 // pred_check
        _
      $region10: #{tpu_custom_call.1} parent=5 // pred_check_branch
        %276 = sbr.rel (%p273) target = $region12
      $region11: #{tpu_custom_call.1} parent=5 // pred_region
        %s277 = ssub.s32 %s17, 1
        // Predicated region
        $region13: #{tpu_custom_call.1} parent=11 // pred_check
          %p278 = pneg %p55
        $region14: #{tpu_custom_call.1} parent=11 // pred_check_branch
          %280 = sbr.rel (%p278) target = $region16
        $region15: #{tpu_custom_call.1} parent=11 // pred_region
          %s281 = smul.u32 2, %s26
          %s283 = ssub.s32 256, 256
          %284 = vsyncadd [#allocation4], %s283
          %s285 = smul.addr %s281, 128
          %s286 = scalar_lea.hbm %s0, %s285
          %s287 = sshll.u32 [#allocation3], 4
          %s288 = int_to_ptr.vmem [resolvable:$true] %s287
          %293 = dma.hbm_to_vmem [thread:$0]  %s286, 256, %s288, [#allocation4], 128, 128, 8
        $region16: #{tpu_custom_call.1} parent=11 // pred_fallthru
          _
        // Predicated region
        $region17: #{tpu_custom_call.1} parent=11 // pred_check
          %p294 = pneg %p81
        $region18: #{tpu_custom_call.1} parent=11 // pred_check_branch
          %296 = sbr.rel (%p294) target = $region20
        $region19: #{tpu_custom_call.1} parent=11 // pred_region
          %s297 = smul.u32 2, %s26
          %s299 = ssub.s32 256, 256
          %300 = vsyncadd [#allocation7], %s299
          %s301 = smul.addr %s297, 128
          %s302 = scalar_lea.hbm %s1, %s301
          %s303 = sshll.u32 [#allocation6], 4
          %s304 = int_to_ptr.vmem [resolvable:$true] %s303
          %309 = dma.hbm_to_vmem [thread:$0]  %s302, 256, %s304, [#allocation7], 128, 128, 8
        $region20: #{tpu_custom_call.1} parent=11 // pred_fallthru
          _
      $region12: #{tpu_custom_call.1} parent=5 // pred_fallthru
        _
      %p310 = scmp.lt.s32.totalorder %s17, 2
      // Predicated region
      $region21: #{tpu_custom_call.1} parent=5 // pred_check
        %p311 = pneg %p310
      $region22: #{tpu_custom_call.1} parent=5 // pred_check_branch
        %313 = sbr.rel (%p311) target = $region24
      $region23: #{tpu_custom_call.1} parent=5 // pred_region
        // Predicated region
        $region25: #{tpu_custom_call.1} parent=23 // pred_check
          %p314 = pneg %p101
        $region26: #{tpu_custom_call.1} parent=23 // pred_check_branch
          %316 = sbr.rel (%p314) target = $region28
        $region27: #{tpu_custom_call.1} parent=23 // pred_region
          %p317 = scmp.lt.s32.totalorder %s25, 1
          %s318 = scalar_select %p317, %s25, 1
          %s319 = smul.addr %s318, 8
          %s320 = scalar_lea.vmem %s2, %s319
        $region28: #{tpu_custom_call.1} parent=23 // pred_fallthru
          _
        // Predicated region
        $region29: #{tpu_custom_call.1} parent=23 // pred_check
          %p321 = pneg %p127
        $region30: #{tpu_custom_call.1} parent=23 // pred_check_branch
          %323 = sbr.rel (%p321) target = $region32
        $region31: #{tpu_custom_call.1} parent=23 // pred_region
          %p324 = scmp.lt.s32.totalorder %s25, 1
          %s325 = scalar_select %p324, %s25, 1
          %s326 = scalar_lea.vmem %s3, %s325
        $region32: #{tpu_custom_call.1} parent=23 // pred_fallthru
          _
        // Predicated region
        $region33: #{tpu_custom_call.1} parent=23 // pred_check
          %p327 = pneg %p153
        $region34: #{tpu_custom_call.1} parent=23 // pred_check_branch
          %329 = sbr.rel (%p327) target = $region36
        $region35: #{tpu_custom_call.1} parent=23 // pred_region
          %p330 = scmp.lt.s32.totalorder %s25, 1
          %s331 = scalar_select %p330, %s25, 1
          %s332 = smul.addr %s331, 12
          %s333 = smul.addr %s332, 4
          %s334 = scalar_lea.vmem %s4, %s333
        $region36: #{tpu_custom_call.1} parent=23 // pred_fallthru
          _
        // Predicated region
        $region37: #{tpu_custom_call.1} parent=23 // pred_check
          %p335 = pneg %p179
        $region38: #{tpu_custom_call.1} parent=23 // pred_check_branch
          %337 = sbr.rel (%p335) target = $region40
        $region39: #{tpu_custom_call.1} parent=23 // pred_region
          %p338 = scmp.lt.s32.totalorder %s25, 1
          %s339 = scalar_select %p338, %s25, 1
          %s340 = smul.addr %s339, 4
          %s341 = smul.addr %s340, 4
          %s342 = scalar_lea.vmem %s5, %s341
        $region40: #{tpu_custom_call.1} parent=23 // pred_fallthru
          _
        // Predicated region
        $region41: #{tpu_custom_call.1} parent=23 // pred_check
          %p343 = pneg %p205
        $region42: #{tpu_custom_call.1} parent=23 // pred_check_branch
          %345 = sbr.rel (%p343) target = $region44
        $region43: #{tpu_custom_call.1} parent=23 // pred_region
          %p346 = scmp.lt.s32.totalorder %s25, 1
          %s347 = scalar_select %p346, %s25, 1
          %s348 = smul.addr %s347, 4
          %s349 = smul.addr %s348, 4
          %s350 = scalar_lea.vmem %s6, %s349
        $region44: #{tpu_custom_call.1} parent=23 // pred_fallthru
          _
        // Predicated region
        $region45: #{tpu_custom_call.1} parent=23 // pred_check
          %p351 = pneg %p231
        $region46: #{tpu_custom_call.1} parent=23 // pred_check_branch
          %353 = sbr.rel (%p351) target = $region48
        $region47: #{tpu_custom_call.1} parent=23 // pred_region
          %p354 = scmp.lt.s32.totalorder %s25, 1
          %s355 = scalar_select %p354, %s25, 1
          %s356 = smul.addr %s355, 16
          %s357 = smul.addr %s356, 4
          %s358 = scalar_lea.vmem %s7, %s357
        $region48: #{tpu_custom_call.1} parent=23 // pred_fallthru
          _
      $region24: #{tpu_custom_call.1} parent=5 // pred_fallthru
        _
      %p359 = scmp.le.s32.totalorder 1, %s17
      %p360 = scmp.lt.s32.totalorder %s17, 3
      %p361 = pnand %p359, %p360
      %p362 = pneg %p361
      // Predicated region
      $region49: #{tpu_custom_call.1} parent=5 // pred_check
        _
      $region50: #{tpu_custom_call.1} parent=5 // pred_check_branch
        %364 = sbr.rel (%p361) target = $region52
      $region51: #{tpu_custom_call.1} parent=5 // pred_region
        %s365 = ssub.s32 %s17, 1
        // Predicated region
        $region53: #{tpu_custom_call.1} parent=51 // pred_check
          %p366 = pneg %p55
        $region54: #{tpu_custom_call.1} parent=51 // pred_check_branch
          %368 = sbr.rel (%p366) target = $region56
        $region55: #{tpu_custom_call.1} parent=51 // pred_region
          %369 = dma.done [#allocation4], 256
        $region56: #{tpu_custom_call.1} parent=51 // pred_fallthru
          _
        // Predicated region
        $region57: #{tpu_custom_call.1} parent=51 // pred_check
          %p370 = pneg %p81
        $region58: #{tpu_custom_call.1} parent=51 // pred_check_branch
          %372 = sbr.rel (%p370) target = $region60
        $region59: #{tpu_custom_call.1} parent=51 // pred_region
          %373 = dma.done [#allocation7], 256
        $region60: #{tpu_custom_call.1} parent=51 // pred_fallthru
          _
        %p374 = pneg %p55
        %p375 = pneg %p52
        %p376 = pneg %p81
        %p377 = pneg %p78
        %p378 = scmp.lt.s32.totalorder %s27, 1
        %s379 = scalar_select %p378, %s27, 1
        %s380 = smul.addr %s379, 8
        %s381 = scalar_lea.vmem %s2, %s380
        %p382 = pneg %p107
        %p383 = pneg %p104
        %p384 = scmp.lt.s32.totalorder %s27, 1
        %s385 = scalar_select %p384, %s27, 1
        %s386 = scalar_lea.vmem %s3, %s385
        %p387 = pneg %p133
        %p388 = pneg %p130
        %p389 = scmp.lt.s32.totalorder %s27, 1
        %s390 = scalar_select %p389, %s27, 1
        %s391 = smul.addr %s390, 12
        %s392 = smul.addr %s391, 4
        %s393 = scalar_lea.vmem %s4, %s392
        %p394 = pneg %p159
        %p395 = pneg %p156
        %p396 = scmp.lt.s32.totalorder %s27, 1
        %s397 = scalar_select %p396, %s27, 1
        %s398 = smul.addr %s397, 4
        %s399 = smul.addr %s398, 4
        %s400 = scalar_lea.vmem %s5, %s399
        %p401 = pneg %p185
        %p402 = pneg %p182
        %p403 = scmp.lt.s32.totalorder %s27, 1
        %s404 = scalar_select %p403, %s27, 1
        %s405 = smul.addr %s404, 4
        %s406 = smul.addr %s405, 4
        %s407 = scalar_lea.vmem %s6, %s406
        %p408 = pneg %p211
        %p409 = pneg %p208
        %p410 = scmp.lt.s32.totalorder %s27, 1
        %s411 = scalar_select %p410, %s27, 1
        %s412 = smul.addr %s411, 16
        %s413 = smul.addr %s412, 4
        %s414 = scalar_lea.vmem %s7, %s413
        %p415 = pneg %p237
        %p416 = pneg %p234
        %p417 = pneg %p263
        %p418 = pneg %p260
        %s419 = smul.u32 2, %s26
        %s420 = smul.u32 2, %s26
        %p421 = scmp.lt.s32.totalorder %s27, 1
        %s422 = scalar_select %p421, %s27, 1
        %s423 = smul.addr %s422, 8
        %s424 = scalar_lea.vmem %s2, %s423
        %p425 = scmp.lt.s32.totalorder %s27, 1
        %s426 = scalar_select %p425, %s27, 1
        %s427 = scalar_lea.vmem %s3, %s426
        %p428 = scmp.lt.s32.totalorder %s27, 1
        %s429 = scalar_select %p428, %s27, 1
        %s430 = smul.addr %s429, 12
        %s431 = smul.addr %s430, 4
        %s432 = scalar_lea.vmem %s4, %s431
        %p433 = scmp.lt.s32.totalorder %s27, 1
        %s434 = scalar_select %p433, %s27, 1
        %s435 = smul.addr %s434, 4
        %s436 = smul.addr %s435, 4
        %s437 = scalar_lea.vmem %s5, %s436
        %p438 = scmp.lt.s32.totalorder %s27, 1
        %s439 = scalar_select %p438, %s27, 1
        %s440 = smul.addr %s439, 4
        %s441 = smul.addr %s440, 4
        %s442 = scalar_lea.vmem %s6, %s441
        %p443 = scmp.lt.s32.totalorder %s27, 1
        %s444 = scalar_select %p443, %s27, 1
        %s445 = smul.addr %s444, 16
        %s446 = smul.addr %s445, 4
        %s447 = scalar_lea.vmem %s7, %s446
        %s448 = smul.u32 2, %s26
        %p450 = scmp.eq.s32.totalorder %s27, 0
        // Predicated region
        $region61: #{tpu_custom_call.1} parent=51 // pred_check
          %p451 = pneg %p450
        $region62: #{tpu_custom_call.1} parent=51 // pred_check_branch
          %453 = sbr.rel (%p451) target = $region64
        $region63: #{tpu_custom_call.1} parent=51 // pred_region
          %v454 = vld [vmem:[#allocation3] sm:$0xff]
          %v455 = vld [vmem:[#allocation3 + $0x8] sm:$0xff]
          %vm456 = vcmask 261120
          %457 = vst.msk [vmem:[#allocation2] sm:$0xff] %vm456, %v454
          %458 = vst.msk [vmem:[#allocation2 + $0x8] sm:$0xff] %vm456, %v455
        $region64: #{tpu_custom_call.1} parent=51 // pred_fallthru
          _
        %v459 = vld [vmem:[#allocation2] sm:$0xff]
        %v460 = vld [vmem:[#allocation2 + $0x8] sm:$0xff]
        %v461 = vld [vmem:[#allocation6] sm:$0xff]
        %v462 = vld [vmem:[#allocation6 + $0x8] sm:$0xff]
        %v463 = vld [vmem:[%s424] sm:$0x3f]
        %v464 = vld [vmem:[%s427] sm:$0x1]
        %vm465 = vcmask 261120
        %v466 = vsel %vm465, %v459, 0.0
        %467 = vadd.xlane.f32.xlu0 %v466
        %v468 = vpop.xlane.xlu0 %467
        %v469 = vsel %vm465, %v460, 0.0
        %470 = vadd.xlane.f32.xlu0 %v469
        %v471 = vpop.xlane.xlu0 %470
        %v472 = vrcp.pop 32.0
        %v473 = vmul.f32 %v468, %v472
        %v474 = vmul.f32 %v471, %v472
        %v475 = vsub.f32 %v459, %v473
        %v476 = vsub.f32 %v460, %v474
        %v477 = vmul.f32 %v475, %v475
        %v478 = vmul.f32 %v476, %v476
        %v479 = vsel %vm465, %v477, 0.0
        %480 = vadd.xlane.f32.xlu0 %v479
        %v481 = vpop.xlane.xlu0 %480
        %v482 = vsel %vm465, %v478, 0.0
        %483 = vadd.xlane.f32.xlu0 %v482
        %v484 = vpop.xlane.xlu0 %483
        %v485 = vmul.f32 %v481, %v472
        %v486 = vmul.f32 %v484, %v472
        %v487 = vadd.f32 %v485, 1e-05
        %v488 = vadd.f32 %v486, 1e-05
        %v489 = vrsqrt.pop %v487
        %v490 = vrsqrt.pop %v488
        %v491 = vmul.f32 %v475, %v489
        %v492 = vmul.f32 %v476, %v490
        %v493 = vlaneseq
        %v494 = vshrl.u32 %v493, 7
        %v495 = vsub.s32 0, %v494
        %v496 = vrot.slane %v463, %v495
        %v497 = vmul.f32 %v491, %v496
        %v498 = vmul.f32 %v492, %v496
        %v499 = vlaneseq
        %v500 = vshrl.u32 %v499, 7
        %v501 = vsub.s32 1, %v500
        %v502 = vrot.slane %v463, %v501
        %v503 = vadd.f32 %v497, %v502
        %v504 = vadd.f32 %v498, %v502
        %v505 = vmul.f32 %v461, %v503
        %v506 = vmul.f32 %v462, %v504
        %v507 = vpack.c.bf16 %v506, %v505
        %v508 = vld [vmem:[%s432] sm:$0xf]
        %v509 = vld [vmem:[%s432 + $0x4] sm:$0xf]
        %v510 = vld [vmem:[%s432 + $0x8] sm:$0xf]
        %v511 = vld [vmem:[%s432 + $0xc] sm:$0xf]
        %v512 = vld [vmem:[%s432 + $0x10] sm:$0xf]
        %v513 = vld [vmem:[%s432 + $0x14] sm:$0xf]
        %v514 = vld [vmem:[%s432 + $0x18] sm:$0xf]
        %v515 = vld [vmem:[%s432 + $0x1c] sm:$0xf]
        %v516 = vld [vmem:[%s432 + $0x20] sm:$0xf]
        %v517 = vld [vmem:[%s432 + $0x24] sm:$0xf]
        %v518 = vld [vmem:[%s432 + $0x28] sm:$0xf]
        %v519 = vld [vmem:[%s432 + $0x2c] sm:$0xf]
        %v524 = vunpack.c.l.b16 %v508
        %v525 = vunpack.c.l.b16 %v509
        %v526 = vunpack.c.l.b16 %v510
        %v527 = vunpack.c.l.b16 %v511
        %v528 = vpack.c.b16 %v525, %v524
        %v529 = vpack.c.b16 %v527, %v526
        %v533 = vsel %vm465, %v507, 0
        %535 = vmatprep.subr.bf16.mxu0 0
        %536 = vmatpush1.bf16.msra.mxu0 0
        %537 = vmatprep.subr.bf16.mxu0 0
        %538 = vmatpush1.bf16.msra.mxu0 0
        %539 = vmatprep.subr.bf16.mxu0 0
        %540 = vmatpush1.bf16.msra.mxu0 0
        %541 = vmatprep.subr.bf16.mxu0 0
        %542 = vmatpush1.bf16.msra.mxu0 0
        %543 = vmatprep.subr.bf16.mxu0 0
        %544 = vmatpush1.bf16.msra.mxu0 0
        %545 = vmatprep.subr.bf16.mxu0 0
        %546 = vmatpush1.bf16.msra.mxu0 0
        %547 = vmatprep.subr.bf16.mxu0 0
        %548 = vmatpush1.bf16.msra.mxu0 %v529
        %549 = vmatprep.subr.bf16.mxu0 0
        %550 = vmatpush1.bf16.msra.mxu0 %v528
        %551 = vmatprep.subr.bf16.mxu0 0
        %552 = vmatpush2.bf16.msra.mxu0 0
        %553 = vmatprep.subr.bf16.mxu0 0
        %554 = vmatpush2.bf16.msra.mxu0 0
        %555 = vmatprep.subr.bf16.mxu0 0
        %556 = vmatpush2.bf16.msra.mxu0 0
        %557 = vmatprep.subr.bf16.mxu0 0
        %558 = vmatpush2.bf16.msra.mxu0 0
        %559 = vmatprep.subr.bf16.mxu0 0
        %560 = vmatpush2.bf16.msra.mxu0 0
        %561 = vmatprep.subr.bf16.mxu0 0
        %562 = vmatpush2.bf16.msra.mxu0 0
        %563 = vmatprep.subr.bf16.mxu0 0
        %564 = vmatpush2.bf16.msra.mxu0 0
        %565 = vmatprep.subr.bf16.mxu0 0
        %566 = vmatpush2.bf16.msra.mxu0 0
        %567 = vmatprep.mubr.bf16.mxu0 0
        %568 = vmatmul.mubr.bf16.gmra.mxu0 %v533
        %v569 = vpop.f32.mrf.mxu0
        %v570 = vadd.f32 0.0, %v569
        %v571 = vpop.f32.mrf.mxu0
        %v572 = vpop.f32.mrf.mxu0
        %v573 = vadd.f32 0.0, %v572
        %v574 = vpop.f32.mrf.mxu0
        %575 = vdwg.mxu0
        %v580 = vunpack.c.l.b16 %v512
        %v581 = vunpack.c.l.b16 %v513
        %v582 = vunpack.c.l.b16 %v514
        %v583 = vunpack.c.l.b16 %v515
        %v584 = vpack.c.b16 %v581, %v580
        %v585 = vpack.c.b16 %v583, %v582
        %588 = vmatprep.subr.bf16.mxu0 0
        %589 = vmatpush1.bf16.msra.mxu0 0
        %590 = vmatprep.subr.bf16.mxu0 0
        %591 = vmatpush1.bf16.msra.mxu0 0
        %592 = vmatprep.subr.bf16.mxu0 0
        %593 = vmatpush1.bf16.msra.mxu0 0
        %594 = vmatprep.subr.bf16.mxu0 0
        %595 = vmatpush1.bf16.msra.mxu0 0
        %596 = vmatprep.subr.bf16.mxu0 0
        %597 = vmatpush1.bf16.msra.mxu0 0
        %598 = vmatprep.subr.bf16.mxu0 0
        %599 = vmatpush1.bf16.msra.mxu0 0
        %600 = vmatprep.subr.bf16.mxu0 0
        %601 = vmatpush1.bf16.msra.mxu0 %v585
        %602 = vmatprep.subr.bf16.mxu0 0
        %603 = vmatpush1.bf16.msra.mxu0 %v584
        %604 = vmatprep.subr.bf16.mxu0 0
        %605 = vmatpush2.bf16.msra.mxu0 0
        %606 = vmatprep.subr.bf16.mxu0 0
        %607 = vmatpush2.bf16.msra.mxu0 0
        %608 = vmatprep.subr.bf16.mxu0 0
        %609 = vmatpush2.bf16.msra.mxu0 0
        %610 = vmatprep.subr.bf16.mxu0 0
        %611 = vmatpush2.bf16.msra.mxu0 0
        %612 = vmatprep.subr.bf16.mxu0 0
        %613 = vmatpush2.bf16.msra.mxu0 0
        %614 = vmatprep.subr.bf16.mxu0 0
        %615 = vmatpush2.bf16.msra.mxu0 0
        %616 = vmatprep.subr.bf16.mxu0 0
        %617 = vmatpush2.bf16.msra.mxu0 0
        %618 = vmatprep.subr.bf16.mxu0 0
        %619 = vmatpush2.bf16.msra.mxu0 0
        %620 = vmatprep.mubr.bf16.mxu0 0
        %621 = vmatmul.mubr.bf16.gmra.mxu0 %v533
        %v622 = vpop.f32.mrf.mxu0
        %v623 = vadd.f32 0.0, %v622
        %v624 = vpop.f32.mrf.mxu0
        %v625 = vpop.f32.mrf.mxu0
        %v626 = vadd.f32 0.0, %v625
        %v627 = vpop.f32.mrf.mxu0
        %628 = vdwg.mxu0
        %v633 = vunpack.c.l.b16 %v516
        %v634 = vunpack.c.l.b16 %v517
        %v635 = vunpack.c.l.b16 %v518
        %v636 = vunpack.c.l.b16 %v519
        %v637 = vpack.c.b16 %v634, %v633
        %v638 = vpack.c.b16 %v636, %v635
        %641 = vmatprep.subr.bf16.mxu0 0
        %642 = vmatpush1.bf16.msra.mxu0 0
        %643 = vmatprep.subr.bf16.mxu0 0
        %644 = vmatpush1.bf16.msra.mxu0 0
        %645 = vmatprep.subr.bf16.mxu0 0
        %646 = vmatpush1.bf16.msra.mxu0 0
        %647 = vmatprep.subr.bf16.mxu0 0
        %648 = vmatpush1.bf16.msra.mxu0 0
        %649 = vmatprep.subr.bf16.mxu0 0
        %650 = vmatpush1.bf16.msra.mxu0 0
        %651 = vmatprep.subr.bf16.mxu0 0
        %652 = vmatpush1.bf16.msra.mxu0 0
        %653 = vmatprep.subr.bf16.mxu0 0
        %654 = vmatpush1.bf16.msra.mxu0 %v638
        %655 = vmatprep.subr.bf16.mxu0 0
        %656 = vmatpush1.bf16.msra.mxu0 %v637
        %657 = vmatprep.subr.bf16.mxu0 0
        %658 = vmatpush2.bf16.msra.mxu0 0
        %659 = vmatprep.subr.bf16.mxu0 0
        %660 = vmatpush2.bf16.msra.mxu0 0
        %661 = vmatprep.subr.bf16.mxu0 0
        %662 = vmatpush2.bf16.msra.mxu0 0
        %663 = vmatprep.subr.bf16.mxu0 0
        %664 = vmatpush2.bf16.msra.mxu0 0
        %665 = vmatprep.subr.bf16.mxu0 0
        %666 = vmatpush2.bf16.msra.mxu0 0
        %667 = vmatprep.subr.bf16.mxu0 0
        %668 = vmatpush2.bf16.msra.mxu0 0
        %669 = vmatprep.subr.bf16.mxu0 0
        %670 = vmatpush2.bf16.msra.mxu0 0
        %671 = vmatprep.subr.bf16.mxu0 0
        %672 = vmatpush2.bf16.msra.mxu0 0
        %673 = vmatprep.mubr.bf16.mxu0 0
        %674 = vmatmul.mubr.bf16.gmra.mxu0 %v533
        %v675 = vpop.f32.mrf.mxu0
        %v676 = vadd.f32 0.0, %v675
        %v677 = vpop.f32.mrf.mxu0
        %v678 = vpop.f32.mrf.mxu0
        %v679 = vadd.f32 0.0, %v678
        %v680 = vpop.f32.mrf.mxu0
        %681 = vdwg.mxu0
        %v682 = vpack.c.bf16 %v573, %v570
        %v683 = vpack.c.bf16 %v626, %v623
        %v684 = vpack.c.bf16 %v679, %v676
        %v686 = vunpack.c.l.b16 %v682
        %v687 = vunpack.c.h.b16 %v682
        %v688 = vpack.c.b16 %v686, %v686
        %v689 = vpack.c.b16 %v687, %v687
        %v691 = vunpack.c.l.b16 %v683
        %v692 = vunpack.c.h.b16 %v683
        %v693 = vpack.c.b16 %v691, %v691
        %v694 = vpack.c.b16 %v692, %v692
        %v696 = vunpack.c.l.b16 %v684
        %v697 = vunpack.c.h.b16 %v684
        %v698 = vpack.c.b16 %v696, %v696
        %v699 = vpack.c.b16 %v697, %v697
        %vm700 = vcmask 31744
        %v702 = vsel %vm700, %v688, 0
        %v705 = vsel %vm700, %v693, 0
        %707 = vmatprep.subr.bf16.mxu0 0
        %708 = vmatpush1.bf16.xpose.msra.mxu0 0
        %709 = vmatprep.subr.bf16.mxu0 0
        %710 = vmatpush1.bf16.xpose.msra.mxu0 0
        %711 = vmatprep.subr.bf16.mxu0 0
        %712 = vmatpush1.bf16.xpose.msra.mxu0 0
        %713 = vmatprep.subr.bf16.mxu0 0
        %714 = vmatpush1.bf16.xpose.msra.mxu0 0
        %715 = vmatprep.subr.bf16.mxu0 0
        %716 = vmatpush1.bf16.xpose.msra.mxu0 0
        %717 = vmatprep.subr.bf16.mxu0 0
        %718 = vmatpush1.bf16.xpose.msra.mxu0 0
        %719 = vmatprep.subr.bf16.mxu0 0
        %720 = vmatpush1.bf16.xpose.msra.mxu0 0
        %721 = vmatprep.subr.bf16.mxu0 0
        %722 = vmatpush1.bf16.xpose.msra.mxu0 %v705
        %723 = vmatprep.subr.bf16.mxu0 0
        %724 = vmatpush2.bf16.xpose.msra.mxu0 0
        %725 = vmatprep.subr.bf16.mxu0 0
        %726 = vmatpush2.bf16.xpose.msra.mxu0 0
        %727 = vmatprep.subr.bf16.mxu0 0
        %728 = vmatpush2.bf16.xpose.msra.mxu0 0
        %729 = vmatprep.subr.bf16.mxu0 0
        %730 = vmatpush2.bf16.xpose.msra.mxu0 0
        %731 = vmatprep.subr.bf16.mxu0 0
        %732 = vmatpush2.bf16.xpose.msra.mxu0 0
        %733 = vmatprep.subr.bf16.mxu0 0
        %734 = vmatpush2.bf16.xpose.msra.mxu0 0
        %735 = vmatprep.subr.bf16.mxu0 0
        %736 = vmatpush2.bf16.xpose.msra.mxu0 0
        %737 = vmatprep.subr.bf16.mxu0 0
        %738 = vmatpush2.bf16.xpose.msra.mxu0 0
        %739 = vmatprep.mubr.bf16.mxu0 0
        %740 = vmatmul.mubr.bf16.gmra.mxu0 %v702
        %v741 = vpop.f32.mrf.mxu0
        %v742 = vadd.f32 0.0, %v741
        %v743 = vpop.f32.mrf.mxu0
        %v744 = vpop.f32.mrf.mxu0
        %v745 = vpop.f32.mrf.mxu0
        %746 = vdwg.mxu0
        %v748 = vsel %vm700, %v689, 0
        %v751 = vsel %vm700, %v694, 0
        %753 = vmatprep.subr.bf16.mxu0 0
        %754 = vmatpush1.bf16.xpose.msra.mxu0 0
        %755 = vmatprep.subr.bf16.mxu0 0
        %756 = vmatpush1.bf16.xpose.msra.mxu0 0
        %757 = vmatprep.subr.bf16.mxu0 0
        %758 = vmatpush1.bf16.xpose.msra.mxu0 0
        %759 = vmatprep.subr.bf16.mxu0 0
        %760 = vmatpush1.bf16.xpose.msra.mxu0 0
        %761 = vmatprep.subr.bf16.mxu0 0
        %762 = vmatpush1.bf16.xpose.msra.mxu0 0
        %763 = vmatprep.subr.bf16.mxu0 0
        %764 = vmatpush1.bf16.xpose.msra.mxu0 0
        %765 = vmatprep.subr.bf16.mxu0 0
        %766 = vmatpush1.bf16.xpose.msra.mxu0 0
        %767 = vmatprep.subr.bf16.mxu0 0
        %768 = vmatpush1.bf16.xpose.msra.mxu0 %v751
        %769 = vmatprep.subr.bf16.mxu0 0
        %770 = vmatpush2.bf16.xpose.msra.mxu0 0
        %771 = vmatprep.subr.bf16.mxu0 0
        %772 = vmatpush2.bf16.xpose.msra.mxu0 0
        %773 = vmatprep.subr.bf16.mxu0 0
        %774 = vmatpush2.bf16.xpose.msra.mxu0 0
        %775 = vmatprep.subr.bf16.mxu0 0
        %776 = vmatpush2.bf16.xpose.msra.mxu0 0
        %777 = vmatprep.subr.bf16.mxu0 0
        %778 = vmatpush2.bf16.xpose.msra.mxu0 0
        %779 = vmatprep.subr.bf16.mxu0 0
        %780 = vmatpush2.bf16.xpose.msra.mxu0 0
        %781 = vmatprep.subr.bf16.mxu0 0
        %782 = vmatpush2.bf16.xpose.msra.mxu0 0
        %783 = vmatprep.subr.bf16.mxu0 0
        %784 = vmatpush2.bf16.xpose.msra.mxu0 0
        %785 = vmatprep.mubr.bf16.mxu0 0
        %786 = vmatmul.mubr.bf16.gmra.mxu0 %v748
        %v787 = vpop.f32.mrf.mxu0
        %v788 = vadd.f32 0.0, %v787
        %v789 = vpop.f32.mrf.mxu0
        %v790 = vpop.f32.mrf.mxu0
        %v791 = vpop.f32.mrf.mxu0
        %792 = vdwg.mxu0
        %vm793 = vcmask 64512
        %v794 = vsel %vm793, %v742, -inf
        %795 = vmax.xlane.f32.xlu0 %v794
        %v796 = vpop.xlane.xlu0 %795
        %v797 = vsel %vm793, %v788, -inf
        %798 = vmax.xlane.f32.xlu0 %v797
        %v799 = vpop.xlane.xlu0 %798
        %v800 = vsub.f32 %v742, %v796
        %v801 = vsub.f32 %v788, %v799
        %v802 = vmul.f32 %v800, 1.442695
        %v803 = vpow.pop %v802
        %v804 = vmul.f32 %v801, 1.442695
        %v805 = vpow.pop %v804
        %v806 = vsel %vm793, %v803, 0.0
        %807 = vadd.xlane.f32.xlu0 %v806
        %v808 = vpop.xlane.xlu0 %807
        %v809 = vsel %vm793, %v805, 0.0
        %810 = vadd.xlane.f32.xlu0 %v809
        %v811 = vpop.xlane.xlu0 %810
        %v812 = vrcp.pop %v808
        %v813 = vmul.f32 %v803, %v812
        %v814 = vrcp.pop %v811
        %v815 = vmul.f32 %v805, %v814
        %v816 = vpack.c.bf16 %v813, %v813
        %v817 = vpack.c.bf16 %v815, %v815
        %v819 = vsel %vm793, %v816, 0
        %vm821 = vcmask 1043456
        %v823 = vsel %vm821, %v698, 0
        %825 = vmatprep.subr.bf16.mxu0 0
        %826 = vmatpush1.bf16.msra.mxu0 0
        %827 = vmatprep.subr.bf16.mxu0 0
        %828 = vmatpush1.bf16.msra.mxu0 0
        %829 = vmatprep.subr.bf16.mxu0 0
        %830 = vmatpush1.bf16.msra.mxu0 0
        %831 = vmatprep.subr.bf16.mxu0 0
        %832 = vmatpush1.bf16.msra.mxu0 0
        %833 = vmatprep.subr.bf16.mxu0 0
        %834 = vmatpush1.bf16.msra.mxu0 0
        %835 = vmatprep.subr.bf16.mxu0 0
        %836 = vmatpush1.bf16.msra.mxu0 0
        %837 = vmatprep.subr.bf16.mxu0 0
        %838 = vmatpush1.bf16.msra.mxu0 0
        %839 = vmatprep.subr.bf16.mxu0 0
        %840 = vmatpush1.bf16.msra.mxu0 %v823
        %841 = vmatprep.subr.bf16.mxu0 0
        %842 = vmatpush2.bf16.msra.mxu0 0
        %843 = vmatprep.subr.bf16.mxu0 0
        %844 = vmatpush2.bf16.msra.mxu0 0
        %845 = vmatprep.subr.bf16.mxu0 0
        %846 = vmatpush2.bf16.msra.mxu0 0
        %847 = vmatprep.subr.bf16.mxu0 0
        %848 = vmatpush2.bf16.msra.mxu0 0
        %849 = vmatprep.subr.bf16.mxu0 0
        %850 = vmatpush2.bf16.msra.mxu0 0
        %851 = vmatprep.subr.bf16.mxu0 0
        %852 = vmatpush2.bf16.msra.mxu0 0
        %853 = vmatprep.subr.bf16.mxu0 0
        %854 = vmatpush2.bf16.msra.mxu0 0
        %855 = vmatprep.subr.bf16.mxu0 0
        %856 = vmatpush2.bf16.msra.mxu0 0
        %857 = vmatprep.mubr.bf16.mxu0 0
        %858 = vmatmul.mubr.bf16.gmra.mxu0 %v819
        %v859 = vpop.f32.mrf.mxu0
        %v860 = vadd.f32 0.0, %v859
        %v861 = vpop.f32.mrf.mxu0
        %v862 = vpop.f32.mrf.mxu0
        %v863 = vpop.f32.mrf.mxu0
        %864 = vdwg.mxu0
        %v866 = vsel %vm793, %v817, 0
        %v869 = vsel %vm821, %v699, 0
        %871 = vmatprep.subr.bf16.mxu0 0
        %872 = vmatpush1.bf16.msra.mxu0 0
        %873 = vmatprep.subr.bf16.mxu0 0
        %874 = vmatpush1.bf16.msra.mxu0 0
        %875 = vmatprep.subr.bf16.mxu0 0
        %876 = vmatpush1.bf16.msra.mxu0 0
        %877 = vmatprep.subr.bf16.mxu0 0
        %878 = vmatpush1.bf16.msra.mxu0 0
        %879 = vmatprep.subr.bf16.mxu0 0
        %880 = vmatpush1.bf16.msra.mxu0 0
        %881 = vmatprep.subr.bf16.mxu0 0
        %882 = vmatpush1.bf16.msra.mxu0 0
        %883 = vmatprep.subr.bf16.mxu0 0
        %884 = vmatpush1.bf16.msra.mxu0 0
        %885 = vmatprep.subr.bf16.mxu0 0
        %886 = vmatpush1.bf16.msra.mxu0 %v869
        %887 = vmatprep.subr.bf16.mxu0 0
        %888 = vmatpush2.bf16.msra.mxu0 0
        %889 = vmatprep.subr.bf16.mxu0 0
        %890 = vmatpush2.bf16.msra.mxu0 0
        %891 = vmatprep.subr.bf16.mxu0 0
        %892 = vmatpush2.bf16.msra.mxu0 0
        %893 = vmatprep.subr.bf16.mxu0 0
        %894 = vmatpush2.bf16.msra.mxu0 0
        %895 = vmatprep.subr.bf16.mxu0 0
        %896 = vmatpush2.bf16.msra.mxu0 0
        %897 = vmatprep.subr.bf16.mxu0 0
        %898 = vmatpush2.bf16.msra.mxu0 0
        %899 = vmatprep.subr.bf16.mxu0 0
        %900 = vmatpush2.bf16.msra.mxu0 0
        %901 = vmatprep.subr.bf16.mxu0 0
        %902 = vmatpush2.bf16.msra.mxu0 0
        %903 = vmatprep.mubr.bf16.mxu0 0
        %904 = vmatmul.mubr.bf16.gmra.mxu0 %v866
        %v905 = vpop.f32.mrf.mxu0
        %v906 = vadd.f32 0.0, %v905
        %v907 = vpop.f32.mrf.mxu0
        %v908 = vpop.f32.mrf.mxu0
        %v909 = vpop.f32.mrf.mxu0
        %910 = vdwg.mxu0
        %911 = vrot.lane.b32.xlu0 %v688, 124
        %v912 = vpop.permute.xlu0 %911
        %913 = vrot.lane.b32.xlu0 %v693, 124
        %v914 = vpop.permute.xlu0 %913
        %v916 = vsel %vm700, %v912, 0
        %v919 = vsel %vm700, %v914, 0
        %921 = vmatprep.subr.bf16.mxu0 0
        %922 = vmatpush1.bf16.xpose.msra.mxu0 0
        %923 = vmatprep.subr.bf16.mxu0 0
        %924 = vmatpush1.bf16.xpose.msra.mxu0 0
        %925 = vmatprep.subr.bf16.mxu0 0
        %926 = vmatpush1.bf16.xpose.msra.mxu0 0
        %927 = vmatprep.subr.bf16.mxu0 0
        %928 = vmatpush1.bf16.xpose.msra.mxu0 0
        %929 = vmatprep.subr.bf16.mxu0 0
        %930 = vmatpush1.bf16.xpose.msra.mxu0 0
        %931 = vmatprep.subr.bf16.mxu0 0
        %932 = vmatpush1.bf16.xpose.msra.mxu0 0
        %933 = vmatprep.subr.bf16.mxu0 0
        %934 = vmatpush1.bf16.xpose.msra.mxu0 0
        %935 = vmatprep.subr.bf16.mxu0 0
        %936 = vmatpush1.bf16.xpose.msra.mxu0 %v919
        %937 = vmatprep.subr.bf16.mxu0 0
        %938 = vmatpush2.bf16.xpose.msra.mxu0 0
        %939 = vmatprep.subr.bf16.mxu0 0
        %940 = vmatpush2.bf16.xpose.msra.mxu0 0
        %941 = vmatprep.subr.bf16.mxu0 0
        %942 = vmatpush2.bf16.xpose.msra.mxu0 0
        %943 = vmatprep.subr.bf16.mxu0 0
        %944 = vmatpush2.bf16.xpose.msra.mxu0 0
        %945 = vmatprep.subr.bf16.mxu0 0
        %946 = vmatpush2.bf16.xpose.msra.mxu0 0
        %947 = vmatprep.subr.bf16.mxu0 0
        %948 = vmatpush2.bf16.xpose.msra.mxu0 0
        %949 = vmatprep.subr.bf16.mxu0 0
        %950 = vmatpush2.bf16.xpose.msra.mxu0 0
        %951 = vmatprep.subr.bf16.mxu0 0
        %952 = vmatpush2.bf16.xpose.msra.mxu0 0
        %953 = vmatprep.mubr.bf16.mxu0 0
        %954 = vmatmul.mubr.bf16.gmra.mxu0 %v916
        %v955 = vpop.f32.mrf.mxu0
        %v956 = vadd.f32 0.0, %v955
        %v957 = vpop.f32.mrf.mxu0
        %v958 = vpop.f32.mrf.mxu0
        %v959 = vpop.f32.mrf.mxu0
        %960 = vdwg.mxu0
        %961 = vrot.lane.b32.xlu0 %v689, 124
        %v962 = vpop.permute.xlu0 %961
        %963 = vrot.lane.b32.xlu0 %v694, 124
        %v964 = vpop.permute.xlu0 %963
        %v966 = vsel %vm700, %v962, 0
        %v969 = vsel %vm700, %v964, 0
        %971 = vmatprep.subr.bf16.mxu0 0
        %972 = vmatpush1.bf16.xpose.msra.mxu0 0
        %973 = vmatprep.subr.bf16.mxu0 0
        %974 = vmatpush1.bf16.xpose.msra.mxu0 0
        %975 = vmatprep.subr.bf16.mxu0 0
        %976 = vmatpush1.bf16.xpose.msra.mxu0 0
        %977 = vmatprep.subr.bf16.mxu0 0
        %978 = vmatpush1.bf16.xpose.msra.mxu0 0
        %979 = vmatprep.subr.bf16.mxu0 0
        %980 = vmatpush1.bf16.xpose.msra.mxu0 0
        %981 = vmatprep.subr.bf16.mxu0 0
        %982 = vmatpush1.bf16.xpose.msra.mxu0 0
        %983 = vmatprep.subr.bf16.mxu0 0
        %984 = vmatpush1.bf16.xpose.msra.mxu0 0
        %985 = vmatprep.subr.bf16.mxu0 0
        %986 = vmatpush1.bf16.xpose.msra.mxu0 %v969
        %987 = vmatprep.subr.bf16.mxu0 0
        %988 = vmatpush2.bf16.xpose.msra.mxu0 0
        %989 = vmatprep.subr.bf16.mxu0 0
        %990 = vmatpush2.bf16.xpose.msra.mxu0 0
        %991 = vmatprep.subr.bf16.mxu0 0
        %992 = vmatpush2.bf16.xpose.msra.mxu0 0
        %993 = vmatprep.subr.bf16.mxu0 0
        %994 = vmatpush2.bf16.xpose.msra.mxu0 0
        %995 = vmatprep.subr.bf16.mxu0 0
        %996 = vmatpush2.bf16.xpose.msra.mxu0 0
        %997 = vmatprep.subr.bf16.mxu0 0
        %998 = vmatpush2.bf16.xpose.msra.mxu0 0
        %999 = vmatprep.subr.bf16.mxu0 0
        %1000 = vmatpush2.bf16.xpose.msra.mxu0 0
        %1001 = vmatprep.subr.bf16.mxu0 0
        %1002 = vmatpush2.bf16.xpose.msra.mxu0 0
        %1003 = vmatprep.mubr.bf16.mxu0 0
        %1004 = vmatmul.mubr.bf16.gmra.mxu0 %v966
        %v1005 = vpop.f32.mrf.mxu0
        %v1006 = vadd.f32 0.0, %v1005
        %v1007 = vpop.f32.mrf.mxu0
        %v1008 = vpop.f32.mrf.mxu0
        %v1009 = vpop.f32.mrf.mxu0
        %1010 = vdwg.mxu0
        %v1011 = vsel %vm793, %v956, -inf
        %1012 = vmax.xlane.f32.xlu0 %v1011
        %v1013 = vpop.xlane.xlu0 %1012
        %v1014 = vsel %vm793, %v1006, -inf
        %1015 = vmax.xlane.f32.xlu0 %v1014
        %v1016 = vpop.xlane.xlu0 %1015
        %v1017 = vsub.f32 %v956, %v1013
        %v1018 = vsub.f32 %v1006, %v1016
        %v1019 = vmul.f32 %v1017, 1.442695
        %v1020 = vpow.pop %v1019
        %v1021 = vmul.f32 %v1018, 1.442695
        %v1022 = vpow.pop %v1021
        %v1023 = vsel %vm793, %v1020, 0.0
        %1024 = vadd.xlane.f32.xlu0 %v1023
        %v1025 = vpop.xlane.xlu0 %1024
        %v1026 = vsel %vm793, %v1022, 0.0
        %1027 = vadd.xlane.f32.xlu0 %v1026
        %v1028 = vpop.xlane.xlu0 %1027
        %v1029 = vrcp.pop %v1025
        %v1030 = vmul.f32 %v1020, %v1029
        %v1031 = vrcp.pop %v1028
        %v1032 = vmul.f32 %v1022, %v1031
        %v1033 = vpack.c.bf16 %v1030, %v1030
        %v1034 = vpack.c.bf16 %v1032, %v1032
        %1035 = vrot.lane.b32.xlu0 %v698, 124
        %v1036 = vpop.permute.xlu0 %1035
        %v1038 = vsel %vm793, %v1033, 0
        %v1041 = vsel %vm821, %v1036, 0
        %1043 = vmatprep.subr.bf16.mxu0 0
        %1044 = vmatpush1.bf16.msra.mxu0 0
        %1045 = vmatprep.subr.bf16.mxu0 0
        %1046 = vmatpush1.bf16.msra.mxu0 0
        %1047 = vmatprep.subr.bf16.mxu0 0
        %1048 = vmatpush1.bf16.msra.mxu0 0
        %1049 = vmatprep.subr.bf16.mxu0 0
        %1050 = vmatpush1.bf16.msra.mxu0 0
        %1051 = vmatprep.subr.bf16.mxu0 0
        %1052 = vmatpush1.bf16.msra.mxu0 0
        %1053 = vmatprep.subr.bf16.mxu0 0
        %1054 = vmatpush1.bf16.msra.mxu0 0
        %1055 = vmatprep.subr.bf16.mxu0 0
        %1056 = vmatpush1.bf16.msra.mxu0 0
        %1057 = vmatprep.subr.bf16.mxu0 0
        %1058 = vmatpush1.bf16.msra.mxu0 %v1041
        %1059 = vmatprep.subr.bf16.mxu0 0
        %1060 = vmatpush2.bf16.msra.mxu0 0
        %1061 = vmatprep.subr.bf16.mxu0 0
        %1062 = vmatpush2.bf16.msra.mxu0 0
        %1063 = vmatprep.subr.bf16.mxu0 0
        %1064 = vmatpush2.bf16.msra.mxu0 0
        %1065 = vmatprep.subr.bf16.mxu0 0
        %1066 = vmatpush2.bf16.msra.mxu0 0
        %1067 = vmatprep.subr.bf16.mxu0 0
        %1068 = vmatpush2.bf16.msra.mxu0 0
        %1069 = vmatprep.subr.bf16.mxu0 0
        %1070 = vmatpush2.bf16.msra.mxu0 0
        %1071 = vmatprep.subr.bf16.mxu0 0
        %1072 = vmatpush2.bf16.msra.mxu0 0
        %1073 = vmatprep.subr.bf16.mxu0 0
        %1074 = vmatpush2.bf16.msra.mxu0 0
        %1075 = vmatprep.mubr.bf16.mxu0 0
        %1076 = vmatmul.mubr.bf16.gmra.mxu0 %v1038
        %v1077 = vpop.f32.mrf.mxu0
        %v1078 = vadd.f32 0.0, %v1077
        %v1079 = vpop.f32.mrf.mxu0
        %v1080 = vpop.f32.mrf.mxu0
        %v1081 = vpop.f32.mrf.mxu0
        %1082 = vdwg.mxu0
        %1083 = vrot.lane.b32.xlu0 %v699, 124
        %v1084 = vpop.permute.xlu0 %1083
        %v1086 = vsel %vm793, %v1034, 0
        %v1089 = vsel %vm821, %v1084, 0
        %1091 = vmatprep.subr.bf16.mxu0 0
        %1092 = vmatpush1.bf16.msra.mxu0 0
        %1093 = vmatprep.subr.bf16.mxu0 0
        %1094 = vmatpush1.bf16.msra.mxu0 0
        %1095 = vmatprep.subr.bf16.mxu0 0
        %1096 = vmatpush1.bf16.msra.mxu0 0
        %1097 = vmatprep.subr.bf16.mxu0 0
        %1098 = vmatpush1.bf16.msra.mxu0 0
        %1099 = vmatprep.subr.bf16.mxu0 0
        %1100 = vmatpush1.bf16.msra.mxu0 0
        %1101 = vmatprep.subr.bf16.mxu0 0
        %1102 = vmatpush1.bf16.msra.mxu0 0
        %1103 = vmatprep.subr.bf16.mxu0 0
        %1104 = vmatpush1.bf16.msra.mxu0 0
        %1105 = vmatprep.subr.bf16.mxu0 0
        %1106 = vmatpush1.bf16.msra.mxu0 %v1089
        %1107 = vmatprep.subr.bf16.mxu0 0
        %1108 = vmatpush2.bf16.msra.mxu0 0
        %1109 = vmatprep.subr.bf16.mxu0 0
        %1110 = vmatpush2.bf16.msra.mxu0 0
        %1111 = vmatprep.subr.bf16.mxu0 0
        %1112 = vmatpush2.bf16.msra.mxu0 0
        %1113 = vmatprep.subr.bf16.mxu0 0
        %1114 = vmatpush2.bf16.msra.mxu0 0
        %1115 = vmatprep.subr.bf16.mxu0 0
        %1116 = vmatpush2.bf16.msra.mxu0 0
        %1117 = vmatprep.subr.bf16.mxu0 0
        %1118 = vmatpush2.bf16.msra.mxu0 0
        %1119 = vmatprep.subr.bf16.mxu0 0
        %1120 = vmatpush2.bf16.msra.mxu0 0
        %1121 = vmatprep.subr.bf16.mxu0 0
        %1122 = vmatpush2.bf16.msra.mxu0 0
        %1123 = vmatprep.mubr.bf16.mxu0 0
        %1124 = vmatmul.mubr.bf16.gmra.mxu0 %v1086
        %v1125 = vpop.f32.mrf.mxu0
        %v1126 = vadd.f32 0.0, %v1125
        %v1127 = vpop.f32.mrf.mxu0
        %v1128 = vpop.f32.mrf.mxu0
        %v1129 = vpop.f32.mrf.mxu0
        %1130 = vdwg.mxu0
        %1131 = vrot.lane.b32.xlu0 %v688, 120
        %v1132 = vpop.permute.xlu0 %1131
        %1133 = vrot.lane.b32.xlu0 %v693, 120
        %v1134 = vpop.permute.xlu0 %1133
        %v1136 = vsel %vm700, %v1132, 0
        %v1139 = vsel %vm700, %v1134, 0
        %1141 = vmatprep.subr.bf16.mxu0 0
        %1142 = vmatpush1.bf16.xpose.msra.mxu0 0
        %1143 = vmatprep.subr.bf16.mxu0 0
        %1144 = vmatpush1.bf16.xpose.msra.mxu0 0
        %1145 = vmatprep.subr.bf16.mxu0 0
        %1146 = vmatpush1.bf16.xpose.msra.mxu0 0
        %1147 = vmatprep.subr.bf16.mxu0 0
        %1148 = vmatpush1.bf16.xpose.msra.mxu0 0
        %1149 = vmatprep.subr.bf16.mxu0 0
        %1150 = vmatpush1.bf16.xpose.msra.mxu0 0
        %1151 = vmatprep.subr.bf16.mxu0 0
        %1152 = vmatpush1.bf16.xpose.msra.mxu0 0
        %1153 = vmatprep.subr.bf16.mxu0 0
        %1154 = vmatpush1.bf16.xpose.msra.mxu0 0
        %1155 = vmatprep.subr.bf16.mxu0 0
        %1156 = vmatpush1.bf16.xpose.msra.mxu0 %v1139
        %1157 = vmatprep.subr.bf16.mxu0 0
        %1158 = vmatpush2.bf16.xpose.msra.mxu0 0
        %1159 = vmatprep.subr.bf16.mxu0 0
        %1160 = vmatpush2.bf16.xpose.msra.mxu0 0
        %1161 = vmatprep.subr.bf16.mxu0 0
        %1162 = vmatpush2.bf16.xpose.msra.mxu0 0
        %1163 = vmatprep.subr.bf16.mxu0 0
        %1164 = vmatpush2.bf16.xpose.msra.mxu0 0
        %1165 = vmatprep.subr.bf16.mxu0 0
        %1166 = vmatpush2.bf16.xpose.msra.mxu0 0
        %1167 = vmatprep.subr.bf16.mxu0 0
        %1168 = vmatpush2.bf16.xpose.msra.mxu0 0
        %1169 = vmatprep.subr.bf16.mxu0 0
        %1170 = vmatpush2.bf16.xpose.msra.mxu0 0
        %1171 = vmatprep.subr.bf16.mxu0 0
        %1172 = vmatpush2.bf16.xpose.msra.mxu0 0
        %1173 = vmatprep.mubr.bf16.mxu0 0
        %1174 = vmatmul.mubr.bf16.gmra.mxu0 %v1136
        %v1175 = vpop.f32.mrf.mxu0
        %v1176 = vadd.f32 0.0, %v1175
        %v1177 = vpop.f32.mrf.mxu0
        %v1178 = vpop.f32.mrf.mxu0
        %v1179 = vpop.f32.mrf.mxu0
        %1180 = vdwg.mxu0
        %1181 = vrot.lane.b32.xlu0 %v689, 120
        %v1182 = vpop.permute.xlu0 %1181
        %1183 = vrot.lane.b32.xlu0 %v694, 120
        %v1184 = vpop.permute.xlu0 %1183
        %v1186 = vsel %vm700, %v1182, 0
        %v1189 = vsel %vm700, %v1184, 0
        %1191 = vmatprep.subr.bf16.mxu0 0
        %1192 = vmatpush1.bf16.xpose.msra.mxu0 0
        %1193 = vmatprep.subr.bf16.mxu0 0
        %1194 = vmatpush1.bf16.xpose.msra.mxu0 0
        %1195 = vmatprep.subr.bf16.mxu0 0
        %1196 = vmatpush1.bf16.xpose.msra.mxu0 0
        %1197 = vmatprep.subr.bf16.mxu0 0
        %1198 = vmatpush1.bf16.xpose.msra.mxu0 0
        %1199 = vmatprep.subr.bf16.mxu0 0
        %1200 = vmatpush1.bf16.xpose.msra.mxu0 0
        %1201 = vmatprep.subr.bf16.mxu0 0
        %1202 = vmatpush1.bf16.xpose.msra.mxu0 0
        %1203 = vmatprep.subr.bf16.mxu0 0
        %1204 = vmatpush1.bf16.xpose.msra.mxu0 0
        %1205 = vmatprep.subr.bf16.mxu0 0
        %1206 = vmatpush1.bf16.xpose.msra.mxu0 %v1189
        %1207 = vmatprep.subr.bf16.mxu0 0
        %1208 = vmatpush2.bf16.xpose.msra.mxu0 0
        %1209 = vmatprep.subr.bf16.mxu0 0
        %1210 = vmatpush2.bf16.xpose.msra.mxu0 0
        %1211 = vmatprep.subr.bf16.mxu0 0
        %1212 = vmatpush2.bf16.xpose.msra.mxu0 0
        %1213 = vmatprep.subr.bf16.mxu0 0
        %1214 = vmatpush2.bf16.xpose.msra.mxu0 0
        %1215 = vmatprep.subr.bf16.mxu0 0
        %1216 = vmatpush2.bf16.xpose.msra.mxu0 0
        %1217 = vmatprep.subr.bf16.mxu0 0
        %1218 = vmatpush2.bf16.xpose.msra.mxu0 0
        %1219 = vmatprep.subr.bf16.mxu0 0
        %1220 = vmatpush2.bf16.xpose.msra.mxu0 0
        %1221 = vmatprep.subr.bf16.mxu0 0
        %1222 = vmatpush2.bf16.xpose.msra.mxu0 0
        %1223 = vmatprep.mubr.bf16.mxu0 0
        %1224 = vmatmul.mubr.bf16.gmra.mxu0 %v1186
        %v1225 = vpop.f32.mrf.mxu0
        %v1226 = vadd.f32 0.0, %v1225
        %v1227 = vpop.f32.mrf.mxu0
        %v1228 = vpop.f32.mrf.mxu0
        %v1229 = vpop.f32.mrf.mxu0
        %1230 = vdwg.mxu0
        %v1231 = vsel %vm793, %v1176, -inf
        %1232 = vmax.xlane.f32.xlu0 %v1231
        %v1233 = vpop.xlane.xlu0 %1232
        %v1234 = vsel %vm793, %v1226, -inf
        %1235 = vmax.xlane.f32.xlu0 %v1234
        %v1236 = vpop.xlane.xlu0 %1235
        %v1237 = vsub.f32 %v1176, %v1233
        %v1238 = vsub.f32 %v1226, %v1236
        %v1239 = vmul.f32 %v1237, 1.442695
        %v1240 = vpow.pop %v1239
        %v1241 = vmul.f32 %v1238, 1.442695
        %v1242 = vpow.pop %v1241
        %v1243 = vsel %vm793, %v1240, 0.0
        %1244 = vadd.xlane.f32.xlu0 %v1243
        %v1245 = vpop.xlane.xlu0 %1244
        %v1246 = vsel %vm793, %v1242, 0.0
        %1247 = vadd.xlane.f32.xlu0 %v1246
        %v1248 = vpop.xlane.xlu0 %1247
        %v1249 = vrcp.pop %v1245
        %v1250 = vmul.f32 %v1240, %v1249
        %v1251 = vrcp.pop %v1248
        %v1252 = vmul.f32 %v1242, %v1251
        %v1253 = vpack.c.bf16 %v1250, %v1250
        %v1254 = vpack.c.bf16 %v1252, %v1252
        %1255 = vrot.lane.b32.xlu0 %v698, 120
        %v1256 = vpop.permute.xlu0 %1255
        %v1258 = vsel %vm793, %v1253, 0
        %v1261 = vsel %vm821, %v1256, 0
        %1263 = vmatprep.subr.bf16.mxu0 0
        %1264 = vmatpush1.bf16.msra.mxu0 0
        %1265 = vmatprep.subr.bf16.mxu0 0
        %1266 = vmatpush1.bf16.msra.mxu0 0
        %1267 = vmatprep.subr.bf16.mxu0 0
        %1268 = vmatpush1.bf16.msra.mxu0 0
        %1269 = vmatprep.subr.bf16.mxu0 0
        %1270 = vmatpush1.bf16.msra.mxu0 0
        %1271 = vmatprep.subr.bf16.mxu0 0
        %1272 = vmatpush1.bf16.msra.mxu0 0
        %1273 = vmatprep.subr.bf16.mxu0 0
        %1274 = vmatpush1.bf16.msra.mxu0 0
        %1275 = vmatprep.subr.bf16.mxu0 0
        %1276 = vmatpush1.bf16.msra.mxu0 0
        %1277 = vmatprep.subr.bf16.mxu0 0
        %1278 = vmatpush1.bf16.msra.mxu0 %v1261
        %1279 = vmatprep.subr.bf16.mxu0 0
        %1280 = vmatpush2.bf16.msra.mxu0 0
        %1281 = vmatprep.subr.bf16.mxu0 0
        %1282 = vmatpush2.bf16.msra.mxu0 0
        %1283 = vmatprep.subr.bf16.mxu0 0
        %1284 = vmatpush2.bf16.msra.mxu0 0
        %1285 = vmatprep.subr.bf16.mxu0 0
        %1286 = vmatpush2.bf16.msra.mxu0 0
        %1287 = vmatprep.subr.bf16.mxu0 0
        %1288 = vmatpush2.bf16.msra.mxu0 0
        %1289 = vmatprep.subr.bf16.mxu0 0
        %1290 = vmatpush2.bf16.msra.mxu0 0
        %1291 = vmatprep.subr.bf16.mxu0 0
        %1292 = vmatpush2.bf16.msra.mxu0 0
        %1293 = vmatprep.subr.bf16.mxu0 0
        %1294 = vmatpush2.bf16.msra.mxu0 0
        %1295 = vmatprep.mubr.bf16.mxu0 0
        %1296 = vmatmul.mubr.bf16.gmra.mxu0 %v1258
        %v1297 = vpop.f32.mrf.mxu0
        %v1298 = vadd.f32 0.0, %v1297
        %v1299 = vpop.f32.mrf.mxu0
        %v1300 = vpop.f32.mrf.mxu0
        %v1301 = vpop.f32.mrf.mxu0
        %1302 = vdwg.mxu0
        %1303 = vrot.lane.b32.xlu0 %v699, 120
        %v1304 = vpop.permute.xlu0 %1303
        %v1306 = vsel %vm793, %v1254, 0
        %v1309 = vsel %vm821, %v1304, 0
        %1311 = vmatprep.subr.bf16.mxu0 0
        %1312 = vmatpush1.bf16.msra.mxu0 0
        %1313 = vmatprep.subr.bf16.mxu0 0
        %1314 = vmatpush1.bf16.msra.mxu0 0
        %1315 = vmatprep.subr.bf16.mxu0 0
        %1316 = vmatpush1.bf16.msra.mxu0 0
        %1317 = vmatprep.subr.bf16.mxu0 0
        %1318 = vmatpush1.bf16.msra.mxu0 0
        %1319 = vmatprep.subr.bf16.mxu0 0
        %1320 = vmatpush1.bf16.msra.mxu0 0
        %1321 = vmatprep.subr.bf16.mxu0 0
        %1322 = vmatpush1.bf16.msra.mxu0 0
        %1323 = vmatprep.subr.bf16.mxu0 0
        %1324 = vmatpush1.bf16.msra.mxu0 0
        %1325 = vmatprep.subr.bf16.mxu0 0
        %1326 = vmatpush1.bf16.msra.mxu0 %v1309
        %1327 = vmatprep.subr.bf16.mxu0 0
        %1328 = vmatpush2.bf16.msra.mxu0 0
        %1329 = vmatprep.subr.bf16.mxu0 0
        %1330 = vmatpush2.bf16.msra.mxu0 0
        %1331 = vmatprep.subr.bf16.mxu0 0
        %1332 = vmatpush2.bf16.msra.mxu0 0
        %1333 = vmatprep.subr.bf16.mxu0 0
        %1334 = vmatpush2.bf16.msra.mxu0 0
        %1335 = vmatprep.subr.bf16.mxu0 0
        %1336 = vmatpush2.bf16.msra.mxu0 0
        %1337 = vmatprep.subr.bf16.mxu0 0
        %1338 = vmatpush2.bf16.msra.mxu0 0
        %1339 = vmatprep.subr.bf16.mxu0 0
        %1340 = vmatpush2.bf16.msra.mxu0 0
        %1341 = vmatprep.subr.bf16.mxu0 0
        %1342 = vmatpush2.bf16.msra.mxu0 0
        %1343 = vmatprep.mubr.bf16.mxu0 0
        %1344 = vmatmul.mubr.bf16.gmra.mxu0 %v1306
        %v1345 = vpop.f32.mrf.mxu0
        %v1346 = vadd.f32 0.0, %v1345
        %v1347 = vpop.f32.mrf.mxu0
        %v1348 = vpop.f32.mrf.mxu0
        %v1349 = vpop.f32.mrf.mxu0
        %1350 = vdwg.mxu0
        %1351 = vrot.lane.b32.xlu0 %v688, 116
        %v1352 = vpop.permute.xlu0 %1351
        %1353 = vrot.lane.b32.xlu0 %v693, 116
        %v1354 = vpop.permute.xlu0 %1353
        %v1356 = vsel %vm700, %v1352, 0
        %v1359 = vsel %vm700, %v1354, 0
        %1361 = vmatprep.subr.bf16.mxu0 0
        %1362 = vmatpush1.bf16.xpose.msra.mxu0 0
        %1363 = vmatprep.subr.bf16.mxu0 0
        %1364 = vmatpush1.bf16.xpose.msra.mxu0 0
        %1365 = vmatprep.subr.bf16.mxu0 0
        %1366 = vmatpush1.bf16.xpose.msra.mxu0 0
        %1367 = vmatprep.subr.bf16.mxu0 0
        %1368 = vmatpush1.bf16.xpose.msra.mxu0 0
        %1369 = vmatprep.subr.bf16.mxu0 0
        %1370 = vmatpush1.bf16.xpose.msra.mxu0 0
        %1371 = vmatprep.subr.bf16.mxu0 0
        %1372 = vmatpush1.bf16.xpose.msra.mxu0 0
        %1373 = vmatprep.subr.bf16.mxu0 0
        %1374 = vmatpush1.bf16.xpose.msra.mxu0 0
        %1375 = vmatprep.subr.bf16.mxu0 0
        %1376 = vmatpush1.bf16.xpose.msra.mxu0 %v1359
        %1377 = vmatprep.subr.bf16.mxu0 0
        %1378 = vmatpush2.bf16.xpose.msra.mxu0 0
        %1379 = vmatprep.subr.bf16.mxu0 0
        %1380 = vmatpush2.bf16.xpose.msra.mxu0 0
        %1381 = vmatprep.subr.bf16.mxu0 0
        %1382 = vmatpush2.bf16.xpose.msra.mxu0 0
        %1383 = vmatprep.subr.bf16.mxu0 0
        %1384 = vmatpush2.bf16.xpose.msra.mxu0 0
        %1385 = vmatprep.subr.bf16.mxu0 0
        %1386 = vmatpush2.bf16.xpose.msra.mxu0 0
        %1387 = vmatprep.subr.bf16.mxu0 0
        %1388 = vmatpush2.bf16.xpose.msra.mxu0 0
        %1389 = vmatprep.subr.bf16.mxu0 0
        %1390 = vmatpush2.bf16.xpose.msra.mxu0 0
        %1391 = vmatprep.subr.bf16.mxu0 0
        %1392 = vmatpush2.bf16.xpose.msra.mxu0 0
        %1393 = vmatprep.mubr.bf16.mxu0 0
        %1394 = vmatmul.mubr.bf16.gmra.mxu0 %v1356
        %v1395 = vpop.f32.mrf.mxu0
        %v1396 = vadd.f32 0.0, %v1395
        %v1397 = vpop.f32.mrf.mxu0
        %v1398 = vpop.f32.mrf.mxu0
        %v1399 = vpop.f32.mrf.mxu0
        %1400 = vdwg.mxu0
        %1401 = vrot.lane.b32.xlu0 %v689, 116
        %v1402 = vpop.permute.xlu0 %1401
        %1403 = vrot.lane.b32.xlu0 %v694, 116
        %v1404 = vpop.permute.xlu0 %1403
        %v1406 = vsel %vm700, %v1402, 0
        %v1409 = vsel %vm700, %v1404, 0
        %1411 = vmatprep.subr.bf16.mxu0 0
        %1412 = vmatpush1.bf16.xpose.msra.mxu0 0
        %1413 = vmatprep.subr.bf16.mxu0 0
        %1414 = vmatpush1.bf16.xpose.msra.mxu0 0
        %1415 = vmatprep.subr.bf16.mxu0 0
        %1416 = vmatpush1.bf16.xpose.msra.mxu0 0
        %1417 = vmatprep.subr.bf16.mxu0 0
        %1418 = vmatpush1.bf16.xpose.msra.mxu0 0
        %1419 = vmatprep.subr.bf16.mxu0 0
        %1420 = vmatpush1.bf16.xpose.msra.mxu0 0
        %1421 = vmatprep.subr.bf16.mxu0 0
        %1422 = vmatpush1.bf16.xpose.msra.mxu0 0
        %1423 = vmatprep.subr.bf16.mxu0 0
        %1424 = vmatpush1.bf16.xpose.msra.mxu0 0
        %1425 = vmatprep.subr.bf16.mxu0 0
        %1426 = vmatpush1.bf16.xpose.msra.mxu0 %v1409
        %1427 = vmatprep.subr.bf16.mxu0 0
        %1428 = vmatpush2.bf16.xpose.msra.mxu0 0
        %1429 = vmatprep.subr.bf16.mxu0 0
        %1430 = vmatpush2.bf16.xpose.msra.mxu0 0
        %1431 = vmatprep.subr.bf16.mxu0 0
        %1432 = vmatpush2.bf16.xpose.msra.mxu0 0
        %1433 = vmatprep.subr.bf16.mxu0 0
        %1434 = vmatpush2.bf16.xpose.msra.mxu0 0
        %1435 = vmatprep.subr.bf16.mxu0 0
        %1436 = vmatpush2.bf16.xpose.msra.mxu0 0
        %1437 = vmatprep.subr.bf16.mxu0 0
        %1438 = vmatpush2.bf16.xpose.msra.mxu0 0
        %1439 = vmatprep.subr.bf16.mxu0 0
        %1440 = vmatpush2.bf16.xpose.msra.mxu0 0
        %1441 = vmatprep.subr.bf16.mxu0 0
        %1442 = vmatpush2.bf16.xpose.msra.mxu0 0
        %1443 = vmatprep.mubr.bf16.mxu0 0
        %1444 = vmatmul.mubr.bf16.gmra.mxu0 %v1406
        %v1445 = vpop.f32.mrf.mxu0
        %v1446 = vadd.f32 0.0, %v1445
        %v1447 = vpop.f32.mrf.mxu0
        %v1448 = vpop.f32.mrf.mxu0
        %v1449 = vpop.f32.mrf.mxu0
        %1450 = vdwg.mxu0
        %v1451 = vsel %vm793, %v1396, -inf
        %1452 = vmax.xlane.f32.xlu0 %v1451
        %v1453 = vpop.xlane.xlu0 %1452
        %v1454 = vsel %vm793, %v1446, -inf
        %1455 = vmax.xlane.f32.xlu0 %v1454
        %v1456 = vpop.xlane.xlu0 %1455
        %v1457 = vsub.f32 %v1396, %v1453
        %v1458 = vsub.f32 %v1446, %v1456
        %v1459 = vmul.f32 %v1457, 1.442695
        %v1460 = vpow.pop %v1459
        %v1461 = vmul.f32 %v1458, 1.442695
        %v1462 = vpow.pop %v1461
        %v1463 = vsel %vm793, %v1460, 0.0
        %1464 = vadd.xlane.f32.xlu0 %v1463
        %v1465 = vpop.xlane.xlu0 %1464
        %v1466 = vsel %vm793, %v1462, 0.0
        %1467 = vadd.xlane.f32.xlu0 %v1466
        %v1468 = vpop.xlane.xlu0 %1467
        %v1469 = vrcp.pop %v1465
        %v1470 = vmul.f32 %v1460, %v1469
        %v1471 = vrcp.pop %v1468
        %v1472 = vmul.f32 %v1462, %v1471
        %v1473 = vpack.c.bf16 %v1470, %v1470
        %v1474 = vpack.c.bf16 %v1472, %v1472
        %1475 = vrot.lane.b32.xlu0 %v698, 116
        %v1476 = vpop.permute.xlu0 %1475
        %v1478 = vsel %vm793, %v1473, 0
        %v1481 = vsel %vm821, %v1476, 0
        %1483 = vmatprep.subr.bf16.mxu0 0
        %1484 = vmatpush1.bf16.msra.mxu0 0
        %1485 = vmatprep.subr.bf16.mxu0 0
        %1486 = vmatpush1.bf16.msra.mxu0 0
        %1487 = vmatprep.subr.bf16.mxu0 0
        %1488 = vmatpush1.bf16.msra.mxu0 0
        %1489 = vmatprep.subr.bf16.mxu0 0
        %1490 = vmatpush1.bf16.msra.mxu0 0
        %1491 = vmatprep.subr.bf16.mxu0 0
        %1492 = vmatpush1.bf16.msra.mxu0 0
        %1493 = vmatprep.subr.bf16.mxu0 0
        %1494 = vmatpush1.bf16.msra.mxu0 0
        %1495 = vmatprep.subr.bf16.mxu0 0
        %1496 = vmatpush1.bf16.msra.mxu0 0
        %1497 = vmatprep.subr.bf16.mxu0 0
        %1498 = vmatpush1.bf16.msra.mxu0 %v1481
        %1499 = vmatprep.subr.bf16.mxu0 0
        %1500 = vmatpush2.bf16.msra.mxu0 0
        %1501 = vmatprep.subr.bf16.mxu0 0
        %1502 = vmatpush2.bf16.msra.mxu0 0
        %1503 = vmatprep.subr.bf16.mxu0 0
        %1504 = vmatpush2.bf16.msra.mxu0 0
        %1505 = vmatprep.subr.bf16.mxu0 0
        %1506 = vmatpush2.bf16.msra.mxu0 0
        %1507 = vmatprep.subr.bf16.mxu0 0
        %1508 = vmatpush2.bf16.msra.mxu0 0
        %1509 = vmatprep.subr.bf16.mxu0 0
        %1510 = vmatpush2.bf16.msra.mxu0 0
        %1511 = vmatprep.subr.bf16.mxu0 0
        %1512 = vmatpush2.bf16.msra.mxu0 0
        %1513 = vmatprep.subr.bf16.mxu0 0
        %1514 = vmatpush2.bf16.msra.mxu0 0
        %1515 = vmatprep.mubr.bf16.mxu0 0
        %1516 = vmatmul.mubr.bf16.gmra.mxu0 %v1478
        %v1517 = vpop.f32.mrf.mxu0
        %v1518 = vadd.f32 0.0, %v1517
        %v1519 = vpop.f32.mrf.mxu0
        %v1520 = vpop.f32.mrf.mxu0
        %v1521 = vpop.f32.mrf.mxu0
        %1522 = vdwg.mxu0
        %1523 = vrot.lane.b32.xlu0 %v699, 116
        %v1524 = vpop.permute.xlu0 %1523
        %v1526 = vsel %vm793, %v1474, 0
        %v1529 = vsel %vm821, %v1524, 0
        %1531 = vmatprep.subr.bf16.mxu0 0
        %1532 = vmatpush1.bf16.msra.mxu0 0
        %1533 = vmatprep.subr.bf16.mxu0 0
        %1534 = vmatpush1.bf16.msra.mxu0 0
        %1535 = vmatprep.subr.bf16.mxu0 0
        %1536 = vmatpush1.bf16.msra.mxu0 0
        %1537 = vmatprep.subr.bf16.mxu0 0
        %1538 = vmatpush1.bf16.msra.mxu0 0
        %1539 = vmatprep.subr.bf16.mxu0 0
        %1540 = vmatpush1.bf16.msra.mxu0 0
        %1541 = vmatprep.subr.bf16.mxu0 0
        %1542 = vmatpush1.bf16.msra.mxu0 0
        %1543 = vmatprep.subr.bf16.mxu0 0
        %1544 = vmatpush1.bf16.msra.mxu0 0
        %1545 = vmatprep.subr.bf16.mxu0 0
        %1546 = vmatpush1.bf16.msra.mxu0 %v1529
        %1547 = vmatprep.subr.bf16.mxu0 0
        %1548 = vmatpush2.bf16.msra.mxu0 0
        %1549 = vmatprep.subr.bf16.mxu0 0
        %1550 = vmatpush2.bf16.msra.mxu0 0
        %1551 = vmatprep.subr.bf16.mxu0 0
        %1552 = vmatpush2.bf16.msra.mxu0 0
        %1553 = vmatprep.subr.bf16.mxu0 0
        %1554 = vmatpush2.bf16.msra.mxu0 0
        %1555 = vmatprep.subr.bf16.mxu0 0
        %1556 = vmatpush2.bf16.msra.mxu0 0
        %1557 = vmatprep.subr.bf16.mxu0 0
        %1558 = vmatpush2.bf16.msra.mxu0 0
        %1559 = vmatprep.subr.bf16.mxu0 0
        %1560 = vmatpush2.bf16.msra.mxu0 0
        %1561 = vmatprep.subr.bf16.mxu0 0
        %1562 = vmatpush2.bf16.msra.mxu0 0
        %1563 = vmatprep.mubr.bf16.mxu0 0
        %1564 = vmatmul.mubr.bf16.gmra.mxu0 %v1526
        %v1565 = vpop.f32.mrf.mxu0
        %v1566 = vadd.f32 0.0, %v1565
        %v1567 = vpop.f32.mrf.mxu0
        %v1568 = vpop.f32.mrf.mxu0
        %v1569 = vpop.f32.mrf.mxu0
        %1570 = vdwg.mxu0
        %1571 = vrot.lane.b32.xlu0 %v688, 112
        %v1572 = vpop.permute.xlu0 %1571
        %1573 = vrot.lane.b32.xlu0 %v693, 112
        %v1574 = vpop.permute.xlu0 %1573
        %v1576 = vsel %vm700, %v1572, 0
        %v1579 = vsel %vm700, %v1574, 0
        %1581 = vmatprep.subr.bf16.mxu0 0
        %1582 = vmatpush1.bf16.xpose.msra.mxu0 0
        %1583 = vmatprep.subr.bf16.mxu0 0
        %1584 = vmatpush1.bf16.xpose.msra.mxu0 0
        %1585 = vmatprep.subr.bf16.mxu0 0
        %1586 = vmatpush1.bf16.xpose.msra.mxu0 0
        %1587 = vmatprep.subr.bf16.mxu0 0
        %1588 = vmatpush1.bf16.xpose.msra.mxu0 0
        %1589 = vmatprep.subr.bf16.mxu0 0
        %1590 = vmatpush1.bf16.xpose.msra.mxu0 0
        %1591 = vmatprep.subr.bf16.mxu0 0
        %1592 = vmatpush1.bf16.xpose.msra.mxu0 0
        %1593 = vmatprep.subr.bf16.mxu0 0
        %1594 = vmatpush1.bf16.xpose.msra.mxu0 0
        %1595 = vmatprep.subr.bf16.mxu0 0
        %1596 = vmatpush1.bf16.xpose.msra.mxu0 %v1579
        %1597 = vmatprep.subr.bf16.mxu0 0
        %1598 = vmatpush2.bf16.xpose.msra.mxu0 0
        %1599 = vmatprep.subr.bf16.mxu0 0
        %1600 = vmatpush2.bf16.xpose.msra.mxu0 0
        %1601 = vmatprep.subr.bf16.mxu0 0
        %1602 = vmatpush2.bf16.xpose.msra.mxu0 0
        %1603 = vmatprep.subr.bf16.mxu0 0
        %1604 = vmatpush2.bf16.xpose.msra.mxu0 0
        %1605 = vmatprep.subr.bf16.mxu0 0
        %1606 = vmatpush2.bf16.xpose.msra.mxu0 0
        %1607 = vmatprep.subr.bf16.mxu0 0
        %1608 = vmatpush2.bf16.xpose.msra.mxu0 0
        %1609 = vmatprep.subr.bf16.mxu0 0
        %1610 = vmatpush2.bf16.xpose.msra.mxu0 0
        %1611 = vmatprep.subr.bf16.mxu0 0
        %1612 = vmatpush2.bf16.xpose.msra.mxu0 0
        %1613 = vmatprep.mubr.bf16.mxu0 0
        %1614 = vmatmul.mubr.bf16.gmra.mxu0 %v1576
        %v1615 = vpop.f32.mrf.mxu0
        %v1616 = vadd.f32 0.0, %v1615
        %v1617 = vpop.f32.mrf.mxu0
        %v1618 = vpop.f32.mrf.mxu0
        %v1619 = vpop.f32.mrf.mxu0
        %1620 = vdwg.mxu0
        %1621 = vrot.lane.b32.xlu0 %v689, 112
        %v1622 = vpop.permute.xlu0 %1621
        %1623 = vrot.lane.b32.xlu0 %v694, 112
        %v1624 = vpop.permute.xlu0 %1623
        %v1626 = vsel %vm700, %v1622, 0
        %v1629 = vsel %vm700, %v1624, 0
        %1631 = vmatprep.subr.bf16.mxu0 0
        %1632 = vmatpush1.bf16.xpose.msra.mxu0 0
        %1633 = vmatprep.subr.bf16.mxu0 0
        %1634 = vmatpush1.bf16.xpose.msra.mxu0 0
        %1635 = vmatprep.subr.bf16.mxu0 0
        %1636 = vmatpush1.bf16.xpose.msra.mxu0 0
        %1637 = vmatprep.subr.bf16.mxu0 0
        %1638 = vmatpush1.bf16.xpose.msra.mxu0 0
        %1639 = vmatprep.subr.bf16.mxu0 0
        %1640 = vmatpush1.bf16.xpose.msra.mxu0 0
        %1641 = vmatprep.subr.bf16.mxu0 0
        %1642 = vmatpush1.bf16.xpose.msra.mxu0 0
        %1643 = vmatprep.subr.bf16.mxu0 0
        %1644 = vmatpush1.bf16.xpose.msra.mxu0 0
        %1645 = vmatprep.subr.bf16.mxu0 0
        %1646 = vmatpush1.bf16.xpose.msra.mxu0 %v1629
        %1647 = vmatprep.subr.bf16.mxu0 0
        %1648 = vmatpush2.bf16.xpose.msra.mxu0 0
        %1649 = vmatprep.subr.bf16.mxu0 0
        %1650 = vmatpush2.bf16.xpose.msra.mxu0 0
        %1651 = vmatprep.subr.bf16.mxu0 0
        %1652 = vmatpush2.bf16.xpose.msra.mxu0 0
        %1653 = vmatprep.subr.bf16.mxu0 0
        %1654 = vmatpush2.bf16.xpose.msra.mxu0 0
        %1655 = vmatprep.subr.bf16.mxu0 0
        %1656 = vmatpush2.bf16.xpose.msra.mxu0 0
        %1657 = vmatprep.subr.bf16.mxu0 0
        %1658 = vmatpush2.bf16.xpose.msra.mxu0 0
        %1659 = vmatprep.subr.bf16.mxu0 0
        %1660 = vmatpush2.bf16.xpose.msra.mxu0 0
        %1661 = vmatprep.subr.bf16.mxu0 0
        %1662 = vmatpush2.bf16.xpose.msra.mxu0 0
        %1663 = vmatprep.mubr.bf16.mxu0 0
        %1664 = vmatmul.mubr.bf16.gmra.mxu0 %v1626
        %v1665 = vpop.f32.mrf.mxu0
        %v1666 = vadd.f32 0.0, %v1665
        %v1667 = vpop.f32.mrf.mxu0
        %v1668 = vpop.f32.mrf.mxu0
        %v1669 = vpop.f32.mrf.mxu0
        %1670 = vdwg.mxu0
        %v1671 = vsel %vm793, %v1616, -inf
        %1672 = vmax.xlane.f32.xlu0 %v1671
        %v1673 = vpop.xlane.xlu0 %1672
        %v1674 = vsel %vm793, %v1666, -inf
        %1675 = vmax.xlane.f32.xlu0 %v1674
        %v1676 = vpop.xlane.xlu0 %1675
        %v1677 = vsub.f32 %v1616, %v1673
        %v1678 = vsub.f32 %v1666, %v1676
        %v1679 = vmul.f32 %v1677, 1.442695
        %v1680 = vpow.pop %v1679
        %v1681 = vmul.f32 %v1678, 1.442695
        %v1682 = vpow.pop %v1681
        %v1683 = vsel %vm793, %v1680, 0.0
        %1684 = vadd.xlane.f32.xlu0 %v1683
        %v1685 = vpop.xlane.xlu0 %1684
        %v1686 = vsel %vm793, %v1682, 0.0
        %1687 = vadd.xlane.f32.xlu0 %v1686
        %v1688 = vpop.xlane.xlu0 %1687
        %v1689 = vrcp.pop %v1685
        %v1690 = vmul.f32 %v1680, %v1689
        %v1691 = vrcp.pop %v1688
        %v1692 = vmul.f32 %v1682, %v1691
        %v1693 = vpack.c.bf16 %v1690, %v1690
        %v1694 = vpack.c.bf16 %v1692, %v1692
        %1695 = vrot.lane.b32.xlu0 %v698, 112
        %v1696 = vpop.permute.xlu0 %1695
        %v1698 = vsel %vm793, %v1693, 0
        %v1701 = vsel %vm821, %v1696, 0
        %1703 = vmatprep.subr.bf16.mxu0 0
        %1704 = vmatpush1.bf16.msra.mxu0 0
        %1705 = vmatprep.subr.bf16.mxu0 0
        %1706 = vmatpush1.bf16.msra.mxu0 0
        %1707 = vmatprep.subr.bf16.mxu0 0
        %1708 = vmatpush1.bf16.msra.mxu0 0
        %1709 = vmatprep.subr.bf16.mxu0 0
        %1710 = vmatpush1.bf16.msra.mxu0 0
        %1711 = vmatprep.subr.bf16.mxu0 0
        %1712 = vmatpush1.bf16.msra.mxu0 0
        %1713 = vmatprep.subr.bf16.mxu0 0
        %1714 = vmatpush1.bf16.msra.mxu0 0
        %1715 = vmatprep.subr.bf16.mxu0 0
        %1716 = vmatpush1.bf16.msra.mxu0 0
        %1717 = vmatprep.subr.bf16.mxu0 0
        %1718 = vmatpush1.bf16.msra.mxu0 %v1701
        %1719 = vmatprep.subr.bf16.mxu0 0
        %1720 = vmatpush2.bf16.msra.mxu0 0
        %1721 = vmatprep.subr.bf16.mxu0 0
        %1722 = vmatpush2.bf16.msra.mxu0 0
        %1723 = vmatprep.subr.bf16.mxu0 0
        %1724 = vmatpush2.bf16.msra.mxu0 0
        %1725 = vmatprep.subr.bf16.mxu0 0
        %1726 = vmatpush2.bf16.msra.mxu0 0
        %1727 = vmatprep.subr.bf16.mxu0 0
        %1728 = vmatpush2.bf16.msra.mxu0 0
        %1729 = vmatprep.subr.bf16.mxu0 0
        %1730 = vmatpush2.bf16.msra.mxu0 0
        %1731 = vmatprep.subr.bf16.mxu0 0
        %1732 = vmatpush2.bf16.msra.mxu0 0
        %1733 = vmatprep.subr.bf16.mxu0 0
        %1734 = vmatpush2.bf16.msra.mxu0 0
        %1735 = vmatprep.mubr.bf16.mxu0 0
        %1736 = vmatmul.mubr.bf16.gmra.mxu0 %v1698
        %v1737 = vpop.f32.mrf.mxu0
        %v1738 = vadd.f32 0.0, %v1737
        %v1739 = vpop.f32.mrf.mxu0
        %v1740 = vpop.f32.mrf.mxu0
        %v1741 = vpop.f32.mrf.mxu0
        %1742 = vdwg.mxu0
        %1743 = vrot.lane.b32.xlu0 %v699, 112
        %v1744 = vpop.permute.xlu0 %1743
        %v1746 = vsel %vm793, %v1694, 0
        %v1749 = vsel %vm821, %v1744, 0
        %1751 = vmatprep.subr.bf16.mxu0 0
        %1752 = vmatpush1.bf16.msra.mxu0 0
        %1753 = vmatprep.subr.bf16.mxu0 0
        %1754 = vmatpush1.bf16.msra.mxu0 0
        %1755 = vmatprep.subr.bf16.mxu0 0
        %1756 = vmatpush1.bf16.msra.mxu0 0
        %1757 = vmatprep.subr.bf16.mxu0 0
        %1758 = vmatpush1.bf16.msra.mxu0 0
        %1759 = vmatprep.subr.bf16.mxu0 0
        %1760 = vmatpush1.bf16.msra.mxu0 0
        %1761 = vmatprep.subr.bf16.mxu0 0
        %1762 = vmatpush1.bf16.msra.mxu0 0
        %1763 = vmatprep.subr.bf16.mxu0 0
        %1764 = vmatpush1.bf16.msra.mxu0 0
        %1765 = vmatprep.subr.bf16.mxu0 0
        %1766 = vmatpush1.bf16.msra.mxu0 %v1749
        %1767 = vmatprep.subr.bf16.mxu0 0
        %1768 = vmatpush2.bf16.msra.mxu0 0
        %1769 = vmatprep.subr.bf16.mxu0 0
        %1770 = vmatpush2.bf16.msra.mxu0 0
        %1771 = vmatprep.subr.bf16.mxu0 0
        %1772 = vmatpush2.bf16.msra.mxu0 0
        %1773 = vmatprep.subr.bf16.mxu0 0
        %1774 = vmatpush2.bf16.msra.mxu0 0
        %1775 = vmatprep.subr.bf16.mxu0 0
        %1776 = vmatpush2.bf16.msra.mxu0 0
        %1777 = vmatprep.subr.bf16.mxu0 0
        %1778 = vmatpush2.bf16.msra.mxu0 0
        %1779 = vmatprep.subr.bf16.mxu0 0
        %1780 = vmatpush2.bf16.msra.mxu0 0
        %1781 = vmatprep.subr.bf16.mxu0 0
        %1782 = vmatpush2.bf16.msra.mxu0 0
        %1783 = vmatprep.mubr.bf16.mxu0 0
        %1784 = vmatmul.mubr.bf16.gmra.mxu0 %v1746
        %v1785 = vpop.f32.mrf.mxu0
        %v1786 = vadd.f32 0.0, %v1785
        %v1787 = vpop.f32.mrf.mxu0
        %v1788 = vpop.f32.mrf.mxu0
        %v1789 = vpop.f32.mrf.mxu0
        %1790 = vdwg.mxu0
        %1791 = vrot.lane.b32.xlu0 %v688, 108
        %v1792 = vpop.permute.xlu0 %1791
        %1793 = vrot.lane.b32.xlu0 %v693, 108
        %v1794 = vpop.permute.xlu0 %1793
        %v1796 = vsel %vm700, %v1792, 0
        %v1799 = vsel %vm700, %v1794, 0
        %1801 = vmatprep.subr.bf16.mxu0 0
        %1802 = vmatpush1.bf16.xpose.msra.mxu0 0
        %1803 = vmatprep.subr.bf16.mxu0 0
        %1804 = vmatpush1.bf16.xpose.msra.mxu0 0
        %1805 = vmatprep.subr.bf16.mxu0 0
        %1806 = vmatpush1.bf16.xpose.msra.mxu0 0
        %1807 = vmatprep.subr.bf16.mxu0 0
        %1808 = vmatpush1.bf16.xpose.msra.mxu0 0
        %1809 = vmatprep.subr.bf16.mxu0 0
        %1810 = vmatpush1.bf16.xpose.msra.mxu0 0
        %1811 = vmatprep.subr.bf16.mxu0 0
        %1812 = vmatpush1.bf16.xpose.msra.mxu0 0
        %1813 = vmatprep.subr.bf16.mxu0 0
        %1814 = vmatpush1.bf16.xpose.msra.mxu0 0
        %1815 = vmatprep.subr.bf16.mxu0 0
        %1816 = vmatpush1.bf16.xpose.msra.mxu0 %v1799
        %1817 = vmatprep.subr.bf16.mxu0 0
        %1818 = vmatpush2.bf16.xpose.msra.mxu0 0
        %1819 = vmatprep.subr.bf16.mxu0 0
        %1820 = vmatpush2.bf16.xpose.msra.mxu0 0
        %1821 = vmatprep.subr.bf16.mxu0 0
        %1822 = vmatpush2.bf16.xpose.msra.mxu0 0
        %1823 = vmatprep.subr.bf16.mxu0 0
        %1824 = vmatpush2.bf16.xpose.msra.mxu0 0
        %1825 = vmatprep.subr.bf16.mxu0 0
        %1826 = vmatpush2.bf16.xpose.msra.mxu0 0
        %1827 = vmatprep.subr.bf16.mxu0 0
        %1828 = vmatpush2.bf16.xpose.msra.mxu0 0
        %1829 = vmatprep.subr.bf16.mxu0 0
        %1830 = vmatpush2.bf16.xpose.msra.mxu0 0
        %1831 = vmatprep.subr.bf16.mxu0 0
        %1832 = vmatpush2.bf16.xpose.msra.mxu0 0
        %1833 = vmatprep.mubr.bf16.mxu0 0
        %1834 = vmatmul.mubr.bf16.gmra.mxu0 %v1796
        %v1835 = vpop.f32.mrf.mxu0
        %v1836 = vadd.f32 0.0, %v1835
        %v1837 = vpop.f32.mrf.mxu0
        %v1838 = vpop.f32.mrf.mxu0
        %v1839 = vpop.f32.mrf.mxu0
        %1840 = vdwg.mxu0
        %1841 = vrot.lane.b32.xlu0 %v689, 108
        %v1842 = vpop.permute.xlu0 %1841
        %1843 = vrot.lane.b32.xlu0 %v694, 108
        %v1844 = vpop.permute.xlu0 %1843
        %v1846 = vsel %vm700, %v1842, 0
        %v1849 = vsel %vm700, %v1844, 0
        %1851 = vmatprep.subr.bf16.mxu0 0
        %1852 = vmatpush1.bf16.xpose.msra.mxu0 0
        %1853 = vmatprep.subr.bf16.mxu0 0
        %1854 = vmatpush1.bf16.xpose.msra.mxu0 0
        %1855 = vmatprep.subr.bf16.mxu0 0
        %1856 = vmatpush1.bf16.xpose.msra.mxu0 0
        %1857 = vmatprep.subr.bf16.mxu0 0
        %1858 = vmatpush1.bf16.xpose.msra.mxu0 0
        %1859 = vmatprep.subr.bf16.mxu0 0
        %1860 = vmatpush1.bf16.xpose.msra.mxu0 0
        %1861 = vmatprep.subr.bf16.mxu0 0
        %1862 = vmatpush1.bf16.xpose.msra.mxu0 0
        %1863 = vmatprep.subr.bf16.mxu0 0
        %1864 = vmatpush1.bf16.xpose.msra.mxu0 0
        %1865 = vmatprep.subr.bf16.mxu0 0
        %1866 = vmatpush1.bf16.xpose.msra.mxu0 %v1849
        %1867 = vmatprep.subr.bf16.mxu0 0
        %1868 = vmatpush2.bf16.xpose.msra.mxu0 0
        %1869 = vmatprep.subr.bf16.mxu0 0
        %1870 = vmatpush2.bf16.xpose.msra.mxu0 0
        %1871 = vmatprep.subr.bf16.mxu0 0
        %1872 = vmatpush2.bf16.xpose.msra.mxu0 0
        %1873 = vmatprep.subr.bf16.mxu0 0
        %1874 = vmatpush2.bf16.xpose.msra.mxu0 0
        %1875 = vmatprep.subr.bf16.mxu0 0
        %1876 = vmatpush2.bf16.xpose.msra.mxu0 0
        %1877 = vmatprep.subr.bf16.mxu0 0
        %1878 = vmatpush2.bf16.xpose.msra.mxu0 0
        %1879 = vmatprep.subr.bf16.mxu0 0
        %1880 = vmatpush2.bf16.xpose.msra.mxu0 0
        %1881 = vmatprep.subr.bf16.mxu0 0
        %1882 = vmatpush2.bf16.xpose.msra.mxu0 0
        %1883 = vmatprep.mubr.bf16.mxu0 0
        %1884 = vmatmul.mubr.bf16.gmra.mxu0 %v1846
        %v1885 = vpop.f32.mrf.mxu0
        %v1886 = vadd.f32 0.0, %v1885
        %v1887 = vpop.f32.mrf.mxu0
        %v1888 = vpop.f32.mrf.mxu0
        %v1889 = vpop.f32.mrf.mxu0
        %1890 = vdwg.mxu0
        %v1891 = vsel %vm793, %v1836, -inf
        %1892 = vmax.xlane.f32.xlu0 %v1891
        %v1893 = vpop.xlane.xlu0 %1892
        %v1894 = vsel %vm793, %v1886, -inf
        %1895 = vmax.xlane.f32.xlu0 %v1894
        %v1896 = vpop.xlane.xlu0 %1895
        %v1897 = vsub.f32 %v1836, %v1893
        %v1898 = vsub.f32 %v1886, %v1896
        %v1899 = vmul.f32 %v1897, 1.442695
        %v1900 = vpow.pop %v1899
        %v1901 = vmul.f32 %v1898, 1.442695
        %v1902 = vpow.pop %v1901
        %v1903 = vsel %vm793, %v1900, 0.0
        %1904 = vadd.xlane.f32.xlu0 %v1903
        %v1905 = vpop.xlane.xlu0 %1904
        %v1906 = vsel %vm793, %v1902, 0.0
        %1907 = vadd.xlane.f32.xlu0 %v1906
        %v1908 = vpop.xlane.xlu0 %1907
        %v1909 = vrcp.pop %v1905
        %v1910 = vmul.f32 %v1900, %v1909
        %v1911 = vrcp.pop %v1908
        %v1912 = vmul.f32 %v1902, %v1911
        %v1913 = vpack.c.bf16 %v1910, %v1910
        %v1914 = vpack.c.bf16 %v1912, %v1912
        %1915 = vrot.lane.b32.xlu0 %v698, 108
        %v1916 = vpop.permute.xlu0 %1915
        %v1918 = vsel %vm793, %v1913, 0
        %v1921 = vsel %vm821, %v1916, 0
        %1923 = vmatprep.subr.bf16.mxu0 0
        %1924 = vmatpush1.bf16.msra.mxu0 0
        %1925 = vmatprep.subr.bf16.mxu0 0
        %1926 = vmatpush1.bf16.msra.mxu0 0
        %1927 = vmatprep.subr.bf16.mxu0 0
        %1928 = vmatpush1.bf16.msra.mxu0 0
        %1929 = vmatprep.subr.bf16.mxu0 0
        %1930 = vmatpush1.bf16.msra.mxu0 0
        %1931 = vmatprep.subr.bf16.mxu0 0
        %1932 = vmatpush1.bf16.msra.mxu0 0
        %1933 = vmatprep.subr.bf16.mxu0 0
        %1934 = vmatpush1.bf16.msra.mxu0 0
        %1935 = vmatprep.subr.bf16.mxu0 0
        %1936 = vmatpush1.bf16.msra.mxu0 0
        %1937 = vmatprep.subr.bf16.mxu0 0
        %1938 = vmatpush1.bf16.msra.mxu0 %v1921
        %1939 = vmatprep.subr.bf16.mxu0 0
        %1940 = vmatpush2.bf16.msra.mxu0 0
        %1941 = vmatprep.subr.bf16.mxu0 0
        %1942 = vmatpush2.bf16.msra.mxu0 0
        %1943 = vmatprep.subr.bf16.mxu0 0
        %1944 = vmatpush2.bf16.msra.mxu0 0
        %1945 = vmatprep.subr.bf16.mxu0 0
        %1946 = vmatpush2.bf16.msra.mxu0 0
        %1947 = vmatprep.subr.bf16.mxu0 0
        %1948 = vmatpush2.bf16.msra.mxu0 0
        %1949 = vmatprep.subr.bf16.mxu0 0
        %1950 = vmatpush2.bf16.msra.mxu0 0
        %1951 = vmatprep.subr.bf16.mxu0 0
        %1952 = vmatpush2.bf16.msra.mxu0 0
        %1953 = vmatprep.subr.bf16.mxu0 0
        %1954 = vmatpush2.bf16.msra.mxu0 0
        %1955 = vmatprep.mubr.bf16.mxu0 0
        %1956 = vmatmul.mubr.bf16.gmra.mxu0 %v1918
        %v1957 = vpop.f32.mrf.mxu0
        %v1958 = vadd.f32 0.0, %v1957
        %v1959 = vpop.f32.mrf.mxu0
        %v1960 = vpop.f32.mrf.mxu0
        %v1961 = vpop.f32.mrf.mxu0
        %1962 = vdwg.mxu0
        %1963 = vrot.lane.b32.xlu0 %v699, 108
        %v1964 = vpop.permute.xlu0 %1963
        %v1966 = vsel %vm793, %v1914, 0
        %v1969 = vsel %vm821, %v1964, 0
        %1971 = vmatprep.subr.bf16.mxu0 0
        %1972 = vmatpush1.bf16.msra.mxu0 0
        %1973 = vmatprep.subr.bf16.mxu0 0
        %1974 = vmatpush1.bf16.msra.mxu0 0
        %1975 = vmatprep.subr.bf16.mxu0 0
        %1976 = vmatpush1.bf16.msra.mxu0 0
        %1977 = vmatprep.subr.bf16.mxu0 0
        %1978 = vmatpush1.bf16.msra.mxu0 0
        %1979 = vmatprep.subr.bf16.mxu0 0
        %1980 = vmatpush1.bf16.msra.mxu0 0
        %1981 = vmatprep.subr.bf16.mxu0 0
        %1982 = vmatpush1.bf16.msra.mxu0 0
        %1983 = vmatprep.subr.bf16.mxu0 0
        %1984 = vmatpush1.bf16.msra.mxu0 0
        %1985 = vmatprep.subr.bf16.mxu0 0
        %1986 = vmatpush1.bf16.msra.mxu0 %v1969
        %1987 = vmatprep.subr.bf16.mxu0 0
        %1988 = vmatpush2.bf16.msra.mxu0 0
        %1989 = vmatprep.subr.bf16.mxu0 0
        %1990 = vmatpush2.bf16.msra.mxu0 0
        %1991 = vmatprep.subr.bf16.mxu0 0
        %1992 = vmatpush2.bf16.msra.mxu0 0
        %1993 = vmatprep.subr.bf16.mxu0 0
        %1994 = vmatpush2.bf16.msra.mxu0 0
        %1995 = vmatprep.subr.bf16.mxu0 0
        %1996 = vmatpush2.bf16.msra.mxu0 0
        %1997 = vmatprep.subr.bf16.mxu0 0
        %1998 = vmatpush2.bf16.msra.mxu0 0
        %1999 = vmatprep.subr.bf16.mxu0 0
        %2000 = vmatpush2.bf16.msra.mxu0 0
        %2001 = vmatprep.subr.bf16.mxu0 0
        %2002 = vmatpush2.bf16.msra.mxu0 0
        %2003 = vmatprep.mubr.bf16.mxu0 0
        %2004 = vmatmul.mubr.bf16.gmra.mxu0 %v1966
        %v2005 = vpop.f32.mrf.mxu0
        %v2006 = vadd.f32 0.0, %v2005
        %v2007 = vpop.f32.mrf.mxu0
        %v2008 = vpop.f32.mrf.mxu0
        %v2009 = vpop.f32.mrf.mxu0
        %2010 = vdwg.mxu0
        %2011 = vrot.lane.b32.xlu0 %v688, 104
        %v2012 = vpop.permute.xlu0 %2011
        %2013 = vrot.lane.b32.xlu0 %v693, 104
        %v2014 = vpop.permute.xlu0 %2013
        %v2016 = vsel %vm700, %v2012, 0
        %v2019 = vsel %vm700, %v2014, 0
        %2021 = vmatprep.subr.bf16.mxu0 0
        %2022 = vmatpush1.bf16.xpose.msra.mxu0 0
        %2023 = vmatprep.subr.bf16.mxu0 0
        %2024 = vmatpush1.bf16.xpose.msra.mxu0 0
        %2025 = vmatprep.subr.bf16.mxu0 0
        %2026 = vmatpush1.bf16.xpose.msra.mxu0 0
        %2027 = vmatprep.subr.bf16.mxu0 0
        %2028 = vmatpush1.bf16.xpose.msra.mxu0 0
        %2029 = vmatprep.subr.bf16.mxu0 0
        %2030 = vmatpush1.bf16.xpose.msra.mxu0 0
        %2031 = vmatprep.subr.bf16.mxu0 0
        %2032 = vmatpush1.bf16.xpose.msra.mxu0 0
        %2033 = vmatprep.subr.bf16.mxu0 0
        %2034 = vmatpush1.bf16.xpose.msra.mxu0 0
        %2035 = vmatprep.subr.bf16.mxu0 0
        %2036 = vmatpush1.bf16.xpose.msra.mxu0 %v2019
        %2037 = vmatprep.subr.bf16.mxu0 0
        %2038 = vmatpush2.bf16.xpose.msra.mxu0 0
        %2039 = vmatprep.subr.bf16.mxu0 0
        %2040 = vmatpush2.bf16.xpose.msra.mxu0 0
        %2041 = vmatprep.subr.bf16.mxu0 0
        %2042 = vmatpush2.bf16.xpose.msra.mxu0 0
        %2043 = vmatprep.subr.bf16.mxu0 0
        %2044 = vmatpush2.bf16.xpose.msra.mxu0 0
        %2045 = vmatprep.subr.bf16.mxu0 0
        %2046 = vmatpush2.bf16.xpose.msra.mxu0 0
        %2047 = vmatprep.subr.bf16.mxu0 0
        %2048 = vmatpush2.bf16.xpose.msra.mxu0 0
        %2049 = vmatprep.subr.bf16.mxu0 0
        %2050 = vmatpush2.bf16.xpose.msra.mxu0 0
        %2051 = vmatprep.subr.bf16.mxu0 0
        %2052 = vmatpush2.bf16.xpose.msra.mxu0 0
        %2053 = vmatprep.mubr.bf16.mxu0 0
        %2054 = vmatmul.mubr.bf16.gmra.mxu0 %v2016
        %v2055 = vpop.f32.mrf.mxu0
        %v2056 = vadd.f32 0.0, %v2055
        %v2057 = vpop.f32.mrf.mxu0
        %v2058 = vpop.f32.mrf.mxu0
        %v2059 = vpop.f32.mrf.mxu0
        %2060 = vdwg.mxu0
        %2061 = vrot.lane.b32.xlu0 %v689, 104
        %v2062 = vpop.permute.xlu0 %2061
        %2063 = vrot.lane.b32.xlu0 %v694, 104
        %v2064 = vpop.permute.xlu0 %2063
        %v2066 = vsel %vm700, %v2062, 0
        %v2069 = vsel %vm700, %v2064, 0
        %2071 = vmatprep.subr.bf16.mxu0 0
        %2072 = vmatpush1.bf16.xpose.msra.mxu0 0
        %2073 = vmatprep.subr.bf16.mxu0 0
        %2074 = vmatpush1.bf16.xpose.msra.mxu0 0
        %2075 = vmatprep.subr.bf16.mxu0 0
        %2076 = vmatpush1.bf16.xpose.msra.mxu0 0
        %2077 = vmatprep.subr.bf16.mxu0 0
        %2078 = vmatpush1.bf16.xpose.msra.mxu0 0
        %2079 = vmatprep.subr.bf16.mxu0 0
        %2080 = vmatpush1.bf16.xpose.msra.mxu0 0
        %2081 = vmatprep.subr.bf16.mxu0 0
        %2082 = vmatpush1.bf16.xpose.msra.mxu0 0
        %2083 = vmatprep.subr.bf16.mxu0 0
        %2084 = vmatpush1.bf16.xpose.msra.mxu0 0
        %2085 = vmatprep.subr.bf16.mxu0 0
        %2086 = vmatpush1.bf16.xpose.msra.mxu0 %v2069
        %2087 = vmatprep.subr.bf16.mxu0 0
        %2088 = vmatpush2.bf16.xpose.msra.mxu0 0
        %2089 = vmatprep.subr.bf16.mxu0 0
        %2090 = vmatpush2.bf16.xpose.msra.mxu0 0
        %2091 = vmatprep.subr.bf16.mxu0 0
        %2092 = vmatpush2.bf16.xpose.msra.mxu0 0
        %2093 = vmatprep.subr.bf16.mxu0 0
        %2094 = vmatpush2.bf16.xpose.msra.mxu0 0
        %2095 = vmatprep.subr.bf16.mxu0 0
        %2096 = vmatpush2.bf16.xpose.msra.mxu0 0
        %2097 = vmatprep.subr.bf16.mxu0 0
        %2098 = vmatpush2.bf16.xpose.msra.mxu0 0
        %2099 = vmatprep.subr.bf16.mxu0 0
        %2100 = vmatpush2.bf16.xpose.msra.mxu0 0
        %2101 = vmatprep.subr.bf16.mxu0 0
        %2102 = vmatpush2.bf16.xpose.msra.mxu0 0
        %2103 = vmatprep.mubr.bf16.mxu0 0
        %2104 = vmatmul.mubr.bf16.gmra.mxu0 %v2066
        %v2105 = vpop.f32.mrf.mxu0
        %v2106 = vadd.f32 0.0, %v2105
        %v2107 = vpop.f32.mrf.mxu0
        %v2108 = vpop.f32.mrf.mxu0
        %v2109 = vpop.f32.mrf.mxu0
        %2110 = vdwg.mxu0
        %v2111 = vsel %vm793, %v2056, -inf
        %2112 = vmax.xlane.f32.xlu0 %v2111
        %v2113 = vpop.xlane.xlu0 %2112
        %v2114 = vsel %vm793, %v2106, -inf
        %2115 = vmax.xlane.f32.xlu0 %v2114
        %v2116 = vpop.xlane.xlu0 %2115
        %v2117 = vsub.f32 %v2056, %v2113
        %v2118 = vsub.f32 %v2106, %v2116
        %v2119 = vmul.f32 %v2117, 1.442695
        %v2120 = vpow.pop %v2119
        %v2121 = vmul.f32 %v2118, 1.442695
        %v2122 = vpow.pop %v2121
        %v2123 = vsel %vm793, %v2120, 0.0
        %2124 = vadd.xlane.f32.xlu0 %v2123
        %v2125 = vpop.xlane.xlu0 %2124
        %v2126 = vsel %vm793, %v2122, 0.0
        %2127 = vadd.xlane.f32.xlu0 %v2126
        %v2128 = vpop.xlane.xlu0 %2127
        %v2129 = vrcp.pop %v2125
        %v2130 = vmul.f32 %v2120, %v2129
        %v2131 = vrcp.pop %v2128
        %v2132 = vmul.f32 %v2122, %v2131
        %v2133 = vpack.c.bf16 %v2130, %v2130
        %v2134 = vpack.c.bf16 %v2132, %v2132
        %2135 = vrot.lane.b32.xlu0 %v698, 104
        %v2136 = vpop.permute.xlu0 %2135
        %v2138 = vsel %vm793, %v2133, 0
        %v2141 = vsel %vm821, %v2136, 0
        %2143 = vmatprep.subr.bf16.mxu0 0
        %2144 = vmatpush1.bf16.msra.mxu0 0
        %2145 = vmatprep.subr.bf16.mxu0 0
        %2146 = vmatpush1.bf16.msra.mxu0 0
        %2147 = vmatprep.subr.bf16.mxu0 0
        %2148 = vmatpush1.bf16.msra.mxu0 0
        %2149 = vmatprep.subr.bf16.mxu0 0
        %2150 = vmatpush1.bf16.msra.mxu0 0
        %2151 = vmatprep.subr.bf16.mxu0 0
        %2152 = vmatpush1.bf16.msra.mxu0 0
        %2153 = vmatprep.subr.bf16.mxu0 0
        %2154 = vmatpush1.bf16.msra.mxu0 0
        %2155 = vmatprep.subr.bf16.mxu0 0
        %2156 = vmatpush1.bf16.msra.mxu0 0
        %2157 = vmatprep.subr.bf16.mxu0 0
        %2158 = vmatpush1.bf16.msra.mxu0 %v2141
        %2159 = vmatprep.subr.bf16.mxu0 0
        %2160 = vmatpush2.bf16.msra.mxu0 0
        %2161 = vmatprep.subr.bf16.mxu0 0
        %2162 = vmatpush2.bf16.msra.mxu0 0
        %2163 = vmatprep.subr.bf16.mxu0 0
        %2164 = vmatpush2.bf16.msra.mxu0 0
        %2165 = vmatprep.subr.bf16.mxu0 0
        %2166 = vmatpush2.bf16.msra.mxu0 0
        %2167 = vmatprep.subr.bf16.mxu0 0
        %2168 = vmatpush2.bf16.msra.mxu0 0
        %2169 = vmatprep.subr.bf16.mxu0 0
        %2170 = vmatpush2.bf16.msra.mxu0 0
        %2171 = vmatprep.subr.bf16.mxu0 0
        %2172 = vmatpush2.bf16.msra.mxu0 0
        %2173 = vmatprep.subr.bf16.mxu0 0
        %2174 = vmatpush2.bf16.msra.mxu0 0
        %2175 = vmatprep.mubr.bf16.mxu0 0
        %2176 = vmatmul.mubr.bf16.gmra.mxu0 %v2138
        %v2177 = vpop.f32.mrf.mxu0
        %v2178 = vadd.f32 0.0, %v2177
        %v2179 = vpop.f32.mrf.mxu0
        %v2180 = vpop.f32.mrf.mxu0
        %v2181 = vpop.f32.mrf.mxu0
        %2182 = vdwg.mxu0
        %2183 = vrot.lane.b32.xlu0 %v699, 104
        %v2184 = vpop.permute.xlu0 %2183
        %v2186 = vsel %vm793, %v2134, 0
        %v2189 = vsel %vm821, %v2184, 0
        %2191 = vmatprep.subr.bf16.mxu0 0
        %2192 = vmatpush1.bf16.msra.mxu0 0
        %2193 = vmatprep.subr.bf16.mxu0 0
        %2194 = vmatpush1.bf16.msra.mxu0 0
        %2195 = vmatprep.subr.bf16.mxu0 0
        %2196 = vmatpush1.bf16.msra.mxu0 0
        %2197 = vmatprep.subr.bf16.mxu0 0
        %2198 = vmatpush1.bf16.msra.mxu0 0
        %2199 = vmatprep.subr.bf16.mxu0 0
        %2200 = vmatpush1.bf16.msra.mxu0 0
        %2201 = vmatprep.subr.bf16.mxu0 0
        %2202 = vmatpush1.bf16.msra.mxu0 0
        %2203 = vmatprep.subr.bf16.mxu0 0
        %2204 = vmatpush1.bf16.msra.mxu0 0
        %2205 = vmatprep.subr.bf16.mxu0 0
        %2206 = vmatpush1.bf16.msra.mxu0 %v2189
        %2207 = vmatprep.subr.bf16.mxu0 0
        %2208 = vmatpush2.bf16.msra.mxu0 0
        %2209 = vmatprep.subr.bf16.mxu0 0
        %2210 = vmatpush2.bf16.msra.mxu0 0
        %2211 = vmatprep.subr.bf16.mxu0 0
        %2212 = vmatpush2.bf16.msra.mxu0 0
        %2213 = vmatprep.subr.bf16.mxu0 0
        %2214 = vmatpush2.bf16.msra.mxu0 0
        %2215 = vmatprep.subr.bf16.mxu0 0
        %2216 = vmatpush2.bf16.msra.mxu0 0
        %2217 = vmatprep.subr.bf16.mxu0 0
        %2218 = vmatpush2.bf16.msra.mxu0 0
        %2219 = vmatprep.subr.bf16.mxu0 0
        %2220 = vmatpush2.bf16.msra.mxu0 0
        %2221 = vmatprep.subr.bf16.mxu0 0
        %2222 = vmatpush2.bf16.msra.mxu0 0
        %2223 = vmatprep.mubr.bf16.mxu0 0
        %2224 = vmatmul.mubr.bf16.gmra.mxu0 %v2186
        %v2225 = vpop.f32.mrf.mxu0
        %v2226 = vadd.f32 0.0, %v2225
        %v2227 = vpop.f32.mrf.mxu0
        %v2228 = vpop.f32.mrf.mxu0
        %v2229 = vpop.f32.mrf.mxu0
        %2230 = vdwg.mxu0
        %2231 = vrot.lane.b32.xlu0 %v688, 100
        %v2232 = vpop.permute.xlu0 %2231
        %2233 = vrot.lane.b32.xlu0 %v693, 100
        %v2234 = vpop.permute.xlu0 %2233
        %v2236 = vsel %vm700, %v2232, 0
        %v2239 = vsel %vm700, %v2234, 0
        %2241 = vmatprep.subr.bf16.mxu0 0
        %2242 = vmatpush1.bf16.xpose.msra.mxu0 0
        %2243 = vmatprep.subr.bf16.mxu0 0
        %2244 = vmatpush1.bf16.xpose.msra.mxu0 0
        %2245 = vmatprep.subr.bf16.mxu0 0
        %2246 = vmatpush1.bf16.xpose.msra.mxu0 0
        %2247 = vmatprep.subr.bf16.mxu0 0
        %2248 = vmatpush1.bf16.xpose.msra.mxu0 0
        %2249 = vmatprep.subr.bf16.mxu0 0
        %2250 = vmatpush1.bf16.xpose.msra.mxu0 0
        %2251 = vmatprep.subr.bf16.mxu0 0
        %2252 = vmatpush1.bf16.xpose.msra.mxu0 0
        %2253 = vmatprep.subr.bf16.mxu0 0
        %2254 = vmatpush1.bf16.xpose.msra.mxu0 0
        %2255 = vmatprep.subr.bf16.mxu0 0
        %2256 = vmatpush1.bf16.xpose.msra.mxu0 %v2239
        %2257 = vmatprep.subr.bf16.mxu0 0
        %2258 = vmatpush2.bf16.xpose.msra.mxu0 0
        %2259 = vmatprep.subr.bf16.mxu0 0
        %2260 = vmatpush2.bf16.xpose.msra.mxu0 0
        %2261 = vmatprep.subr.bf16.mxu0 0
        %2262 = vmatpush2.bf16.xpose.msra.mxu0 0
        %2263 = vmatprep.subr.bf16.mxu0 0
        %2264 = vmatpush2.bf16.xpose.msra.mxu0 0
        %2265 = vmatprep.subr.bf16.mxu0 0
        %2266 = vmatpush2.bf16.xpose.msra.mxu0 0
        %2267 = vmatprep.subr.bf16.mxu0 0
        %2268 = vmatpush2.bf16.xpose.msra.mxu0 0
        %2269 = vmatprep.subr.bf16.mxu0 0
        %2270 = vmatpush2.bf16.xpose.msra.mxu0 0
        %2271 = vmatprep.subr.bf16.mxu0 0
        %2272 = vmatpush2.bf16.xpose.msra.mxu0 0
        %2273 = vmatprep.mubr.bf16.mxu0 0
        %2274 = vmatmul.mubr.bf16.gmra.mxu0 %v2236
        %v2275 = vpop.f32.mrf.mxu0
        %v2276 = vadd.f32 0.0, %v2275
        %v2277 = vpop.f32.mrf.mxu0
        %v2278 = vpop.f32.mrf.mxu0
        %v2279 = vpop.f32.mrf.mxu0
        %2280 = vdwg.mxu0
        %2281 = vrot.lane.b32.xlu0 %v689, 100
        %v2282 = vpop.permute.xlu0 %2281
        %2283 = vrot.lane.b32.xlu0 %v694, 100
        %v2284 = vpop.permute.xlu0 %2283
        %v2286 = vsel %vm700, %v2282, 0
        %v2289 = vsel %vm700, %v2284, 0
        %2291 = vmatprep.subr.bf16.mxu0 0
        %2292 = vmatpush1.bf16.xpose.msra.mxu0 0
        %2293 = vmatprep.subr.bf16.mxu0 0
        %2294 = vmatpush1.bf16.xpose.msra.mxu0 0
        %2295 = vmatprep.subr.bf16.mxu0 0
        %2296 = vmatpush1.bf16.xpose.msra.mxu0 0
        %2297 = vmatprep.subr.bf16.mxu0 0
        %2298 = vmatpush1.bf16.xpose.msra.mxu0 0
        %2299 = vmatprep.subr.bf16.mxu0 0
        %2300 = vmatpush1.bf16.xpose.msra.mxu0 0
        %2301 = vmatprep.subr.bf16.mxu0 0
        %2302 = vmatpush1.bf16.xpose.msra.mxu0 0
        %2303 = vmatprep.subr.bf16.mxu0 0
        %2304 = vmatpush1.bf16.xpose.msra.mxu0 0
        %2305 = vmatprep.subr.bf16.mxu0 0
        %2306 = vmatpush1.bf16.xpose.msra.mxu0 %v2289
        %2307 = vmatprep.subr.bf16.mxu0 0
        %2308 = vmatpush2.bf16.xpose.msra.mxu0 0
        %2309 = vmatprep.subr.bf16.mxu0 0
        %2310 = vmatpush2.bf16.xpose.msra.mxu0 0
        %2311 = vmatprep.subr.bf16.mxu0 0
        %2312 = vmatpush2.bf16.xpose.msra.mxu0 0
        %2313 = vmatprep.subr.bf16.mxu0 0
        %2314 = vmatpush2.bf16.xpose.msra.mxu0 0
        %2315 = vmatprep.subr.bf16.mxu0 0
        %2316 = vmatpush2.bf16.xpose.msra.mxu0 0
        %2317 = vmatprep.subr.bf16.mxu0 0
        %2318 = vmatpush2.bf16.xpose.msra.mxu0 0
        %2319 = vmatprep.subr.bf16.mxu0 0
        %2320 = vmatpush2.bf16.xpose.msra.mxu0 0
        %2321 = vmatprep.subr.bf16.mxu0 0
        %2322 = vmatpush2.bf16.xpose.msra.mxu0 0
        %2323 = vmatprep.mubr.bf16.mxu0 0
        %2324 = vmatmul.mubr.bf16.gmra.mxu0 %v2286
        %v2325 = vpop.f32.mrf.mxu0
        %v2326 = vadd.f32 0.0, %v2325
        %v2327 = vpop.f32.mrf.mxu0
        %v2328 = vpop.f32.mrf.mxu0
        %v2329 = vpop.f32.mrf.mxu0
        %2330 = vdwg.mxu0
        %v2331 = vsel %vm793, %v2276, -inf
        %2332 = vmax.xlane.f32.xlu0 %v2331
        %v2333 = vpop.xlane.xlu0 %2332
        %v2334 = vsel %vm793, %v2326, -inf
        %2335 = vmax.xlane.f32.xlu0 %v2334
        %v2336 = vpop.xlane.xlu0 %2335
        %v2337 = vsub.f32 %v2276, %v2333
        %v2338 = vsub.f32 %v2326, %v2336
        %v2339 = vmul.f32 %v2337, 1.442695
        %v2340 = vpow.pop %v2339
        %v2341 = vmul.f32 %v2338, 1.442695
        %v2342 = vpow.pop %v2341
        %v2343 = vsel %vm793, %v2340, 0.0
        %2344 = vadd.xlane.f32.xlu0 %v2343
        %v2345 = vpop.xlane.xlu0 %2344
        %v2346 = vsel %vm793, %v2342, 0.0
        %2347 = vadd.xlane.f32.xlu0 %v2346
        %v2348 = vpop.xlane.xlu0 %2347
        %v2349 = vrcp.pop %v2345
        %v2350 = vmul.f32 %v2340, %v2349
        %v2351 = vrcp.pop %v2348
        %v2352 = vmul.f32 %v2342, %v2351
        %v2353 = vpack.c.bf16 %v2350, %v2350
        %v2354 = vpack.c.bf16 %v2352, %v2352
        %2355 = vrot.lane.b32.xlu0 %v698, 100
        %v2356 = vpop.permute.xlu0 %2355
        %v2358 = vsel %vm793, %v2353, 0
        %v2361 = vsel %vm821, %v2356, 0
        %2363 = vmatprep.subr.bf16.mxu0 0
        %2364 = vmatpush1.bf16.msra.mxu0 0
        %2365 = vmatprep.subr.bf16.mxu0 0
        %2366 = vmatpush1.bf16.msra.mxu0 0
        %2367 = vmatprep.subr.bf16.mxu0 0
        %2368 = vmatpush1.bf16.msra.mxu0 0
        %2369 = vmatprep.subr.bf16.mxu0 0
        %2370 = vmatpush1.bf16.msra.mxu0 0
        %2371 = vmatprep.subr.bf16.mxu0 0
        %2372 = vmatpush1.bf16.msra.mxu0 0
        %2373 = vmatprep.subr.bf16.mxu0 0
        %2374 = vmatpush1.bf16.msra.mxu0 0
        %2375 = vmatprep.subr.bf16.mxu0 0
        %2376 = vmatpush1.bf16.msra.mxu0 0
        %2377 = vmatprep.subr.bf16.mxu0 0
        %2378 = vmatpush1.bf16.msra.mxu0 %v2361
        %2379 = vmatprep.subr.bf16.mxu0 0
        %2380 = vmatpush2.bf16.msra.mxu0 0
        %2381 = vmatprep.subr.bf16.mxu0 0
        %2382 = vmatpush2.bf16.msra.mxu0 0
        %2383 = vmatprep.subr.bf16.mxu0 0
        %2384 = vmatpush2.bf16.msra.mxu0 0
        %2385 = vmatprep.subr.bf16.mxu0 0
        %2386 = vmatpush2.bf16.msra.mxu0 0
        %2387 = vmatprep.subr.bf16.mxu0 0
        %2388 = vmatpush2.bf16.msra.mxu0 0
        %2389 = vmatprep.subr.bf16.mxu0 0
        %2390 = vmatpush2.bf16.msra.mxu0 0
        %2391 = vmatprep.subr.bf16.mxu0 0
        %2392 = vmatpush2.bf16.msra.mxu0 0
        %2393 = vmatprep.subr.bf16.mxu0 0
        %2394 = vmatpush2.bf16.msra.mxu0 0
        %2395 = vmatprep.mubr.bf16.mxu0 0
        %2396 = vmatmul.mubr.bf16.gmra.mxu0 %v2358
        %v2397 = vpop.f32.mrf.mxu0
        %v2398 = vadd.f32 0.0, %v2397
        %v2399 = vpop.f32.mrf.mxu0
        %v2400 = vpop.f32.mrf.mxu0
        %v2401 = vpop.f32.mrf.mxu0
        %2402 = vdwg.mxu0
        %2403 = vrot.lane.b32.xlu0 %v699, 100
        %v2404 = vpop.permute.xlu0 %2403
        %v2406 = vsel %vm793, %v2354, 0
        %v2409 = vsel %vm821, %v2404, 0
        %2411 = vmatprep.subr.bf16.mxu0 0
        %2412 = vmatpush1.bf16.msra.mxu0 0
        %2413 = vmatprep.subr.bf16.mxu0 0
        %2414 = vmatpush1.bf16.msra.mxu0 0
        %2415 = vmatprep.subr.bf16.mxu0 0
        %2416 = vmatpush1.bf16.msra.mxu0 0
        %2417 = vmatprep.subr.bf16.mxu0 0
        %2418 = vmatpush1.bf16.msra.mxu0 0
        %2419 = vmatprep.subr.bf16.mxu0 0
        %2420 = vmatpush1.bf16.msra.mxu0 0
        %2421 = vmatprep.subr.bf16.mxu0 0
        %2422 = vmatpush1.bf16.msra.mxu0 0
        %2423 = vmatprep.subr.bf16.mxu0 0
        %2424 = vmatpush1.bf16.msra.mxu0 0
        %2425 = vmatprep.subr.bf16.mxu0 0
        %2426 = vmatpush1.bf16.msra.mxu0 %v2409
        %2427 = vmatprep.subr.bf16.mxu0 0
        %2428 = vmatpush2.bf16.msra.mxu0 0
        %2429 = vmatprep.subr.bf16.mxu0 0
        %2430 = vmatpush2.bf16.msra.mxu0 0
        %2431 = vmatprep.subr.bf16.mxu0 0
        %2432 = vmatpush2.bf16.msra.mxu0 0
        %2433 = vmatprep.subr.bf16.mxu0 0
        %2434 = vmatpush2.bf16.msra.mxu0 0
        %2435 = vmatprep.subr.bf16.mxu0 0
        %2436 = vmatpush2.bf16.msra.mxu0 0
        %2437 = vmatprep.subr.bf16.mxu0 0
        %2438 = vmatpush2.bf16.msra.mxu0 0
        %2439 = vmatprep.subr.bf16.mxu0 0
        %2440 = vmatpush2.bf16.msra.mxu0 0
        %2441 = vmatprep.subr.bf16.mxu0 0
        %2442 = vmatpush2.bf16.msra.mxu0 0
        %2443 = vmatprep.mubr.bf16.mxu0 0
        %2444 = vmatmul.mubr.bf16.gmra.mxu0 %v2406
        %v2445 = vpop.f32.mrf.mxu0
        %v2446 = vadd.f32 0.0, %v2445
        %v2447 = vpop.f32.mrf.mxu0
        %v2448 = vpop.f32.mrf.mxu0
        %v2449 = vpop.f32.mrf.mxu0
        %2450 = vdwg.mxu0
        %2453 = vrot.lane.b32.xlu0 %v1078, 4
        %v2454 = vpop.permute.xlu0 %2453
        %2455 = vrot.lane.b32.xlu0 %v1126, 4
        %v2456 = vpop.permute.xlu0 %2455
        %2461 = vrot.lane.b32.xlu0 %v1298, 8
        %v2462 = vpop.permute.xlu0 %2461
        %2463 = vrot.lane.b32.xlu0 %v1346, 8
        %v2464 = vpop.permute.xlu0 %2463
        %2469 = vrot.lane.b32.xlu0 %v1518, 12
        %v2470 = vpop.permute.xlu0 %2469
        %2471 = vrot.lane.b32.xlu0 %v1566, 12
        %v2472 = vpop.permute.xlu0 %2471
        %2477 = vrot.lane.b32.xlu0 %v1738, 16
        %v2478 = vpop.permute.xlu0 %2477
        %2479 = vrot.lane.b32.xlu0 %v1786, 16
        %v2480 = vpop.permute.xlu0 %2479
        %2485 = vrot.lane.b32.xlu0 %v1958, 20
        %v2486 = vpop.permute.xlu0 %2485
        %2487 = vrot.lane.b32.xlu0 %v2006, 20
        %v2488 = vpop.permute.xlu0 %2487
        %2493 = vrot.lane.b32.xlu0 %v2178, 24
        %v2494 = vpop.permute.xlu0 %2493
        %2495 = vrot.lane.b32.xlu0 %v2226, 24
        %v2496 = vpop.permute.xlu0 %2495
        %2501 = vrot.lane.b32.xlu0 %v2398, 28
        %v2502 = vpop.permute.xlu0 %2501
        %2503 = vrot.lane.b32.xlu0 %v2446, 28
        %v2504 = vpop.permute.xlu0 %2503
        %v2507 = vsel %vm700, %v860, %v2454
        %v2508 = vsel %vm700, %v906, %v2456
        %v2509 = vsel %vm793, %v2507, %v2462
        %v2510 = vsel %vm793, %v2508, %v2464
        %vm2511 = vcmask 97280
        %v2512 = vsel %vm2511, %v2509, %v2470
        %v2513 = vsel %vm2511, %v2510, %v2472
        %vm2514 = vcmask 130048
        %v2515 = vsel %vm2514, %v2512, %v2478
        %v2516 = vsel %vm2514, %v2513, %v2480
        %vm2517 = vcmask 162816
        %v2518 = vsel %vm2517, %v2515, %v2486
        %v2519 = vsel %vm2517, %v2516, %v2488
        %vm2520 = vcmask 195584
        %v2521 = vsel %vm2520, %v2518, %v2494
        %v2522 = vsel %vm2520, %v2519, %v2496
        %vm2523 = vcmask 228352
        %v2524 = vsel %vm2523, %v2521, %v2502
        %v2525 = vsel %vm2523, %v2522, %v2504
        %v2526 = vpack.c.bf16 %v2525, %v2524
        %v2527 = vld [vmem:[%s437] sm:$0xf]
        %v2528 = vld [vmem:[%s437 + $0x4] sm:$0xf]
        %v2529 = vld [vmem:[%s437 + $0x8] sm:$0xf]
        %v2530 = vld [vmem:[%s437 + $0xc] sm:$0xf]
        %v2531 = vlaneseq
        %v2532 = vshrl.u32 %v2531, 7
        %v2533 = vsub.s32 4, %v2532
        %v2534 = vrot.slane %v463, %v2533
        %v2539 = vunpack.c.l.b16 %v2527
        %v2540 = vunpack.c.l.b16 %v2528
        %v2541 = vunpack.c.l.b16 %v2529
        %v2542 = vunpack.c.l.b16 %v2530
        %v2543 = vpack.c.b16 %v2540, %v2539
        %v2544 = vpack.c.b16 %v2542, %v2541
        %v2548 = vsel %vm465, %v2526, 0
        %2550 = vmatprep.subr.bf16.mxu0 0
        %2551 = vmatpush1.bf16.msra.mxu0 0
        %2552 = vmatprep.subr.bf16.mxu0 0
        %2553 = vmatpush1.bf16.msra.mxu0 0
        %2554 = vmatprep.subr.bf16.mxu0 0
        %2555 = vmatpush1.bf16.msra.mxu0 0
        %2556 = vmatprep.subr.bf16.mxu0 0
        %2557 = vmatpush1.bf16.msra.mxu0 0
        %2558 = vmatprep.subr.bf16.mxu0 0
        %2559 = vmatpush1.bf16.msra.mxu0 0
        %2560 = vmatprep.subr.bf16.mxu0 0
        %2561 = vmatpush1.bf16.msra.mxu0 0
        %2562 = vmatprep.subr.bf16.mxu0 0
        %2563 = vmatpush1.bf16.msra.mxu0 %v2544
        %2564 = vmatprep.subr.bf16.mxu0 0
        %2565 = vmatpush1.bf16.msra.mxu0 %v2543
        %2566 = vmatprep.subr.bf16.mxu0 0
        %2567 = vmatpush2.bf16.msra.mxu0 0
        %2568 = vmatprep.subr.bf16.mxu0 0
        %2569 = vmatpush2.bf16.msra.mxu0 0
        %2570 = vmatprep.subr.bf16.mxu0 0
        %2571 = vmatpush2.bf16.msra.mxu0 0
        %2572 = vmatprep.subr.bf16.mxu0 0
        %2573 = vmatpush2.bf16.msra.mxu0 0
        %2574 = vmatprep.subr.bf16.mxu0 0
        %2575 = vmatpush2.bf16.msra.mxu0 0
        %2576 = vmatprep.subr.bf16.mxu0 0
        %2577 = vmatpush2.bf16.msra.mxu0 0
        %2578 = vmatprep.subr.bf16.mxu0 0
        %2579 = vmatpush2.bf16.msra.mxu0 0
        %2580 = vmatprep.subr.bf16.mxu0 0
        %2581 = vmatpush2.bf16.msra.mxu0 0
        %2582 = vmatprep.mubr.bf16.mxu0 0
        %2583 = vmatmul.mubr.bf16.gmra.mxu0 %v2548
        %v2584 = vpop.f32.mrf.mxu0
        %v2585 = vadd.f32 %v2534, %v2584
        %v2586 = vpop.f32.mrf.mxu0
        %v2587 = vpop.f32.mrf.mxu0
        %v2588 = vadd.f32 %v2534, %v2587
        %v2589 = vpop.f32.mrf.mxu0
        %2590 = vdwg.mxu0
        %v2591 = vadd.f32 %v2585, %v459
        %v2592 = vadd.f32 %v2588, %v460
        %v2593 = vsel %vm465, %v2591, 0.0
        %2594 = vadd.xlane.f32.xlu0 %v2593
        %v2595 = vpop.xlane.xlu0 %2594
        %v2596 = vsel %vm465, %v2592, 0.0
        %2597 = vadd.xlane.f32.xlu0 %v2596
        %v2598 = vpop.xlane.xlu0 %2597
        %v2599 = vmul.f32 %v2595, %v472
        %v2600 = vmul.f32 %v2598, %v472
        %v2601 = vsub.f32 %v2591, %v2599
        %v2602 = vsub.f32 %v2592, %v2600
        %v2603 = vmul.f32 %v2601, %v2601
        %v2604 = vmul.f32 %v2602, %v2602
        %v2605 = vsel %vm465, %v2603, 0.0
        %2606 = vadd.xlane.f32.xlu0 %v2605
        %v2607 = vpop.xlane.xlu0 %2606
        %v2608 = vsel %vm465, %v2604, 0.0
        %2609 = vadd.xlane.f32.xlu0 %v2608
        %v2610 = vpop.xlane.xlu0 %2609
        %v2611 = vmul.f32 %v2607, %v472
        %v2612 = vmul.f32 %v2610, %v472
        %v2613 = vadd.f32 %v2611, 1e-05
        %v2614 = vadd.f32 %v2612, 1e-05
        %v2615 = vrsqrt.pop %v2613
        %v2616 = vrsqrt.pop %v2614
        %v2617 = vmul.f32 %v2601, %v2615
        %v2618 = vmul.f32 %v2602, %v2616
        %v2619 = vlaneseq
        %v2620 = vshrl.u32 %v2619, 7
        %v2621 = vsub.s32 2, %v2620
        %v2622 = vrot.slane %v463, %v2621
        %v2623 = vmul.f32 %v2617, %v2622
        %v2624 = vmul.f32 %v2618, %v2622
        %v2625 = vlaneseq
        %v2626 = vshrl.u32 %v2625, 7
        %v2627 = vsub.s32 3, %v2626
        %v2628 = vrot.slane %v463, %v2627
        %v2629 = vadd.f32 %v2623, %v2628
        %v2630 = vadd.f32 %v2624, %v2628
        %v2631 = vmul.f32 %v461, %v2629
        %v2632 = vmul.f32 %v462, %v2630
        %v2633 = vpack.c.bf16 %v2632, %v2631
        %v2634 = vld [vmem:[%s442] sm:$0xf]
        %v2635 = vld [vmem:[%s442 + $0x4] sm:$0xf]
        %v2636 = vld [vmem:[%s442 + $0x8] sm:$0xf]
        %v2637 = vld [vmem:[%s442 + $0xc] sm:$0xf]
        %v2639 = vlaneseq
        %v2640 = vshrl.u32 %v2639, 7
        %v2641 = vsub.s32 0, %v2640
        %v2642 = vrot.slane %v464, %v2641
        %v2648 = vunpack.c.l.b16 %v2634
        %v2649 = vunpack.c.l.b16 %v2635
        %v2650 = vunpack.c.l.b16 %v2636
        %v2651 = vunpack.c.l.b16 %v2637
        %v2652 = vpack.c.b16 %v2649, %v2648
        %v2653 = vpack.c.b16 %v2651, %v2650
        %v2657 = vsel %vm465, %v2633, 0
        %2659 = vmatprep.subr.bf16.mxu0 0
        %2660 = vmatpush1.bf16.msra.mxu0 0
        %2661 = vmatprep.subr.bf16.mxu0 0
        %2662 = vmatpush1.bf16.msra.mxu0 0
        %2663 = vmatprep.subr.bf16.mxu0 0
        %2664 = vmatpush1.bf16.msra.mxu0 0
        %2665 = vmatprep.subr.bf16.mxu0 0
        %2666 = vmatpush1.bf16.msra.mxu0 0
        %2667 = vmatprep.subr.bf16.mxu0 0
        %2668 = vmatpush1.bf16.msra.mxu0 0
        %2669 = vmatprep.subr.bf16.mxu0 0
        %2670 = vmatpush1.bf16.msra.mxu0 0
        %2671 = vmatprep.subr.bf16.mxu0 0
        %2672 = vmatpush1.bf16.msra.mxu0 %v2653
        %2673 = vmatprep.subr.bf16.mxu0 0
        %2674 = vmatpush1.bf16.msra.mxu0 %v2652
        %2675 = vmatprep.subr.bf16.mxu0 0
        %2676 = vmatpush2.bf16.msra.mxu0 0
        %2677 = vmatprep.subr.bf16.mxu0 0
        %2678 = vmatpush2.bf16.msra.mxu0 0
        %2679 = vmatprep.subr.bf16.mxu0 0
        %2680 = vmatpush2.bf16.msra.mxu0 0
        %2681 = vmatprep.subr.bf16.mxu0 0
        %2682 = vmatpush2.bf16.msra.mxu0 0
        %2683 = vmatprep.subr.bf16.mxu0 0
        %2684 = vmatpush2.bf16.msra.mxu0 0
        %2685 = vmatprep.subr.bf16.mxu0 0
        %2686 = vmatpush2.bf16.msra.mxu0 0
        %2687 = vmatprep.subr.bf16.mxu0 0
        %2688 = vmatpush2.bf16.msra.mxu0 0
        %2689 = vmatprep.subr.bf16.mxu0 0
        %2690 = vmatpush2.bf16.msra.mxu0 0
        %2691 = vmatprep.mubr.bf16.mxu0 0
        %2692 = vmatmul.mubr.bf16.gmra.mxu0 %v2657
        %v2693 = vpop.f32.mrf.mxu0
        %v2694 = vadd.f32 %v2642, %v2693
        %v2695 = vpop.f32.mrf.mxu0
        %v2696 = vpop.f32.mrf.mxu0
        %v2697 = vadd.f32 %v2642, %v2696
        %v2698 = vpop.f32.mrf.mxu0
        %2699 = vdwg.mxu0
        %v2700 = vmul.f32 %v2694, 0.5
        %v2701 = vmul.f32 %v2697, 0.5
        %v2702 = vmul.f32 %v2694, 0.70710677
        %v2703 = vmul.f32 %v2697, 0.70710677
        %v2704 = verf.f32.pop %v2702
        %v2705 = verf.f32.pop %v2703
        %v2706 = vadd.f32 %v2704, 1.0
        %v2707 = vadd.f32 %v2705, 1.0
        %v2708 = vmul.f32 %v2700, %v2706
        %v2709 = vmul.f32 %v2701, %v2707
        %v2710 = vpack.c.bf16 %v2709, %v2708
        %v2711 = vld [vmem:[%s447] sm:$0xf]
        %v2712 = vld [vmem:[%s447 + $0x4] sm:$0xf]
        %v2713 = vld [vmem:[%s447 + $0x8] sm:$0xf]
        %v2714 = vld [vmem:[%s447 + $0xc] sm:$0xf]
        %v2715 = vld [vmem:[%s447 + $0x10] sm:$0xf]
        %v2716 = vld [vmem:[%s447 + $0x14] sm:$0xf]
        %v2717 = vld [vmem:[%s447 + $0x18] sm:$0xf]
        %v2718 = vld [vmem:[%s447 + $0x1c] sm:$0xf]
        %v2719 = vld [vmem:[%s447 + $0x20] sm:$0xf]
        %v2720 = vld [vmem:[%s447 + $0x24] sm:$0xf]
        %v2721 = vld [vmem:[%s447 + $0x28] sm:$0xf]
        %v2722 = vld [vmem:[%s447 + $0x2c] sm:$0xf]
        %v2723 = vld [vmem:[%s447 + $0x30] sm:$0xf]
        %v2724 = vld [vmem:[%s447 + $0x34] sm:$0xf]
        %v2725 = vld [vmem:[%s447 + $0x38] sm:$0xf]
        %v2726 = vld [vmem:[%s447 + $0x3c] sm:$0xf]
        %v2727 = vlaneseq
        %v2728 = vshrl.u32 %v2727, 7
        %v2729 = vsub.s32 5, %v2728
        %v2730 = vrot.slane %v463, %v2729
        %v2747 = vunpack.c.l.b16 %v2711
        %v2748 = vunpack.c.l.b16 %v2712
        %v2749 = vunpack.c.l.b16 %v2713
        %v2750 = vunpack.c.l.b16 %v2714
        %v2751 = vunpack.c.l.b16 %v2715
        %v2752 = vunpack.c.l.b16 %v2716
        %v2753 = vunpack.c.l.b16 %v2717
        %v2754 = vunpack.c.l.b16 %v2718
        %v2755 = vunpack.c.l.b16 %v2719
        %v2756 = vunpack.c.l.b16 %v2720
        %v2757 = vunpack.c.l.b16 %v2721
        %v2758 = vunpack.c.l.b16 %v2722
        %v2759 = vunpack.c.l.b16 %v2723
        %v2760 = vunpack.c.l.b16 %v2724
        %v2761 = vunpack.c.l.b16 %v2725
        %v2762 = vunpack.c.l.b16 %v2726
        %v2763 = vpack.c.b16 %v2748, %v2747
        %v2764 = vpack.c.b16 %v2750, %v2749
        %v2765 = vpack.c.b16 %v2752, %v2751
        %v2766 = vpack.c.b16 %v2754, %v2753
        %v2767 = vpack.c.b16 %v2756, %v2755
        %v2768 = vpack.c.b16 %v2758, %v2757
        %v2769 = vpack.c.b16 %v2760, %v2759
        %v2770 = vpack.c.b16 %v2762, %v2761
        %2779 = vmatprep.subr.bf16.mxu0 0
        %2780 = vmatpush1.bf16.msra.mxu0 %v2770
        %2781 = vmatprep.subr.bf16.mxu0 0
        %2782 = vmatpush1.bf16.msra.mxu0 %v2769
        %2783 = vmatprep.subr.bf16.mxu0 0
        %2784 = vmatpush1.bf16.msra.mxu0 %v2768
        %2785 = vmatprep.subr.bf16.mxu0 0
        %2786 = vmatpush1.bf16.msra.mxu0 %v2767
        %2787 = vmatprep.subr.bf16.mxu0 0
        %2788 = vmatpush1.bf16.msra.mxu0 %v2766
        %2789 = vmatprep.subr.bf16.mxu0 0
        %2790 = vmatpush1.bf16.msra.mxu0 %v2765
        %2791 = vmatprep.subr.bf16.mxu0 0
        %2792 = vmatpush1.bf16.msra.mxu0 %v2764
        %2793 = vmatprep.subr.bf16.mxu0 0
        %2794 = vmatpush1.bf16.msra.mxu0 %v2763
        %2795 = vmatprep.subr.bf16.mxu0 0
        %2796 = vmatpush2.bf16.msra.mxu0 0
        %2797 = vmatprep.subr.bf16.mxu0 0
        %2798 = vmatpush2.bf16.msra.mxu0 0
        %2799 = vmatprep.subr.bf16.mxu0 0
        %2800 = vmatpush2.bf16.msra.mxu0 0
        %2801 = vmatprep.subr.bf16.mxu0 0
        %2802 = vmatpush2.bf16.msra.mxu0 0
        %2803 = vmatprep.subr.bf16.mxu0 0
        %2804 = vmatpush2.bf16.msra.mxu0 0
        %2805 = vmatprep.subr.bf16.mxu0 0
        %2806 = vmatpush2.bf16.msra.mxu0 0
        %2807 = vmatprep.subr.bf16.mxu0 0
        %2808 = vmatpush2.bf16.msra.mxu0 0
        %2809 = vmatprep.subr.bf16.mxu0 0
        %2810 = vmatpush2.bf16.msra.mxu0 0
        %2811 = vmatprep.mubr.bf16.mxu0 0
        %2812 = vmatmul.mubr.bf16.gmra.mxu0 %v2710
        %v2813 = vpop.f32.mrf.mxu0
        %v2814 = vadd.f32 %v2730, %v2813
        %v2815 = vpop.f32.mrf.mxu0
        %v2816 = vpop.f32.mrf.mxu0
        %v2817 = vadd.f32 %v2730, %v2816
        %v2818 = vpop.f32.mrf.mxu0
        %2819 = vdwg.mxu0
        %v2820 = vadd.f32 %v2814, %v2591
        %v2821 = vadd.f32 %v2817, %v2592
        %2822 = vst.msk [vmem:[#allocation2] sm:$0xff] %vm465, %v2820
        %2823 = vst.msk [vmem:[#allocation2 + $0x8] sm:$0xff] %vm465, %v2821
        %p2824 = scmp.eq.s32.totalorder %s27, 1
        // Predicated region
        $region65: #{tpu_custom_call.1} parent=51 // pred_check
          %p2825 = pneg %p2824
        $region66: #{tpu_custom_call.1} parent=51 // pred_check_branch
          %2827 = sbr.rel (%p2825) target = $region68
        $region67: #{tpu_custom_call.1} parent=51 // pred_region
          %2828 = vst.msk [vmem:[#allocation8] sm:$0xff] %vm465, %v2820
          %2829 = vst.msk [vmem:[#allocation8 + $0x8] sm:$0xff] %vm465, %v2821
        $region68: #{tpu_custom_call.1} parent=51 // pred_fallthru
          _
        // Predicated region
        $region69: #{tpu_custom_call.1} parent=51 // pred_check
          %p2830 = pneg %p260
        $region70: #{tpu_custom_call.1} parent=51 // pred_check_branch
          %2832 = sbr.rel (%p2830) target = $region72
        $region71: #{tpu_custom_call.1} parent=51 // pred_region
          %s2833 = smul.u32 2, %s26
          %s2835 = ssub.s32 256, 256
          %2836 = vsyncadd [#allocation5], %s2835
          %s2837 = smul.addr %s2833, 128
          %s2838 = scalar_lea.hbm %s8, %s2837
          %s2839 = sshll.u32 [#allocation8], 4
          %s2840 = int_to_ptr.vmem [resolvable:$true] %s2839
          %2845 = dma.vmem_to_hbm [thread:$0]  %s2840, 256, %s2838, [#allocation5], 128, 128, 8
        $region72: #{tpu_custom_call.1} parent=51 // pred_fallthru
          _
        // Predicated region
        $region73: #{tpu_custom_call.1} parent=51 // pred_check
          %p2846 = pneg %p260
        $region74: #{tpu_custom_call.1} parent=51 // pred_check_branch
          %2848 = sbr.rel (%p2846) target = $region76
        $region75: #{tpu_custom_call.1} parent=51 // pred_region
          %2849 = dma.done [#allocation5], 256
        $region76: #{tpu_custom_call.1} parent=51 // pred_fallthru
          _
      $region52: #{tpu_custom_call.1} parent=5 // pred_fallthru
        _
      %p2850 = scmp.le.s32.totalorder 2, %s17
      // Predicated region
      $region77: #{tpu_custom_call.1} parent=5 // pred_check
        %p2851 = pneg %p2850
      $region78: #{tpu_custom_call.1} parent=5 // pred_check_branch
        %2853 = sbr.rel (%p2851) target = $region80
      $region79: #{tpu_custom_call.1} parent=5 // pred_region
        %s2854 = ssub.s32 %s17, 2
      $region80: #{tpu_custom_call.1} parent=5 // pred_fallthru
        _
    $region6: #{tpu_custom_call.1} parent=1 // loop_footer
      %s21 = sadd.s32 1, %s17
    $region7: #{tpu_custom_call.1} parent=1 // loop_footer_branch
      %16 = sbr.rel target = $region3
    $region8: #{tpu_custom_call.1} parent=1 // loop_exit
      _
    %2855 = vsyncpa [#allocation4], 1
    %s2856 = scalar_lea.sflag [#allocation4], 1
    %2857 = vsyncpa %s2856, 1
    %2858 = vsyncpa [#allocation7], 1
    %2859 = vsyncpa [#allocation5], 1
    %s2860 = scalar_lea.sflag [#allocation5], 1
    %2861 = vsyncpa %s2860, 1

</llo_original>
